<compile_context>
chip_gen: v7x
topology: tpu7x:2x2x1
jax: 0.10.0
libtpu: 0.0.40
codegen_flags: <defaults>
</compile_context>

<pallas_src>
import jax
import jax.numpy as jnp
import numpy as np
from jax.experimental import pallas as pl
from jax.experimental.pallas import tpu as pltpu


# ----------------------------------------------------------------------------
# Fused Bottleneck kernel: one grid step = one image.
# ----------------------------------------------------------------------------
def _bottleneck_kernel(x_ref, w1_ref, w2_ref, w3_ref, b12_ref, b3_ref,
                       o_ref, y1_ref):
    # Block shapes:
    #   x_ref  : (1, H, W, Cin)        bf16
    #   w1_ref : (Cin, Cw)             bf16 (bn1 scale folded into columns)
    #   w2_ref : (9*Cw, Cw)            bf16 (bn2 scale folded; row = tap*Cw + cin)
    #   w3_ref : (Cw, Cout)            bf16 (bn3 scale folded)
    #   b12_ref: (2, Cw)               f32  (row 0 = bn1 bias, row 1 = bn2 bias)
    #   b3_ref : (1, Cout)             f32
    #   o_ref  : (1, H, W, Cout)       bf16
    #   y1_ref : (H+2, W+2, Cw)        bf16 VMEM scratch (zero 1-wide border)
    _, H, W, Cin = x_ref.shape
    Hp, Wp, Cw = y1_ref.shape
    Cout = w3_ref.shape[1]

    x = x_ref[0].reshape(H * W, Cin)                     # bf16, channels on lanes

    # ---- conv1 (1x1) + bn1 (scale folded) + bias + relu ---------------------
    y1 = jnp.dot(x, w1_ref[...], preferred_element_type=jnp.float32)
    y1 = jnp.maximum(y1 + b12_ref[0:1, :], 0.0).astype(jnp.bfloat16)

    # Zero only the 1-wide padding border of the scratch (the interior is
    # fully overwritten every step, so no full-buffer zero fill).
    y1_ref[0:1, :, :] = jnp.zeros((1, Wp, Cw), jnp.bfloat16)
    y1_ref[Hp - 1:Hp, :, :] = jnp.zeros((1, Wp, Cw), jnp.bfloat16)
    y1_ref[:, 0:1, :] = jnp.zeros((Hp, 1, Cw), jnp.bfloat16)
    y1_ref[:, Wp - 1:Wp, :] = jnp.zeros((Hp, 1, Cw), jnp.bfloat16)
    y1_ref[1:H + 1, 1:W + 1, :] = y1.reshape(H, W, Cw)

    # ---- conv2 (3x3, stride=1, pad=1) + bn2 + relu: ONE im2col matmul -------
    # Gather the 9 shifted views into a (H*W, 9*Cw) bf16 operand (K = 9*Cw).
    col = jnp.concatenate(
        [y1_ref[kh:kh + H, kw:kw + W, :] for kh in range(3) for kw in range(3)],
        axis=-1).reshape(H * W, 9 * Cw)
    y2 = jnp.dot(col, w2_ref[...], preferred_element_type=jnp.float32)
    y2 = jnp.maximum(y2 + b12_ref[1:2, :], 0.0).astype(jnp.bfloat16)

    # ---- conv3 (1x1) + bn3 + residual add + relu -----------------------------
    y3 = jnp.dot(y2, w3_ref[...], preferred_element_type=jnp.float32)
    y3 = y3 + b3_ref[...] + x.astype(jnp.float32)
    o_ref[0] = jnp.maximum(y3, 0.0).reshape(H, W, Cout).astype(o_ref.dtype)


# ----------------------------------------------------------------------------
# Wrapper: NCHW -> NHWC/bf16, one fused pallas_call, NHWC -> NCHW/f32
# ----------------------------------------------------------------------------
def bottleneck_forward(x_nchw, params):
    N, Cin, H, W = x_nchw.shape
    Cw = params["w1"].shape[1]
    Cout = params["w3"].shape[1]
    assert Cin == Cout, "no-downsample Bottleneck requires inplanes == planes*4"

    # NCHW -> NHWC + cast to bf16 (MXU-native, halves HBM bytes into the kernel).
    # NOTE: the residual is therefore added from the bf16-quantized x (PyTorch
    # adds the full-precision identity) — small systematic deviation.
    x = jnp.transpose(x_nchw, (0, 2, 3, 1)).astype(jnp.bfloat16)

    out_nhwc = pl.pallas_call(
        _bottleneck_kernel,
        out_shape=jax.ShapeDtypeStruct((N, H, W, Cout), jnp.bfloat16),
        grid_spec=pltpu.PrefetchScalarGridSpec(
            num_scalar_prefetch=0,
            grid=(N,),
            in_specs=[
                pl.BlockSpec((1, H, W, Cin), lambda n: (n, 0, 0, 0)),
                pl.BlockSpec((Cin, Cw), lambda n: (0, 0)),
                pl.BlockSpec((9 * Cw, Cw), lambda n: (0, 0)),
                pl.BlockSpec((Cw, Cout), lambda n: (0, 0)),
                pl.BlockSpec((2, Cw), lambda n: (0, 0)),
                pl.BlockSpec((1, Cout), lambda n: (0, 0)),
            ],
            out_specs=pl.BlockSpec((1, H, W, Cout), lambda n: (n, 0, 0, 0)),
            scratch_shapes=[pltpu.VMEM((H + 2, W + 2, Cw), jnp.bfloat16)],
        ),
        compiler_params=pltpu.CompilerParams(
            # Images are independent: megacore / 2-TC chips shard the N axis.
            dimension_semantics=("parallel",),
        ),
    )(x, params["w1"], params["w2"], params["w3"], params["b12"], params["b3"])

    # Back to the module's NCHW / f32 contract.
    return jnp.transpose(out_nhwc, (0, 3, 1, 2)).astype(jnp.float32)


# ----------------------------------------------------------------------------
# Pure-JAX reference with the same mixed precision and folded-BN weights.
# ----------------------------------------------------------------------------
def bottleneck_reference(x_nchw, params):
    x = jnp.transpose(x_nchw, (0, 2, 3, 1)).astype(jnp.bfloat16)
    N, H, W, _ = x.shape
    Cw = params["w1"].shape[1]

    def dot(a, w):
        return jnp.einsum("nhwc,cd->nhwd", a, w,
                          preferred_element_type=jnp.float32)

    y1 = jnp.maximum(dot(x, params["w1"]) + params["b12"][0], 0.0)
    y1 = y1.astype(jnp.bfloat16)

    w2 = params["w2"].reshape(9, Cw, Cw)
    y1p = jnp.pad(y1, ((0, 0), (1, 1), (1, 1), (0, 0)))
    acc = jnp.zeros((N, H, W, Cw), jnp.float32)
    for kh in range(3):
        for kw in range(3):
            acc = acc + dot(y1p[:, kh:kh + H, kw:kw + W, :], w2[kh * 3 + kw])
    y2 = jnp.maximum(acc + params["b12"][1], 0.0).astype(jnp.bfloat16)

    y3 = dot(y2, params["w3"]) + params["b3"][0] + x.astype(jnp.float32)
    out = jnp.maximum(y3, 0.0)
    return jnp.transpose(out, (0, 3, 1, 2))


# ----------------------------------------------------------------------------
# Parameter construction: conv weights in kernel layout, BN scales folded into
# the weight columns (fold in f32, then cast to bf16), biases packed.
# ----------------------------------------------------------------------------
def make_params(key, inplanes, planes, base_width=64, groups=1, eps=1e-5):
    expansion = 4
    width = int(planes * (base_width / 64.0)) * groups
    out_planes = planes * expansion

    ks = jax.random.split(key, 15)

    def bn_affine(k4, c):
        kg, kb, km, kv = k4
        gamma = 1.0 + 0.1 * jax.random.normal(kg, (c,), jnp.float32)
        beta = 0.1 * jax.random.normal(kb, (c,), jnp.float32)
        mean = 0.1 * jax.random.normal(km, (c,), jnp.float32)
        var = jnp.abs(jax.random.normal(kv, (c,), jnp.float32)) + 0.5
        scale = gamma / jnp.sqrt(var + eps)
        bias = beta - mean * scale
        return scale, bias

    # Raw conv weights in (in, out) / (tap, in, out) layout.
    w1f = 0.1 * jax.random.normal(ks[0], (inplanes, width), jnp.float32)
    w2f = 0.1 * jax.random.normal(ks[1], (9, width, width), jnp.float32)
    w3f = 0.1 * jax.random.normal(ks[2], (width, out_planes), jnp.float32)

    s1, b1 = bn_affine(ks[3:7], width)
    s2, b2 = bn_affine(ks[7:11], width)
    s3, b3 = bn_affine(ks[11:15], out_planes)

    # Fold BN scale into the weight output columns in f32, then cast to bf16.
    w1 = (w1f * s1[None, :]).astype(jnp.bfloat16)
    w2 = (w2f * s2[None, None, :]).reshape(9 * width, width).astype(jnp.bfloat16)
    w3 = (w3f * s3[None, :]).astype(jnp.bfloat16)

    b12 = jnp.stack([b1, b2], axis=0)            # (2, width)      f32
    b3 = b3.reshape(1, out_planes)               # (1, out_planes) f32

    return dict(w1=w1, w2=w2, w3=w3, b12=b12, b3=b3)


# ----------------------------------------------------------------------------
if __name__ == "__main__":
    key = jax.random.PRNGKey(0)
    k_x, k_p = jax.random.split(key)

    # Bottleneck(inplanes=128, planes=32): width=32, out_planes=128.
    # Identity path (downsample=None) requires inplanes == planes*4.
    # 128 in/out channels keep the lane (128) dimension dense; H*W=256 gives a
    # full MXU M dimension per image.
    N, inplanes, planes, H, W = 2, 128, 32, 16, 16
    x = jax.random.normal(k_x, (N, inplanes, H, W), jnp.float32)   # NCHW input
    params = make_params(k_p, inplanes, planes)

    fwd = jax.jit(bottleneck_forward)
    out = jax.block_until_ready(fwd(x, params))
    assert out.shape == (N, planes * 4, H, W)
    assert out.dtype == jnp.float32

    ref = bottleneck_reference(x, params)
    np.testing.assert_allclose(np.asarray(out, np.float32),
                               np.asarray(ref, np.float32),
                               rtol=2e-2, atol=2e-2)
    print("KERNEL_OK")
</pallas_src>

<mosaic_0001>
module attributes {stable_mosaic.version = 11 : i64} {
  func.func @_bottleneck_kernel(%arg0: i32, %arg1: memref<1x16x16x128xbf16, #tpu.memory_space<vmem>>, %arg2: memref<128x32xbf16, #tpu.memory_space<vmem>>, %arg3: memref<288x32xbf16, #tpu.memory_space<vmem>>, %arg4: memref<32x128xbf16, #tpu.memory_space<vmem>>, %arg5: memref<2x32xf32, #tpu.memory_space<vmem>>, %arg6: memref<1x128xf32, #tpu.memory_space<vmem>>, %arg7: memref<1x16x16x128xbf16, #tpu.memory_space<vmem>>, %arg8: memref<18x18x32xbf16, #tpu.memory_space<vmem>>) attributes {dimension_semantics = [#tpu.dimension_semantics<parallel>], iteration_bounds = array<i64: 2>, scalar_prefetch = 0 : i64, scratch_operands = 1 : i64, tpu.core_type = #tpu.core_type<tc>, window_params = [{transform_indices = @transform_0, window_bounds = array<i64: 1, 16, 16, 128>}, {pipeline_mode = #tpu.pipeline_mode<synchronous>, transform_indices = @transform_1, window_bounds = array<i64: 128, 32>}, {pipeline_mode = #tpu.pipeline_mode<synchronous>, transform_indices = @transform_2, window_bounds = array<i64: 288, 32>}, {pipeline_mode = #tpu.pipeline_mode<synchronous>, transform_indices = @transform_3, window_bounds = array<i64: 32, 128>}, {pipeline_mode = #tpu.pipeline_mode<synchronous>, transform_indices = @transform_4, window_bounds = array<i64: 2, 32>}, {pipeline_mode = #tpu.pipeline_mode<synchronous>, transform_indices = @transform_5, window_bounds = array<i64: 1, 128>}, {transform_indices = @transform_6, window_bounds = array<i64: 1, 16, 16, 128>}]} {
    %c0 = arith.constant 0 : index
    %c0_0 = arith.constant 0 : index
    %c0_1 = arith.constant 0 : index
    %c0_2 = arith.constant 0 : index
    %0 = vector.load %arg1[%c0, %c0_0, %c0_1, %c0_2] : memref<1x16x16x128xbf16, #tpu.memory_space<vmem>>, vector<1x16x16x128xbf16>
    %1 = vector.shape_cast %0 : vector<1x16x16x128xbf16> to vector<16x16x128xbf16>
    %2 = vector.shape_cast %1 : vector<16x16x128xbf16> to vector<256x128xbf16>
    %c0_3 = arith.constant 0 : index
    %c0_4 = arith.constant 0 : index
    %3 = vector.load %arg2[%c0_3, %c0_4] : memref<128x32xbf16, #tpu.memory_space<vmem>>, vector<128x32xbf16>
    %cst = arith.constant dense<0.000000e+00> : vector<256x32xf32>
    %4 = tpu.matmul %2, %3, %cst {dimension_numbers = #tpu.dot_dimension_numbers<[1], [0], [0], [1], [0, 0, 1, 1], [], []>} : vector<256x128xbf16>, vector<128x32xbf16>, vector<256x32xf32> -> vector<256x32xf32>
    %c0_5 = arith.constant 0 : index
    %c0_6 = arith.constant 0 : index
    %5 = vector.load %arg5[%c0_5, %c0_6] : memref<2x32xf32, #tpu.memory_space<vmem>>, vector<1x32xf32>
    %6 = vector.broadcast %5 : vector<1x32xf32> to vector<256x32xf32>
    %7 = arith.addf %4, %6 : vector<256x32xf32>
    %cst_7 = arith.constant 0.000000e+00 : f32
    %8 = vector.broadcast %cst_7 : f32 to vector<256x32xf32>
    %9 = arith.maximumf %7, %8 : vector<256x32xf32>
    %10 = arith.truncf %9 : vector<256x32xf32> to vector<256x32xbf16>
    %cst_8 = arith.constant 0.000000e+00 : bf16
    %11 = vector.broadcast %cst_8 : bf16 to vector<1x18x32xbf16>
    %c0_9 = arith.constant 0 : index
    %c0_10 = arith.constant 0 : index
    %c0_11 = arith.constant 0 : index
    %12 = vector.load %arg8[%c0_9, %c0_10, %c0_11] : memref<18x18x32xbf16, #tpu.memory_space<vmem>>, vector<1x18x32xbf16>
    tpu.vector_store %arg8[%c0_9, %c0_10, %c0_11], %11 {strides = array<i32>} : memref<18x18x32xbf16, #tpu.memory_space<vmem>>, vector<1x18x32xbf16>,
    %cst_12 = arith.constant 0.000000e+00 : bf16
    %13 = vector.broadcast %cst_12 : bf16 to vector<1x18x32xbf16>
    %c17 = arith.constant 17 : index
    %c0_13 = arith.constant 0 : index
    %c0_14 = arith.constant 0 : index
    %14 = vector.load %arg8[%c17, %c0_13, %c0_14] : memref<18x18x32xbf16, #tpu.memory_space<vmem>>, vector<1x18x32xbf16>
    tpu.vector_store %arg8[%c17, %c0_13, %c0_14], %13 {strides = array<i32>} : memref<18x18x32xbf16, #tpu.memory_space<vmem>>, vector<1x18x32xbf16>,
    %cst_15 = arith.constant 0.000000e+00 : bf16
    %15 = vector.broadcast %cst_15 : bf16 to vector<18x1x32xbf16>
    %c0_16 = arith.constant 0 : index
    %c0_17 = arith.constant 0 : index
    %c0_18 = arith.constant 0 : index
    %16 = vector.load %arg8[%c0_16, %c0_17, %c0_18] : memref<18x18x32xbf16, #tpu.memory_space<vmem>>, vector<18x1x32xbf16>
    tpu.vector_store %arg8[%c0_16, %c0_17, %c0_18], %15 {strides = array<i32>} : memref<18x18x32xbf16, #tpu.memory_space<vmem>>, vector<18x1x32xbf16>,
    %cst_19 = arith.constant 0.000000e+00 : bf16
    %17 = vector.broadcast %cst_19 : bf16 to vector<18x1x32xbf16>
    %c0_20 = arith.constant 0 : index
    %c17_21 = arith.constant 17 : index
    %c0_22 = arith.constant 0 : index
    %18 = vector.load %arg8[%c0_20, %c17_21, %c0_22] : memref<18x18x32xbf16, #tpu.memory_space<vmem>>, vector<18x1x32xbf16>
    tpu.vector_store %arg8[%c0_20, %c17_21, %c0_22], %17 {strides = array<i32>} : memref<18x18x32xbf16, #tpu.memory_space<vmem>>, vector<18x1x32xbf16>,
    %19 = vector.shape_cast %10 : vector<256x32xbf16> to vector<16x16x32xbf16>
    %c1 = arith.constant 1 : index
    %c1_23 = arith.constant 1 : index
    %c0_24 = arith.constant 0 : index
    %20 = vector.load %arg8[%c1, %c1_23, %c0_24] : memref<18x18x32xbf16, #tpu.memory_space<vmem>>, vector<16x16x32xbf16>
    tpu.vector_store %arg8[%c1, %c1_23, %c0_24], %19 {strides = array<i32>} : memref<18x18x32xbf16, #tpu.memory_space<vmem>>, vector<16x16x32xbf16>,
    %c0_25 = arith.constant 0 : index
    %c0_26 = arith.constant 0 : index
    %c0_27 = arith.constant 0 : index
    %21 = vector.load %arg8[%c0_25, %c0_26, %c0_27] : memref<18x18x32xbf16, #tpu.memory_space<vmem>>, vector<16x16x32xbf16>
    %c0_28 = arith.constant 0 : index
    %c1_29 = arith.constant 1 : index
    %c0_30 = arith.constant 0 : index
    %22 = vector.load %arg8[%c0_28, %c1_29, %c0_30] : memref<18x18x32xbf16, #tpu.memory_space<vmem>>, vector<16x16x32xbf16>
    %c0_31 = arith.constant 0 : index
    %c2 = arith.constant 2 : index
    %c0_32 = arith.constant 0 : index
    %23 = vector.load %arg8[%c0_31, %c2, %c0_32] : memref<18x18x32xbf16, #tpu.memory_space<vmem>>, vector<16x16x32xbf16>
    %c1_33 = arith.constant 1 : index
    %c0_34 = arith.constant 0 : index
    %c0_35 = arith.constant 0 : index
    %24 = vector.load %arg8[%c1_33, %c0_34, %c0_35] : memref<18x18x32xbf16, #tpu.memory_space<vmem>>, vector<16x16x32xbf16>
    %c1_36 = arith.constant 1 : index
    %c1_37 = arith.constant 1 : index
    %c0_38 = arith.constant 0 : index
    %25 = vector.load %arg8[%c1_36, %c1_37, %c0_38] : memref<18x18x32xbf16, #tpu.memory_space<vmem>>, vector<16x16x32xbf16>
    %c1_39 = arith.constant 1 : index
    %c2_40 = arith.constant 2 : index
    %c0_41 = arith.constant 0 : index
    %26 = vector.load %arg8[%c1_39, %c2_40, %c0_41] : memref<18x18x32xbf16, #tpu.memory_space<vmem>>, vector<16x16x32xbf16>
    %c2_42 = arith.constant 2 : index
    %c0_43 = arith.constant 0 : index
    %c0_44 = arith.constant 0 : index
    %27 = vector.load %arg8[%c2_42, %c0_43, %c0_44] : memref<18x18x32xbf16, #tpu.memory_space<vmem>>, vector<16x16x32xbf16>
    %c2_45 = arith.constant 2 : index
    %c1_46 = arith.constant 1 : index
    %c0_47 = arith.constant 0 : index
    %28 = vector.load %arg8[%c2_45, %c1_46, %c0_47] : memref<18x18x32xbf16, #tpu.memory_space<vmem>>, vector<16x16x32xbf16>
    %c2_48 = arith.constant 2 : index
    %c2_49 = arith.constant 2 : index
    %c0_50 = arith.constant 0 : index
    %29 = vector.load %arg8[%c2_48, %c2_49, %c0_50] : memref<18x18x32xbf16, #tpu.memory_space<vmem>>, vector<16x16x32xbf16>
    %30 = tpu.concatenate %21, %22, %23, %24, %25, %26, %27, %28, %29 in 2 : vector<16x16x32xbf16>, vector<16x16x32xbf16>, vector<16x16x32xbf16>, vector<16x16x32xbf16>, vector<16x16x32xbf16>, vector<16x16x32xbf16>, vector<16x16x32xbf16>, vector<16x16x32xbf16>, vector<16x16x32xbf16> -> vector<16x16x288xbf16>
    %31 = vector.shape_cast %30 : vector<16x16x288xbf16> to vector<256x288xbf16>
    %c0_51 = arith.constant 0 : index
    %c0_52 = arith.constant 0 : index
    %32 = vector.load %arg3[%c0_51, %c0_52] : memref<288x32xbf16, #tpu.memory_space<vmem>>, vector<288x32xbf16>
    %cst_53 = arith.constant dense<0.000000e+00> : vector<256x32xf32>
    %33 = tpu.matmul %31, %32, %cst_53 {dimension_numbers = #tpu.dot_dimension_numbers<[1], [0], [0], [1], [0, 0, 1, 1], [], []>} : vector<256x288xbf16>, vector<288x32xbf16>, vector<256x32xf32> -> vector<256x32xf32>
    %c1_54 = arith.constant 1 : index
    %c0_55 = arith.constant 0 : index
    %34 = vector.load %arg5[%c1_54, %c0_55] : memref<2x32xf32, #tpu.memory_space<vmem>>, vector<1x32xf32>
    %35 = vector.broadcast %34 : vector<1x32xf32> to vector<256x32xf32>
    %36 = arith.addf %33, %35 : vector<256x32xf32>
    %cst_56 = arith.constant 0.000000e+00 : f32
    %37 = vector.broadcast %cst_56 : f32 to vector<256x32xf32>
    %38 = arith.maximumf %36, %37 : vector<256x32xf32>
    %39 = arith.truncf %38 : vector<256x32xf32> to vector<256x32xbf16>
    %c0_57 = arith.constant 0 : index
    %c0_58 = arith.constant 0 : index
    %40 = vector.load %arg4[%c0_57, %c0_58] : memref<32x128xbf16, #tpu.memory_space<vmem>>, vector<32x128xbf16>
    %cst_59 = arith.constant dense<0.000000e+00> : vector<256x128xf32>
    %41 = tpu.matmul %39, %40, %cst_59 {dimension_numbers = #tpu.dot_dimension_numbers<[1], [0], [0], [1], [0, 0, 1, 1], [], []>} : vector<256x32xbf16>, vector<32x128xbf16>, vector<256x128xf32> -> vector<256x128xf32>
    %c0_60 = arith.constant 0 : index
    %c0_61 = arith.constant 0 : index
    %42 = vector.load %arg6[%c0_60, %c0_61] : memref<1x128xf32, #tpu.memory_space<vmem>>, vector<1x128xf32>
    %43 = vector.broadcast %42 : vector<1x128xf32> to vector<256x128xf32>
    %44 = arith.addf %41, %43 : vector<256x128xf32>
    %45 = arith.extf %2 : vector<256x128xbf16> to vector<256x128xf32>
    %46 = arith.addf %44, %45 : vector<256x128xf32>
    %cst_62 = arith.constant 0.000000e+00 : f32
    %47 = vector.broadcast %cst_62 : f32 to vector<256x128xf32>
    %48 = arith.maximumf %46, %47 : vector<256x128xf32>
    %49 = vector.shape_cast %48 : vector<256x128xf32> to vector<16x16x128xf32>
    %50 = arith.truncf %49 : vector<16x16x128xf32> to vector<16x16x128xbf16>
    %c0_63 = arith.constant 0 : index
    %c0_64 = arith.constant 0 : index
    %c0_65 = arith.constant 0 : index
    %c0_66 = arith.constant 0 : index
    %51 = vector.load %arg7[%c0_63, %c0_64, %c0_65, %c0_66] : memref<1x16x16x128xbf16, #tpu.memory_space<vmem>>, vector<1x16x16x128xbf16>
    %52 = vector.shape_cast %51 : vector<1x16x16x128xbf16> to vector<16x16x128xbf16>
    %53 = vector.shape_cast %50 : vector<16x16x128xbf16> to vector<1x16x16x128xbf16>
    tpu.vector_store %arg7[%c0_63, %c0_64, %c0_65, %c0_66], %53 {strides = array<i32>} : memref<1x16x16x128xbf16, #tpu.memory_space<vmem>>, vector<1x16x16x128xbf16>,
    return
  }
  func.func @transform_0(%arg0: i32) -> (i32, i32, i32, i32) {
    %c0_i32 = arith.constant 0 : i32
    %c0_i32_0 = arith.constant 0 : i32
    %c0_i32_1 = arith.constant 0 : i32
    %c0_i32_2 = arith.constant 0 : i32
    return %arg0, %c0_i32, %c0_i32_0, %c0_i32_1 : i32, i32, i32, i32
  }
  func.func @transform_1(%arg0: i32) -> (i32, i32) {
    %c0_i32 = arith.constant 0 : i32
    %c0_i32_0 = arith.constant 0 : i32
    %c0_i32_1 = arith.constant 0 : i32
    return %c0_i32, %c0_i32_0 : i32, i32
  }
  func.func @transform_2(%arg0: i32) -> (i32, i32) {
    %c0_i32 = arith.constant 0 : i32
    %c0_i32_0 = arith.constant 0 : i32
    %c0_i32_1 = arith.constant 0 : i32
    return %c0_i32, %c0_i32_0 : i32, i32
  }
  func.func @transform_3(%arg0: i32) -> (i32, i32) {
    %c0_i32 = arith.constant 0 : i32
    %c0_i32_0 = arith.constant 0 : i32
    %c0_i32_1 = arith.constant 0 : i32
    return %c0_i32, %c0_i32_0 : i32, i32
  }
  func.func @transform_4(%arg0: i32) -> (i32, i32) {
    %c0_i32 = arith.constant 0 : i32
    %c0_i32_0 = arith.constant 0 : i32
    %c0_i32_1 = arith.constant 0 : i32
    return %c0_i32, %c0_i32_0 : i32, i32
  }
  func.func @transform_5(%arg0: i32) -> (i32, i32) {
    %c0_i32 = arith.constant 0 : i32
    %c0_i32_0 = arith.constant 0 : i32
    %c0_i32_1 = arith.constant 0 : i32
    return %c0_i32, %c0_i32_0 : i32, i32
  }
  func.func @transform_6(%arg0: i32) -> (i32, i32, i32, i32) {
    %c0_i32 = arith.constant 0 : i32
    %c0_i32_0 = arith.constant 0 : i32
    %c0_i32_1 = arith.constant 0 : i32
    %c0_i32_2 = arith.constant 0 : i32
    return %arg0, %c0_i32, %c0_i32_0, %c0_i32_1 : i32, i32, i32, i32
  }
}

</mosaic_0001>

<llo_original>
// kernel: bottleneck_forward.1
$region0: #{bottleneck_forward.1}
  #allocation0 [shape = 'u32[]', space=smem, size = 0x4, offset = 0x4, fixed_abs, tag = 'smem constant byte address 0x4 - core index']
  #allocation1 [shape = 'u32[144,128]{1,0:T(1,128)}', space=vmem, size = 0x12000, scoped, tag = 'internal scratch']
  #allocation2 [shape = 'bf16[18,18,32]{2,1,0:T(8,128)(2,1)}', space=vmem, size = 0x1b000, scoped, tag = 'scratch operand']
  %s0 = inlined_call_operand.vmem [shape: bf16[2,16,16,128], index: 0, kind: input, shape index: {}]
  %s1 = inlined_call_operand.vmem [shape: bf16[128,32], index: 1, kind: input, shape index: {}]
  %s2 = inlined_call_operand.vmem [shape: bf16[288,32], index: 2, kind: input, shape index: {}]
  %s3 = inlined_call_operand.vmem [shape: bf16[32,128], index: 3, kind: input, shape index: {}]
  %s4 = inlined_call_operand.vmem [shape: f32[2,32], index: 4, kind: input, shape index: {}]
  %s5 = inlined_call_operand.vmem [shape: f32[1,128], index: 5, kind: input, shape index: {}]
  %s6 = inlined_call_operand.vmem [shape: bf16[2,16,16,128], index: 6, kind: output, shape index: {}]
  %s7 = sld [smem:[#allocation0]]
  $region57: #{bottleneck_forward.1} parent=0
    _
  %s9 = ssub.s32 1, %s7
  %s10 = scalar_select 0, %s9, %s7
  loop: start=0, step=1, limit=4
  $region2: #{bottleneck_forward.1} parent=0 // loop_pre_header
    _
  $region3: #{bottleneck_forward.1} parent=0 // loop_header
    %s12 = sphi 0, %s16
    %p13 = scmp.ge.s32.totalorder %s12, 4
    %s22 = sphi 0, %s24
    %s25 = sphi 0, %s22
    %s26 = sphi 0, %s25
    %s42 = sphi 0, %s26
    %s46 = sphi 0, %s46
    %s48 = sphi 0, %s46
    %s49 = sphi 0, %s48
    %s63 = sphi 0, %s49
    %s67 = sphi 0, %s67
    %s69 = sphi 0, %s67
    %s70 = sphi 0, %s69
    %s84 = sphi 0, %s70
    %s88 = sphi 0, %s88
    %s90 = sphi 0, %s88
    %s91 = sphi 0, %s90
    %s105 = sphi 0, %s91
    %s109 = sphi 0, %s109
    %s111 = sphi 0, %s109
    %s112 = sphi 0, %s111
    %s126 = sphi 0, %s112
    %s130 = sphi 0, %s130
    %s132 = sphi 0, %s130
    %s133 = sphi 0, %s132
    %s147 = sphi 0, %s133
    %s153 = sphi 0, %s155
    %s156 = sphi 0, %s153
    %s157 = sphi 0, %s156
    %s173 = sphi 0, %s157
  $region4: #{bottleneck_forward.1} parent=0 // loop_header_branch
    %15 = sbr.rel (%p13) target = $region8
  $region5: #{bottleneck_forward.1} parent=0 // loop_body
    %s17 = ssub.s32 %s12, 1
    %s18 = ssub.s32 %s12, 2
    %s19 = sadd.s32 %s12, 1
    %s20 = ssub.s32 %s12, %s19
    %p21 = scmp.eq.s32.totalorder %s20, 0
    %s23 = sadd.s32 %s22, 1
    %s24 = scalar_select %p21, %s22, %s23
    %p27 = pneg %p21
    %p28 = scmp.eq.s32.totalorder %s12, 1
    %p29 = por %p27, %p28
    %p30 = scmp.ne.s32.totalorder %s22, %s25
    %p31 = scmp.eq.s32.totalorder %s12, 0
    %p32 = por %p30, %p31
    %p33 = scmp.ne.s32.totalorder %s22, %s25
    %p34 = scmp.eq.s32.totalorder %s17, 1
    %p35 = por %p33, %p34
    %p36 = scmp.ne.s32.totalorder %s25, %s26
    %p37 = scmp.eq.s32.totalorder %s17, 0
    %p38 = por %p36, %p37
    %p39 = scmp.ne.s32.totalorder %s25, %s26
    %p40 = scmp.eq.s32.totalorder %s18, 1
    %p41 = por %p39, %p40
    %p43 = scmp.ne.s32.totalorder %s26, %s42
    %p44 = scmp.eq.s32.totalorder %s18, 0
    %p45 = por %p43, %p44
    %s47 = sadd.s32 %s46, 1
    %p50 = scmp.eq.s32.totalorder %s12, 1
    %p51 = scmp.ne.s32.totalorder %s46, %s48
    %p52 = scmp.eq.s32.totalorder %s12, 0
    %p53 = por %p51, %p52
    %p54 = scmp.ne.s32.totalorder %s46, %s48
    %p55 = scmp.eq.s32.totalorder %s17, 1
    %p56 = por %p54, %p55
    %p57 = scmp.ne.s32.totalorder %s48, %s49
    %p58 = scmp.eq.s32.totalorder %s17, 0
    %p59 = por %p57, %p58
    %p60 = scmp.ne.s32.totalorder %s48, %s49
    %p61 = scmp.eq.s32.totalorder %s18, 1
    %p62 = por %p60, %p61
    %p64 = scmp.ne.s32.totalorder %s49, %s63
    %p65 = scmp.eq.s32.totalorder %s18, 0
    %p66 = por %p64, %p65
    %s68 = sadd.s32 %s67, 1
    %p71 = scmp.eq.s32.totalorder %s12, 1
    %p72 = scmp.ne.s32.totalorder %s67, %s69
    %p73 = scmp.eq.s32.totalorder %s12, 0
    %p74 = por %p72, %p73
    %p75 = scmp.ne.s32.totalorder %s67, %s69
    %p76 = scmp.eq.s32.totalorder %s17, 1
    %p77 = por %p75, %p76
    %p78 = scmp.ne.s32.totalorder %s69, %s70
    %p79 = scmp.eq.s32.totalorder %s17, 0
    %p80 = por %p78, %p79
    %p81 = scmp.ne.s32.totalorder %s69, %s70
    %p82 = scmp.eq.s32.totalorder %s18, 1
    %p83 = por %p81, %p82
    %p85 = scmp.ne.s32.totalorder %s70, %s84
    %p86 = scmp.eq.s32.totalorder %s18, 0
    %p87 = por %p85, %p86
    %s89 = sadd.s32 %s88, 1
    %p92 = scmp.eq.s32.totalorder %s12, 1
    %p93 = scmp.ne.s32.totalorder %s88, %s90
    %p94 = scmp.eq.s32.totalorder %s12, 0
    %p95 = por %p93, %p94
    %p96 = scmp.ne.s32.totalorder %s88, %s90
    %p97 = scmp.eq.s32.totalorder %s17, 1
    %p98 = por %p96, %p97
    %p99 = scmp.ne.s32.totalorder %s90, %s91
    %p100 = scmp.eq.s32.totalorder %s17, 0
    %p101 = por %p99, %p100
    %p102 = scmp.ne.s32.totalorder %s90, %s91
    %p103 = scmp.eq.s32.totalorder %s18, 1
    %p104 = por %p102, %p103
    %p106 = scmp.ne.s32.totalorder %s91, %s105
    %p107 = scmp.eq.s32.totalorder %s18, 0
    %p108 = por %p106, %p107
    %s110 = sadd.s32 %s109, 1
    %p113 = scmp.eq.s32.totalorder %s12, 1
    %p114 = scmp.ne.s32.totalorder %s109, %s111
    %p115 = scmp.eq.s32.totalorder %s12, 0
    %p116 = por %p114, %p115
    %p117 = scmp.ne.s32.totalorder %s109, %s111
    %p118 = scmp.eq.s32.totalorder %s17, 1
    %p119 = por %p117, %p118
    %p120 = scmp.ne.s32.totalorder %s111, %s112
    %p121 = scmp.eq.s32.totalorder %s17, 0
    %p122 = por %p120, %p121
    %p123 = scmp.ne.s32.totalorder %s111, %s112
    %p124 = scmp.eq.s32.totalorder %s18, 1
    %p125 = por %p123, %p124
    %p127 = scmp.ne.s32.totalorder %s112, %s126
    %p128 = scmp.eq.s32.totalorder %s18, 0
    %p129 = por %p127, %p128
    %s131 = sadd.s32 %s130, 1
    %p134 = scmp.eq.s32.totalorder %s12, 1
    %p135 = scmp.ne.s32.totalorder %s130, %s132
    %p136 = scmp.eq.s32.totalorder %s12, 0
    %p137 = por %p135, %p136
    %p138 = scmp.ne.s32.totalorder %s130, %s132
    %p139 = scmp.eq.s32.totalorder %s17, 1
    %p140 = por %p138, %p139
    %p141 = scmp.ne.s32.totalorder %s132, %s133
    %p142 = scmp.eq.s32.totalorder %s17, 0
    %p143 = por %p141, %p142
    %p144 = scmp.ne.s32.totalorder %s132, %s133
    %p145 = scmp.eq.s32.totalorder %s18, 1
    %p146 = por %p144, %p145
    %p148 = scmp.ne.s32.totalorder %s133, %s147
    %p149 = scmp.eq.s32.totalorder %s18, 0
    %p150 = por %p148, %p149
    %s151 = ssub.s32 %s12, %s19
    %p152 = scmp.eq.s32.totalorder %s151, 0
    %s154 = sadd.s32 %s153, 1
    %s155 = scalar_select %p152, %s153, %s154
    %p158 = pneg %p152
    %p159 = scmp.eq.s32.totalorder %s12, 1
    %p160 = por %p158, %p159
    %p161 = scmp.ne.s32.totalorder %s153, %s156
    %p162 = scmp.eq.s32.totalorder %s12, 0
    %p163 = por %p161, %p162
    %p164 = scmp.ne.s32.totalorder %s153, %s156
    %p165 = scmp.eq.s32.totalorder %s17, 1
    %p166 = por %p164, %p165
    %p167 = scmp.ne.s32.totalorder %s156, %s157
    %p168 = scmp.eq.s32.totalorder %s17, 0
    %p169 = por %p167, %p168
    %p170 = scmp.ne.s32.totalorder %s156, %s157
    %p171 = scmp.eq.s32.totalorder %s18, 1
    %p172 = por %p170, %p171
    %p174 = scmp.ne.s32.totalorder %s157, %s173
    %p175 = scmp.eq.s32.totalorder %s18, 0
    %p176 = por %p174, %p175
    %p177 = scmp.le.s32.totalorder 1, %s12
    %p178 = scmp.lt.s32.totalorder %s12, 3
    %p179 = pnand %p177, %p178
    %p180 = pneg %p179
    // Predicated region
    $region9: #{bottleneck_forward.1} parent=5 // pred_check
      _
    $region10: #{bottleneck_forward.1} parent=5 // pred_check_branch
      %182 = sbr.rel (%p179) target = $region12
    $region11: #{bottleneck_forward.1} parent=5 // pred_region
      %s183 = ssub.s32 %s12, 1
      // Predicated region
      $region13: #{bottleneck_forward.1} parent=11 // pred_check
        %p184 = pneg %p59
      $region14: #{bottleneck_forward.1} parent=11 // pred_check_branch
        %186 = sbr.rel (%p184) target = $region16
      $region15: #{bottleneck_forward.1} parent=11 // pred_region
        _
      $region16: #{bottleneck_forward.1} parent=11 // pred_fallthru
        _
      // Predicated region
      $region17: #{bottleneck_forward.1} parent=11 // pred_check
        %p187 = pneg %p80
      $region18: #{bottleneck_forward.1} parent=11 // pred_check_branch
        %189 = sbr.rel (%p187) target = $region20
      $region19: #{bottleneck_forward.1} parent=11 // pred_region
        _
      $region20: #{bottleneck_forward.1} parent=11 // pred_fallthru
        _
      // Predicated region
      $region21: #{bottleneck_forward.1} parent=11 // pred_check
        %p190 = pneg %p101
      $region22: #{bottleneck_forward.1} parent=11 // pred_check_branch
        %192 = sbr.rel (%p190) target = $region24
      $region23: #{bottleneck_forward.1} parent=11 // pred_region
        _
      $region24: #{bottleneck_forward.1} parent=11 // pred_fallthru
        _
      // Predicated region
      $region25: #{bottleneck_forward.1} parent=11 // pred_check
        %p193 = pneg %p122
      $region26: #{bottleneck_forward.1} parent=11 // pred_check_branch
        %195 = sbr.rel (%p193) target = $region28
      $region27: #{bottleneck_forward.1} parent=11 // pred_region
        _
      $region28: #{bottleneck_forward.1} parent=11 // pred_fallthru
        _
      // Predicated region
      $region29: #{bottleneck_forward.1} parent=11 // pred_check
        %p196 = pneg %p143
      $region30: #{bottleneck_forward.1} parent=11 // pred_check_branch
        %198 = sbr.rel (%p196) target = $region32
      $region31: #{bottleneck_forward.1} parent=11 // pred_region
        _
      $region32: #{bottleneck_forward.1} parent=11 // pred_fallthru
        _
    $region12: #{bottleneck_forward.1} parent=5 // pred_fallthru
      _
    %p199 = scmp.lt.s32.totalorder %s12, 2
    // Predicated region
    $region33: #{bottleneck_forward.1} parent=5 // pred_check
      %p200 = pneg %p199
    $region34: #{bottleneck_forward.1} parent=5 // pred_check_branch
      %202 = sbr.rel (%p200) target = $region36
    $region35: #{bottleneck_forward.1} parent=5 // pred_region
      // Predicated region
      $region37: #{bottleneck_forward.1} parent=35 // pred_check
        %p203 = pneg %p32
      $region38: #{bottleneck_forward.1} parent=35 // pred_check_branch
        %205 = sbr.rel (%p203) target = $region40
      $region39: #{bottleneck_forward.1} parent=35 // pred_region
        %p206 = scmp.lt.s32.totalorder %s12, 1
        %s207 = scalar_select %p206, %s12, 1
        %s208 = smul.addr %s207, 32
        %s209 = smul.addr %s208, 4
        %s210 = scalar_lea.vmem %s0, %s209
      $region40: #{bottleneck_forward.1} parent=35 // pred_fallthru
        _
    $region36: #{bottleneck_forward.1} parent=5 // pred_fallthru
      _
    %p211 = scmp.le.s32.totalorder 1, %s12
    %p212 = scmp.lt.s32.totalorder %s12, 3
    %p213 = pnand %p211, %p212
    %p214 = pneg %p213
    // Predicated region
    $region41: #{bottleneck_forward.1} parent=5 // pred_check
      _
    $region42: #{bottleneck_forward.1} parent=5 // pred_check_branch
      %216 = sbr.rel (%p213) target = $region44
    $region43: #{bottleneck_forward.1} parent=5 // pred_region
      %s217 = ssub.s32 %s12, 1
      %p218 = scmp.lt.s32.totalorder %s17, 1
      %s219 = scalar_select %p218, %s17, 1
      %s220 = smul.addr %s219, 32
      %s221 = smul.addr %s220, 4
      %s222 = scalar_lea.vmem %s0, %s221
      %p223 = pneg %p38
      %p224 = pneg %p35
      %p225 = pneg %p59
      %p226 = pneg %p56
      %p227 = pneg %p80
      %p228 = pneg %p77
      %p229 = pneg %p101
      %p230 = pneg %p98
      %p231 = pneg %p122
      %p232 = pneg %p119
      %p233 = pneg %p143
      %p234 = pneg %p140
      %p235 = pneg %p169
      %p236 = pneg %p166
      %p237 = scmp.lt.s32.totalorder %s17, 1
      %s238 = scalar_select %p237, %s17, 1
      %s239 = smul.addr %s238, 32
      %s240 = smul.addr %s239, 4
      %s241 = scalar_lea.vmem %s6, %s240
      %p242 = scmp.lt.s32.totalorder %s17, 1
      %s243 = scalar_select %p242, %s17, 1
      %s244 = smul.addr %s243, 32
      %s245 = smul.addr %s244, 4
      %s246 = scalar_lea.vmem %s0, %s245
      %p247 = scmp.lt.s32.totalorder %s17, 1
      %s248 = scalar_select %p247, %s17, 1
      %s249 = smul.addr %s248, 32
      %s250 = smul.addr %s249, 4
      %s251 = scalar_lea.vmem %s6, %s250
      %v253 = vld [vmem:[%s246] sm:$0xf]
      %v254 = vld [vmem:[%s246 + $0x4] sm:$0xf]
      %v255 = vld [vmem:[%s246 + $0x8] sm:$0xf]
      %v256 = vld [vmem:[%s246 + $0xc] sm:$0xf]
      %v257 = vld [vmem:[%s246 + $0x10] sm:$0xf]
      %v258 = vld [vmem:[%s246 + $0x14] sm:$0xf]
      %v259 = vld [vmem:[%s246 + $0x18] sm:$0xf]
      %v260 = vld [vmem:[%s246 + $0x1c] sm:$0xf]
      %v261 = vld [vmem:[%s246 + $0x20] sm:$0xf]
      %v262 = vld [vmem:[%s246 + $0x24] sm:$0xf]
      %v263 = vld [vmem:[%s246 + $0x28] sm:$0xf]
      %v264 = vld [vmem:[%s246 + $0x2c] sm:$0xf]
      %v265 = vld [vmem:[%s246 + $0x30] sm:$0xf]
      %v266 = vld [vmem:[%s246 + $0x34] sm:$0xf]
      %v267 = vld [vmem:[%s246 + $0x38] sm:$0xf]
      %v268 = vld [vmem:[%s246 + $0x3c] sm:$0xf]
      %v269 = vld [vmem:[%s246 + $0x40] sm:$0xf]
      %v270 = vld [vmem:[%s246 + $0x44] sm:$0xf]
      %v271 = vld [vmem:[%s246 + $0x48] sm:$0xf]
      %v272 = vld [vmem:[%s246 + $0x4c] sm:$0xf]
      %v273 = vld [vmem:[%s246 + $0x50] sm:$0xf]
      %v274 = vld [vmem:[%s246 + $0x54] sm:$0xf]
      %v275 = vld [vmem:[%s246 + $0x58] sm:$0xf]
      %v276 = vld [vmem:[%s246 + $0x5c] sm:$0xf]
      %v277 = vld [vmem:[%s246 + $0x60] sm:$0xf]
      %v278 = vld [vmem:[%s246 + $0x64] sm:$0xf]
      %v279 = vld [vmem:[%s246 + $0x68] sm:$0xf]
      %v280 = vld [vmem:[%s246 + $0x6c] sm:$0xf]
      %v281 = vld [vmem:[%s246 + $0x70] sm:$0xf]
      %v282 = vld [vmem:[%s246 + $0x74] sm:$0xf]
      %v283 = vld [vmem:[%s246 + $0x78] sm:$0xf]
      %v284 = vld [vmem:[%s246 + $0x7c] sm:$0xf]
      %v285 = vld [vmem:[%s1] sm:$0xf]
      %v286 = vld [vmem:[%s1 + $0x4] sm:$0xf]
      %v287 = vld [vmem:[%s1 + $0x8] sm:$0xf]
      %v288 = vld [vmem:[%s1 + $0xc] sm:$0xf]
      %v289 = vld [vmem:[%s1 + $0x10] sm:$0xf]
      %v290 = vld [vmem:[%s1 + $0x14] sm:$0xf]
      %v291 = vld [vmem:[%s1 + $0x18] sm:$0xf]
      %v292 = vld [vmem:[%s1 + $0x1c] sm:$0xf]
      %v293 = vld [vmem:[%s1 + $0x20] sm:$0xf]
      %v294 = vld [vmem:[%s1 + $0x24] sm:$0xf]
      %v295 = vld [vmem:[%s1 + $0x28] sm:$0xf]
      %v296 = vld [vmem:[%s1 + $0x2c] sm:$0xf]
      %v297 = vld [vmem:[%s1 + $0x30] sm:$0xf]
      %v298 = vld [vmem:[%s1 + $0x34] sm:$0xf]
      %v299 = vld [vmem:[%s1 + $0x38] sm:$0xf]
      %v300 = vld [vmem:[%s1 + $0x3c] sm:$0xf]
      %v301 = vld [vmem:[%s4] sm:$0x1]
      %v302 = vlaneseq
      %v303 = vshrl.u32 %v302, 7
      %v304 = vsub.s32 0, %v303
      %v305 = vrot.slane %v301, %v304
      %v338 = vunpack.c.l.b16 %v253
      %v339 = vunpack.c.l.b16 %v254
      %v340 = vunpack.c.l.b16 %v255
      %v341 = vunpack.c.l.b16 %v256
      %v342 = vunpack.c.l.b16 %v257
      %v343 = vunpack.c.l.b16 %v258
      %v344 = vunpack.c.l.b16 %v259
      %v345 = vunpack.c.l.b16 %v260
      %v346 = vunpack.c.l.b16 %v261
      %v347 = vunpack.c.l.b16 %v262
      %v348 = vunpack.c.l.b16 %v263
      %v349 = vunpack.c.l.b16 %v264
      %v350 = vunpack.c.l.b16 %v265
      %v351 = vunpack.c.l.b16 %v266
      %v352 = vunpack.c.l.b16 %v267
      %v353 = vunpack.c.l.b16 %v268
      %v354 = vunpack.c.l.b16 %v269
      %v355 = vunpack.c.l.b16 %v270
      %v356 = vunpack.c.l.b16 %v271
      %v357 = vunpack.c.l.b16 %v272
      %v358 = vunpack.c.l.b16 %v273
      %v359 = vunpack.c.l.b16 %v274
      %v360 = vunpack.c.l.b16 %v275
      %v361 = vunpack.c.l.b16 %v276
      %v362 = vunpack.c.l.b16 %v277
      %v363 = vunpack.c.l.b16 %v278
      %v364 = vunpack.c.l.b16 %v279
      %v365 = vunpack.c.l.b16 %v280
      %v366 = vunpack.c.l.b16 %v281
      %v367 = vunpack.c.l.b16 %v282
      %v368 = vunpack.c.l.b16 %v283
      %v369 = vunpack.c.l.b16 %v284
      %v370 = vpack.c.b16 %v339, %v338
      %v371 = vpack.c.b16 %v341, %v340
      %v372 = vpack.c.b16 %v343, %v342
      %v373 = vpack.c.b16 %v345, %v344
      %v374 = vpack.c.b16 %v347, %v346
      %v375 = vpack.c.b16 %v349, %v348
      %v376 = vpack.c.b16 %v351, %v350
      %v377 = vpack.c.b16 %v353, %v352
      %v378 = vpack.c.b16 %v355, %v354
      %v379 = vpack.c.b16 %v357, %v356
      %v380 = vpack.c.b16 %v359, %v358
      %v381 = vpack.c.b16 %v361, %v360
      %v382 = vpack.c.b16 %v363, %v362
      %v383 = vpack.c.b16 %v365, %v364
      %v384 = vpack.c.b16 %v367, %v366
      %v385 = vpack.c.b16 %v369, %v368
      %v418 = vunpack.c.l.b16 %v285
      %v419 = vunpack.c.l.b16 %v286
      %v420 = vunpack.c.l.b16 %v287
      %v421 = vunpack.c.l.b16 %v288
      %v422 = vunpack.c.l.b16 %v289
      %v423 = vunpack.c.l.b16 %v290
      %v424 = vunpack.c.l.b16 %v291
      %v425 = vunpack.c.l.b16 %v292
      %v426 = vunpack.c.l.b16 %v293
      %v427 = vunpack.c.l.b16 %v294
      %v428 = vunpack.c.l.b16 %v295
      %v429 = vunpack.c.l.b16 %v296
      %v430 = vunpack.c.l.b16 %v297
      %v431 = vunpack.c.l.b16 %v298
      %v432 = vunpack.c.l.b16 %v299
      %v433 = vunpack.c.l.b16 %v300
      %v434 = vpack.c.b16 %v419, %v418
      %v435 = vpack.c.b16 %v421, %v420
      %v436 = vpack.c.b16 %v423, %v422
      %v437 = vpack.c.b16 %v425, %v424
      %v438 = vpack.c.b16 %v427, %v426
      %v439 = vpack.c.b16 %v429, %v428
      %v440 = vpack.c.b16 %v431, %v430
      %v441 = vpack.c.b16 %v433, %v432
      %450 = vmatprep.subr.bf16.mxu0 0
      %451 = vmatpush1.bf16.msra.mxu0 %v434
      %452 = vmatprep.subr.bf16.mxu0 0
      %453 = vmatpush1.bf16.msra.mxu0 %v435
      %454 = vmatprep.subr.bf16.mxu0 0
      %455 = vmatpush1.bf16.msra.mxu0 %v436
      %456 = vmatprep.subr.bf16.mxu0 0
      %457 = vmatpush1.bf16.msra.mxu0 %v437
      %458 = vmatprep.subr.bf16.mxu0 0
      %459 = vmatpush1.bf16.msra.mxu0 %v438
      %460 = vmatprep.subr.bf16.mxu0 0
      %461 = vmatpush1.bf16.msra.mxu0 %v439
      %462 = vmatprep.subr.bf16.mxu0 0
      %463 = vmatpush1.bf16.msra.mxu0 %v440
      %464 = vmatprep.subr.bf16.mxu0 0
      %465 = vmatpush1.bf16.msra.mxu0 %v441
      %466 = vmatprep.subr.bf16.mxu0 0
      %467 = vmatpush1.bf16.msra.mxu0 0
      %468 = vmatprep.subr.bf16.mxu0 0
      %469 = vmatpush1.bf16.msra.mxu0 0
      %470 = vmatprep.subr.bf16.mxu0 0
      %471 = vmatpush1.bf16.msra.mxu0 0
      %472 = vmatprep.subr.bf16.mxu0 0
      %473 = vmatpush1.bf16.msra.mxu0 0
      %474 = vmatprep.subr.bf16.mxu0 0
      %475 = vmatpush1.bf16.msra.mxu0 0
      %476 = vmatprep.subr.bf16.mxu0 0
      %477 = vmatpush1.bf16.msra.mxu0 0
      %478 = vmatprep.subr.bf16.mxu0 0
      %479 = vmatpush1.bf16.msra.mxu0 0
      %480 = vmatprep.subr.bf16.mxu0 0
      %481 = vmatpush1.bf16.msra.mxu0 0
      %482 = vmatprep.mubr.bf16.mxu0 0
      %483 = vmatmul.mubr.bf16.gmra.mrb[0].mxu0 %v370
      %v484 = vpop.f32.mrb[0].mxu0
      %v485 = vadd.f32 %v305, %v484
      %v486 = vpop.f32.mrb[0].mxu0
      %v487 = vpop.f32.mrb[0].mxu0
      %v488 = vadd.f32 %v305, %v487
      %v489 = vpop.f32.mrb[0].mxu0
      %490 = vmatprep.mubr.bf16.mxu0 0
      %491 = vmatmul.mubr.bf16.gmra.mrb[0].mxu0 %v371
      %v492 = vpop.f32.mrb[0].mxu0
      %v493 = vadd.f32 %v305, %v492
      %v494 = vpop.f32.mrb[0].mxu0
      %v495 = vpop.f32.mrb[0].mxu0
      %v496 = vadd.f32 %v305, %v495
      %v497 = vpop.f32.mrb[0].mxu0
      %498 = vmatprep.mubr.bf16.mxu0 0
      %499 = vmatmul.mubr.bf16.gmra.mrb[0].mxu0 %v372
      %v500 = vpop.f32.mrb[0].mxu0
      %v501 = vadd.f32 %v305, %v500
      %v502 = vpop.f32.mrb[0].mxu0
      %v503 = vpop.f32.mrb[0].mxu0
      %v504 = vadd.f32 %v305, %v503
      %v505 = vpop.f32.mrb[0].mxu0
      %506 = vmatprep.mubr.bf16.mxu0 0
      %507 = vmatmul.mubr.bf16.gmra.mrb[0].mxu0 %v373
      %v508 = vpop.f32.mrb[0].mxu0
      %v509 = vadd.f32 %v305, %v508
      %v510 = vpop.f32.mrb[0].mxu0
      %v511 = vpop.f32.mrb[0].mxu0
      %v512 = vadd.f32 %v305, %v511
      %v513 = vpop.f32.mrb[0].mxu0
      %514 = vmatprep.mubr.bf16.mxu0 0
      %515 = vmatmul.mubr.bf16.gmra.mrb[0].mxu0 %v374
      %v516 = vpop.f32.mrb[0].mxu0
      %v517 = vadd.f32 %v305, %v516
      %v518 = vpop.f32.mrb[0].mxu0
      %v519 = vpop.f32.mrb[0].mxu0
      %v520 = vadd.f32 %v305, %v519
      %v521 = vpop.f32.mrb[0].mxu0
      %522 = vmatprep.mubr.bf16.mxu0 0
      %523 = vmatmul.mubr.bf16.gmra.mrb[0].mxu0 %v375
      %v524 = vpop.f32.mrb[0].mxu0
      %v525 = vadd.f32 %v305, %v524
      %v526 = vpop.f32.mrb[0].mxu0
      %v527 = vpop.f32.mrb[0].mxu0
      %v528 = vadd.f32 %v305, %v527
      %v529 = vpop.f32.mrb[0].mxu0
      %530 = vmatprep.mubr.bf16.mxu0 0
      %531 = vmatmul.mubr.bf16.gmra.mrb[0].mxu0 %v376
      %v532 = vpop.f32.mrb[0].mxu0
      %v533 = vadd.f32 %v305, %v532
      %v534 = vpop.f32.mrb[0].mxu0
      %v535 = vpop.f32.mrb[0].mxu0
      %v536 = vadd.f32 %v305, %v535
      %v537 = vpop.f32.mrb[0].mxu0
      %538 = vmatprep.mubr.bf16.mxu0 0
      %539 = vmatmul.mubr.bf16.gmra.mrb[0].mxu0 %v377
      %v540 = vpop.f32.mrb[0].mxu0
      %v541 = vadd.f32 %v305, %v540
      %v542 = vpop.f32.mrb[0].mxu0
      %v543 = vpop.f32.mrb[0].mxu0
      %v544 = vadd.f32 %v305, %v543
      %v545 = vpop.f32.mrb[0].mxu0
      %546 = vmatprep.mubr.bf16.mxu0 0
      %547 = vmatmul.mubr.bf16.gmra.mrb[0].mxu0 %v378
      %v548 = vpop.f32.mrb[0].mxu0
      %v549 = vadd.f32 %v305, %v548
      %v550 = vpop.f32.mrb[0].mxu0
      %v551 = vpop.f32.mrb[0].mxu0
      %v552 = vadd.f32 %v305, %v551
      %v553 = vpop.f32.mrb[0].mxu0
      %554 = vmatprep.mubr.bf16.mxu0 0
      %555 = vmatmul.mubr.bf16.gmra.mrb[0].mxu0 %v379
      %v556 = vpop.f32.mrb[0].mxu0
      %v557 = vadd.f32 %v305, %v556
      %v558 = vpop.f32.mrb[0].mxu0
      %v559 = vpop.f32.mrb[0].mxu0
      %v560 = vadd.f32 %v305, %v559
      %v561 = vpop.f32.mrb[0].mxu0
      %562 = vmatprep.mubr.bf16.mxu0 0
      %563 = vmatmul.mubr.bf16.gmra.mrb[0].mxu0 %v380
      %v564 = vpop.f32.mrb[0].mxu0
      %v565 = vadd.f32 %v305, %v564
      %v566 = vpop.f32.mrb[0].mxu0
      %v567 = vpop.f32.mrb[0].mxu0
      %v568 = vadd.f32 %v305, %v567
      %v569 = vpop.f32.mrb[0].mxu0
      %570 = vmatprep.mubr.bf16.mxu0 0
      %571 = vmatmul.mubr.bf16.gmra.mrb[0].mxu0 %v381
      %v572 = vpop.f32.mrb[0].mxu0
      %v573 = vadd.f32 %v305, %v572
      %v574 = vpop.f32.mrb[0].mxu0
      %v575 = vpop.f32.mrb[0].mxu0
      %v576 = vadd.f32 %v305, %v575
      %v577 = vpop.f32.mrb[0].mxu0
      %578 = vmatprep.mubr.bf16.mxu0 0
      %579 = vmatmul.mubr.bf16.gmra.mrb[0].mxu0 %v382
      %v580 = vpop.f32.mrb[0].mxu0
      %v581 = vadd.f32 %v305, %v580
      %v582 = vpop.f32.mrb[0].mxu0
      %v583 = vpop.f32.mrb[0].mxu0
      %v584 = vadd.f32 %v305, %v583
      %v585 = vpop.f32.mrb[0].mxu0
      %586 = vmatprep.mubr.bf16.mxu0 0
      %587 = vmatmul.mubr.bf16.gmra.mrb[0].mxu0 %v383
      %v588 = vpop.f32.mrb[0].mxu0
      %v589 = vadd.f32 %v305, %v588
      %v590 = vpop.f32.mrb[0].mxu0
      %v591 = vpop.f32.mrb[0].mxu0
      %v592 = vadd.f32 %v305, %v591
      %v593 = vpop.f32.mrb[0].mxu0
      %594 = vmatprep.mubr.bf16.mxu0 0
      %595 = vmatmul.mubr.bf16.gmra.mrb[0].mxu0 %v384
      %v596 = vpop.f32.mrb[0].mxu0
      %v597 = vadd.f32 %v305, %v596
      %v598 = vpop.f32.mrb[0].mxu0
      %v599 = vpop.f32.mrb[0].mxu0
      %v600 = vadd.f32 %v305, %v599
      %v601 = vpop.f32.mrb[0].mxu0
      %602 = vmatprep.mubr.bf16.mxu0 0
      %603 = vmatmul.mubr.bf16.gmra.mrb[0].mxu0 %v385
      %v604 = vpop.f32.mrb[0].mxu0
      %v605 = vadd.f32 %v305, %v604
      %v606 = vpop.f32.mrb[0].mxu0
      %v607 = vpop.f32.mrb[0].mxu0
      %v608 = vadd.f32 %v305, %v607
      %v609 = vpop.f32.mrb[0].mxu0
      %610 = vdwg.mxu0
      %v611 = vmax.f32 %v485, 0.0
      %v612 = vmax.f32 %v488, 0.0
      %v613 = vmax.f32 %v493, 0.0
      %v614 = vmax.f32 %v496, 0.0
      %v615 = vmax.f32 %v501, 0.0
      %v616 = vmax.f32 %v504, 0.0
      %v617 = vmax.f32 %v509, 0.0
      %v618 = vmax.f32 %v512, 0.0
      %v619 = vmax.f32 %v517, 0.0
      %v620 = vmax.f32 %v520, 0.0
      %v621 = vmax.f32 %v525, 0.0
      %v622 = vmax.f32 %v528, 0.0
      %v623 = vmax.f32 %v533, 0.0
      %v624 = vmax.f32 %v536, 0.0
      %v625 = vmax.f32 %v541, 0.0
      %v626 = vmax.f32 %v544, 0.0
      %v627 = vmax.f32 %v549, 0.0
      %v628 = vmax.f32 %v552, 0.0
      %v629 = vmax.f32 %v557, 0.0
      %v630 = vmax.f32 %v560, 0.0
      %v631 = vmax.f32 %v565, 0.0
      %v632 = vmax.f32 %v568, 0.0
      %v633 = vmax.f32 %v573, 0.0
      %v634 = vmax.f32 %v576, 0.0
      %v635 = vmax.f32 %v581, 0.0
      %v636 = vmax.f32 %v584, 0.0
      %v637 = vmax.f32 %v589, 0.0
      %v638 = vmax.f32 %v592, 0.0
      %v639 = vmax.f32 %v597, 0.0
      %v640 = vmax.f32 %v600, 0.0
      %v641 = vmax.f32 %v605, 0.0
      %v642 = vmax.f32 %v608, 0.0
      %v643 = vpack.c.bf16 %v612, %v611
      %v644 = vpack.c.bf16 %v614, %v613
      %v645 = vpack.c.bf16 %v616, %v615
      %v646 = vpack.c.bf16 %v618, %v617
      %v647 = vpack.c.bf16 %v620, %v619
      %v648 = vpack.c.bf16 %v622, %v621
      %v649 = vpack.c.bf16 %v624, %v623
      %v650 = vpack.c.bf16 %v626, %v625
      %v651 = vpack.c.bf16 %v628, %v627
      %v652 = vpack.c.bf16 %v630, %v629
      %v653 = vpack.c.bf16 %v632, %v631
      %v654 = vpack.c.bf16 %v634, %v633
      %v655 = vpack.c.bf16 %v636, %v635
      %v656 = vpack.c.bf16 %v638, %v637
      %v657 = vpack.c.bf16 %v640, %v639
      %v658 = vpack.c.bf16 %v642, %v641
      %vm659 = vcmask 257024
      %660 = vst.msk [vmem:[#allocation2] sm:$0xf] %vm659, 0
      %661 = vst.msk [vmem:[#allocation2 + $0x4] sm:$0xf] %vm659, 0
      %vm662 = vcmask 253952
      %663 = vst.msk [vmem:[#allocation2 + $0x8] sm:$0x1] %vm662, 0
      %s664 = scalar_lea.vmem [#allocation2], 204
      %665 = vst.msk [vmem:[%s664] sm:$0xf] %vm659, 0
      %666 = vst.msk [vmem:[%s664 + $0x4] sm:$0xf] %vm659, 0
      %667 = vst.msk [vmem:[%s664 + $0x8] sm:$0x1] %vm662, 0
      %vm668 = vcmask 253952
      %vm669 = vsmask.f32 256
      %vm670 = vmand %vm668, %vm669
      %v671 = vld [vmem:[#allocation2] sm:$0x1]
      %v672 = vsel %vm670, 0, %v671
      %673 = vst [vmem:[#allocation2] sm:$0x1] %v672
      %v674 = vld [vmem:[#allocation2 + $0xc] sm:$0x1]
      %v675 = vsel %vm670, 0, %v674
      %676 = vst [vmem:[#allocation2 + $0xc] sm:$0x1] %v675
      %v677 = vld [vmem:[#allocation2 + $0x18] sm:$0x1]
      %v678 = vsel %vm670, 0, %v677
      %679 = vst [vmem:[#allocation2 + $0x18] sm:$0x1] %v678
      %v680 = vld [vmem:[#allocation2 + $0x24] sm:$0x1]
      %v681 = vsel %vm670, 0, %v680
      %682 = vst [vmem:[#allocation2 + $0x24] sm:$0x1] %v681
      %v683 = vld [vmem:[#allocation2 + $0x30] sm:$0x1]
      %v684 = vsel %vm670, 0, %v683
      %685 = vst [vmem:[#allocation2 + $0x30] sm:$0x1] %v684
      %v686 = vld [vmem:[#allocation2 + $0x3c] sm:$0x1]
      %v687 = vsel %vm670, 0, %v686
      %688 = vst [vmem:[#allocation2 + $0x3c] sm:$0x1] %v687
      %v689 = vld [vmem:[#allocation2 + $0x48] sm:$0x1]
      %v690 = vsel %vm670, 0, %v689
      %691 = vst [vmem:[#allocation2 + $0x48] sm:$0x1] %v690
      %v692 = vld [vmem:[#allocation2 + $0x54] sm:$0x1]
      %v693 = vsel %vm670, 0, %v692
      %694 = vst [vmem:[#allocation2 + $0x54] sm:$0x1] %v693
      %v695 = vld [vmem:[#allocation2 + $0x60] sm:$0x1]
      %v696 = vsel %vm670, 0, %v695
      %697 = vst [vmem:[#allocation2 + $0x60] sm:$0x1] %v696
      %v698 = vld [vmem:[#allocation2 + $0x6c] sm:$0x1]
      %v699 = vsel %vm670, 0, %v698
      %700 = vst [vmem:[#allocation2 + $0x6c] sm:$0x1] %v699
      %v701 = vld [vmem:[#allocation2 + $0x78] sm:$0x1]
      %v702 = vsel %vm670, 0, %v701
      %703 = vst [vmem:[#allocation2 + $0x78] sm:$0x1] %v702
      %v704 = vld [vmem:[#allocation2 + $0x84] sm:$0x1]
      %v705 = vsel %vm670, 0, %v704
      %706 = vst [vmem:[#allocation2 + $0x84] sm:$0x1] %v705
      %v707 = vld [vmem:[#allocation2 + $0x90] sm:$0x1]
      %v708 = vsel %vm670, 0, %v707
      %709 = vst [vmem:[#allocation2 + $0x90] sm:$0x1] %v708
      %v710 = vld [vmem:[#allocation2 + $0x9c] sm:$0x1]
      %v711 = vsel %vm670, 0, %v710
      %712 = vst [vmem:[#allocation2 + $0x9c] sm:$0x1] %v711
      %v713 = vld [vmem:[#allocation2 + $0xa8] sm:$0x1]
      %v714 = vsel %vm670, 0, %v713
      %715 = vst [vmem:[#allocation2 + $0xa8] sm:$0x1] %v714
      %v716 = vld [vmem:[#allocation2 + $0xb4] sm:$0x1]
      %v717 = vsel %vm670, 0, %v716
      %718 = vst [vmem:[#allocation2 + $0xb4] sm:$0x1] %v717
      %v719 = vld [vmem:[#allocation2 + $0xc0] sm:$0x1]
      %v720 = vsel %vm670, 0, %v719
      %721 = vst [vmem:[#allocation2 + $0xc0] sm:$0x1] %v720
      %v722 = vld [vmem:[#allocation2 + $0xcc] sm:$0x1]
      %v723 = vsel %vm670, 0, %v722
      %724 = vst [vmem:[#allocation2 + $0xcc] sm:$0x1] %v723
      %vm725 = vsmask.f32 7938
      %vm726 = vmand %vm668, %vm725
      %v727 = vld [vmem:[#allocation2 + $0x8] sm:$0x1]
      %v728 = vsel %vm726, 0, %v727
      %729 = vst [vmem:[#allocation2 + $0x8] sm:$0x1] %v728
      %v730 = vld [vmem:[#allocation2 + $0x14] sm:$0x1]
      %v731 = vsel %vm726, 0, %v730
      %732 = vst [vmem:[#allocation2 + $0x14] sm:$0x1] %v731
      %v733 = vld [vmem:[#allocation2 + $0x20] sm:$0x1]
      %v734 = vsel %vm726, 0, %v733
      %735 = vst [vmem:[#allocation2 + $0x20] sm:$0x1] %v734
      %v736 = vld [vmem:[#allocation2 + $0x2c] sm:$0x1]
      %v737 = vsel %vm726, 0, %v736
      %738 = vst [vmem:[#allocation2 + $0x2c] sm:$0x1] %v737
      %v739 = vld [vmem:[#allocation2 + $0x38] sm:$0x1]
      %v740 = vsel %vm726, 0, %v739
      %741 = vst [vmem:[#allocation2 + $0x38] sm:$0x1] %v740
      %v742 = vld [vmem:[#allocation2 + $0x44] sm:$0x1]
      %v743 = vsel %vm726, 0, %v742
      %744 = vst [vmem:[#allocation2 + $0x44] sm:$0x1] %v743
      %v745 = vld [vmem:[#allocation2 + $0x50] sm:$0x1]
      %v746 = vsel %vm726, 0, %v745
      %747 = vst [vmem:[#allocation2 + $0x50] sm:$0x1] %v746
      %v748 = vld [vmem:[#allocation2 + $0x5c] sm:$0x1]
      %v749 = vsel %vm726, 0, %v748
      %750 = vst [vmem:[#allocation2 + $0x5c] sm:$0x1] %v749
      %v751 = vld [vmem:[#allocation2 + $0x68] sm:$0x1]
      %v752 = vsel %vm726, 0, %v751
      %753 = vst [vmem:[#allocation2 + $0x68] sm:$0x1] %v752
      %v754 = vld [vmem:[#allocation2 + $0x74] sm:$0x1]
      %v755 = vsel %vm726, 0, %v754
      %756 = vst [vmem:[#allocation2 + $0x74] sm:$0x1] %v755
      %v757 = vld [vmem:[#allocation2 + $0x80] sm:$0x1]
      %v758 = vsel %vm726, 0, %v757
      %759 = vst [vmem:[#allocation2 + $0x80] sm:$0x1] %v758
      %v760 = vld [vmem:[#allocation2 + $0x8c] sm:$0x1]
      %v761 = vsel %vm726, 0, %v760
      %762 = vst [vmem:[#allocation2 + $0x8c] sm:$0x1] %v761
      %v763 = vld [vmem:[#allocation2 + $0x98] sm:$0x1]
      %v764 = vsel %vm726, 0, %v763
      %765 = vst [vmem:[#allocation2 + $0x98] sm:$0x1] %v764
      %v766 = vld [vmem:[#allocation2 + $0xa4] sm:$0x1]
      %v767 = vsel %vm726, 0, %v766
      %768 = vst [vmem:[#allocation2 + $0xa4] sm:$0x1] %v767
      %v769 = vld [vmem:[#allocation2 + $0xb0] sm:$0x1]
      %v770 = vsel %vm726, 0, %v769
      %771 = vst [vmem:[#allocation2 + $0xb0] sm:$0x1] %v770
      %v772 = vld [vmem:[#allocation2 + $0xbc] sm:$0x1]
      %v773 = vsel %vm726, 0, %v772
      %774 = vst [vmem:[#allocation2 + $0xbc] sm:$0x1] %v773
      %v775 = vld [vmem:[#allocation2 + $0xc8] sm:$0x1]
      %v776 = vsel %vm726, 0, %v775
      %777 = vst [vmem:[#allocation2 + $0xc8] sm:$0x1] %v776
      %v778 = vld [vmem:[#allocation2 + $0xd4] sm:$0x1]
      %v779 = vsel %vm726, 0, %v778
      %780 = vst [vmem:[#allocation2 + $0xd4] sm:$0x1] %v779
      %v797 = vunpack.c.l.b16 %v643
      %v798 = vunpack.c.h.b16 %v643
      %v799 = vunpack.c.l.b16 %v644
      %v800 = vunpack.c.h.b16 %v644
      %v801 = vunpack.c.l.b16 %v645
      %v802 = vunpack.c.h.b16 %v645
      %v803 = vunpack.c.l.b16 %v646
      %v804 = vunpack.c.h.b16 %v646
      %v805 = vunpack.c.l.b16 %v647
      %v806 = vunpack.c.h.b16 %v647
      %v807 = vunpack.c.l.b16 %v648
      %v808 = vunpack.c.h.b16 %v648
      %v809 = vunpack.c.l.b16 %v649
      %v810 = vunpack.c.h.b16 %v649
      %v811 = vunpack.c.l.b16 %v650
      %v812 = vunpack.c.h.b16 %v650
      %v813 = vunpack.c.l.b16 %v651
      %v814 = vunpack.c.h.b16 %v651
      %v815 = vunpack.c.l.b16 %v652
      %v816 = vunpack.c.h.b16 %v652
      %v817 = vunpack.c.l.b16 %v653
      %v818 = vunpack.c.h.b16 %v653
      %v819 = vunpack.c.l.b16 %v654
      %v820 = vunpack.c.h.b16 %v654
      %v821 = vunpack.c.l.b16 %v655
      %v822 = vunpack.c.h.b16 %v655
      %v823 = vunpack.c.l.b16 %v656
      %v824 = vunpack.c.h.b16 %v656
      %v825 = vunpack.c.l.b16 %v657
      %v826 = vunpack.c.h.b16 %v657
      %v827 = vunpack.c.l.b16 %v658
      %v828 = vunpack.c.h.b16 %v658
      %v829 = vpack.c.b16 %v797, %v797
      %v830 = vpack.c.b16 %v798, %v798
      %v831 = vpack.c.b16 %v799, %v799
      %v832 = vpack.c.b16 %v800, %v800
      %v833 = vpack.c.b16 %v801, %v801
      %v834 = vpack.c.b16 %v802, %v802
      %v835 = vpack.c.b16 %v803, %v803
      %v836 = vpack.c.b16 %v804, %v804
      %v837 = vpack.c.b16 %v805, %v805
      %v838 = vpack.c.b16 %v806, %v806
      %v839 = vpack.c.b16 %v807, %v807
      %v840 = vpack.c.b16 %v808, %v808
      %v841 = vpack.c.b16 %v809, %v809
      %v842 = vpack.c.b16 %v810, %v810
      %v843 = vpack.c.b16 %v811, %v811
      %v844 = vpack.c.b16 %v812, %v812
      %v845 = vpack.c.b16 %v813, %v813
      %v846 = vpack.c.b16 %v814, %v814
      %v847 = vpack.c.b16 %v815, %v815
      %v848 = vpack.c.b16 %v816, %v816
      %v849 = vpack.c.b16 %v817, %v817
      %v850 = vpack.c.b16 %v818, %v818
      %v851 = vpack.c.b16 %v819, %v819
      %v852 = vpack.c.b16 %v820, %v820
      %v853 = vpack.c.b16 %v821, %v821
      %v854 = vpack.c.b16 %v822, %v822
      %v855 = vpack.c.b16 %v823, %v823
      %v856 = vpack.c.b16 %v824, %v824
      %v857 = vpack.c.b16 %v825, %v825
      %v858 = vpack.c.b16 %v826, %v826
      %v859 = vpack.c.b16 %v827, %v827
      %v860 = vpack.c.b16 %v828, %v828
      %vm861 = vsmask.f32 4368
      %vm862 = vmor %vm669, %vm861
      %v864 = vshrl.u32 %v829, 16
      %v866 = vrot.slane %v864, 7
      %v867 = vshll.u32 %v829, 16
      %v869 = vor.u32 %v866, %v867
      %v870 = vrot.slane %v866, 4
      %v872 = vshrl.u32 %v830, 16
      %v874 = vrot.slane %v872, 7
      %v875 = vshll.u32 %v830, 16
      %v877 = vor.u32 %v874, %v875
      %v878 = vsel %vm862, %v870, %v877
      %v879 = vrot.slane %v874, 4
      %v881 = vshrl.u32 %v831, 16
      %v883 = vrot.slane %v881, 7
      %v884 = vshll.u32 %v831, 16
      %v886 = vor.u32 %v883, %v884
      %v887 = vrot.slane %v883, 4
      %v889 = vshrl.u32 %v832, 16
      %v891 = vrot.slane %v889, 7
      %v892 = vshll.u32 %v832, 16
      %v894 = vor.u32 %v891, %v892
      %v895 = vsel %vm862, %v887, %v894
      %v896 = vrot.slane %v891, 4
      %v898 = vshrl.u32 %v833, 16
      %v900 = vrot.slane %v898, 7
      %v901 = vshll.u32 %v833, 16
      %v903 = vor.u32 %v900, %v901
      %v904 = vrot.slane %v900, 4
      %v906 = vshrl.u32 %v834, 16
      %v908 = vrot.slane %v906, 7
      %v909 = vshll.u32 %v834, 16
      %v911 = vor.u32 %v908, %v909
      %v912 = vsel %vm862, %v904, %v911
      %v913 = vrot.slane %v908, 4
      %v915 = vshrl.u32 %v835, 16
      %v917 = vrot.slane %v915, 7
      %v918 = vshll.u32 %v835, 16
      %v920 = vor.u32 %v917, %v918
      %v921 = vrot.slane %v917, 4
      %v923 = vshrl.u32 %v836, 16
      %v925 = vrot.slane %v923, 7
      %v926 = vshll.u32 %v836, 16
      %v928 = vor.u32 %v925, %v926
      %v929 = vsel %vm862, %v921, %v928
      %v930 = vrot.slane %v925, 4
      %v932 = vshrl.u32 %v837, 16
      %v934 = vrot.slane %v932, 7
      %v935 = vshll.u32 %v837, 16
      %v937 = vor.u32 %v934, %v935
      %v938 = vrot.slane %v934, 4
      %v940 = vshrl.u32 %v838, 16
      %v942 = vrot.slane %v940, 7
      %v943 = vshll.u32 %v838, 16
      %v945 = vor.u32 %v942, %v943
      %v946 = vsel %vm862, %v938, %v945
      %v947 = vrot.slane %v942, 4
      %v949 = vshrl.u32 %v839, 16
      %v951 = vrot.slane %v949, 7
      %v952 = vshll.u32 %v839, 16
      %v954 = vor.u32 %v951, %v952
      %v955 = vrot.slane %v951, 4
      %v957 = vshrl.u32 %v840, 16
      %v959 = vrot.slane %v957, 7
      %v960 = vshll.u32 %v840, 16
      %v962 = vor.u32 %v959, %v960
      %v963 = vsel %vm862, %v955, %v962
      %v964 = vrot.slane %v959, 4
      %v966 = vshrl.u32 %v841, 16
      %v968 = vrot.slane %v966, 7
      %v969 = vshll.u32 %v841, 16
      %v971 = vor.u32 %v968, %v969
      %v972 = vrot.slane %v968, 4
      %v974 = vshrl.u32 %v842, 16
      %v976 = vrot.slane %v974, 7
      %v977 = vshll.u32 %v842, 16
      %v979 = vor.u32 %v976, %v977
      %v980 = vsel %vm862, %v972, %v979
      %v981 = vrot.slane %v976, 4
      %v983 = vshrl.u32 %v843, 16
      %v985 = vrot.slane %v983, 7
      %v986 = vshll.u32 %v843, 16
      %v988 = vor.u32 %v985, %v986
      %v989 = vrot.slane %v985, 4
      %v991 = vshrl.u32 %v844, 16
      %v993 = vrot.slane %v991, 7
      %v994 = vshll.u32 %v844, 16
      %v996 = vor.u32 %v993, %v994
      %v997 = vsel %vm862, %v989, %v996
      %v998 = vrot.slane %v993, 4
      %v1000 = vshrl.u32 %v845, 16
      %v1002 = vrot.slane %v1000, 7
      %v1003 = vshll.u32 %v845, 16
      %v1005 = vor.u32 %v1002, %v1003
      %v1006 = vrot.slane %v1002, 4
      %v1008 = vshrl.u32 %v846, 16
      %v1010 = vrot.slane %v1008, 7
      %v1011 = vshll.u32 %v846, 16
      %v1013 = vor.u32 %v1010, %v1011
      %v1014 = vsel %vm862, %v1006, %v1013
      %v1015 = vrot.slane %v1010, 4
      %v1017 = vshrl.u32 %v847, 16
      %v1019 = vrot.slane %v1017, 7
      %v1020 = vshll.u32 %v847, 16
      %v1022 = vor.u32 %v1019, %v1020
      %v1023 = vrot.slane %v1019, 4
      %v1025 = vshrl.u32 %v848, 16
      %v1027 = vrot.slane %v1025, 7
      %v1028 = vshll.u32 %v848, 16
      %v1030 = vor.u32 %v1027, %v1028
      %v1031 = vsel %vm862, %v1023, %v1030
      %v1032 = vrot.slane %v1027, 4
      %v1034 = vshrl.u32 %v849, 16
      %v1036 = vrot.slane %v1034, 7
      %v1037 = vshll.u32 %v849, 16
      %v1039 = vor.u32 %v1036, %v1037
      %v1040 = vrot.slane %v1036, 4
      %v1042 = vshrl.u32 %v850, 16
      %v1044 = vrot.slane %v1042, 7
      %v1045 = vshll.u32 %v850, 16
      %v1047 = vor.u32 %v1044, %v1045
      %v1048 = vsel %vm862, %v1040, %v1047
      %v1049 = vrot.slane %v1044, 4
      %v1051 = vshrl.u32 %v851, 16
      %v1053 = vrot.slane %v1051, 7
      %v1054 = vshll.u32 %v851, 16
      %v1056 = vor.u32 %v1053, %v1054
      %v1057 = vrot.slane %v1053, 4
      %v1059 = vshrl.u32 %v852, 16
      %v1061 = vrot.slane %v1059, 7
      %v1062 = vshll.u32 %v852, 16
      %v1064 = vor.u32 %v1061, %v1062
      %v1065 = vsel %vm862, %v1057, %v1064
      %v1066 = vrot.slane %v1061, 4
      %v1068 = vshrl.u32 %v853, 16
      %v1070 = vrot.slane %v1068, 7
      %v1071 = vshll.u32 %v853, 16
      %v1073 = vor.u32 %v1070, %v1071
      %v1074 = vrot.slane %v1070, 4
      %v1076 = vshrl.u32 %v854, 16
      %v1078 = vrot.slane %v1076, 7
      %v1079 = vshll.u32 %v854, 16
      %v1081 = vor.u32 %v1078, %v1079
      %v1082 = vsel %vm862, %v1074, %v1081
      %v1083 = vrot.slane %v1078, 4
      %v1085 = vshrl.u32 %v855, 16
      %v1087 = vrot.slane %v1085, 7
      %v1088 = vshll.u32 %v855, 16
      %v1090 = vor.u32 %v1087, %v1088
      %v1091 = vrot.slane %v1087, 4
      %v1093 = vshrl.u32 %v856, 16
      %v1095 = vrot.slane %v1093, 7
      %v1096 = vshll.u32 %v856, 16
      %v1098 = vor.u32 %v1095, %v1096
      %v1099 = vsel %vm862, %v1091, %v1098
      %v1100 = vrot.slane %v1095, 4
      %v1102 = vshrl.u32 %v857, 16
      %v1104 = vrot.slane %v1102, 7
      %v1105 = vshll.u32 %v857, 16
      %v1107 = vor.u32 %v1104, %v1105
      %v1108 = vrot.slane %v1104, 4
      %v1110 = vshrl.u32 %v858, 16
      %v1112 = vrot.slane %v1110, 7
      %v1113 = vshll.u32 %v858, 16
      %v1115 = vor.u32 %v1112, %v1113
      %v1116 = vsel %vm862, %v1108, %v1115
      %v1117 = vrot.slane %v1112, 4
      %v1119 = vshrl.u32 %v859, 16
      %v1121 = vrot.slane %v1119, 7
      %v1122 = vshll.u32 %v859, 16
      %v1124 = vor.u32 %v1121, %v1122
      %v1125 = vrot.slane %v1121, 4
      %v1127 = vshrl.u32 %v860, 16
      %v1129 = vrot.slane %v1127, 7
      %v1130 = vshll.u32 %v860, 16
      %v1132 = vor.u32 %v1129, %v1130
      %v1133 = vsel %vm862, %v1125, %v1132
      %v1134 = vrot.slane %v1129, 4
      %s1183 = scalar_lea.vmem [#allocation2], 12
      %vm1184 = vcmask 257024
      %vm1185 = vmand %vm1184, %vm725
      %v1186 = vld [vmem:[%s1183] sm:$0xf]
      %v1187 = vsel %vm1185, %v869, %v1186
      %1188 = vst [vmem:[%s1183] sm:$0xf] %v1187
      %1189 = vst.msk [vmem:[%s1183 + $0x4] sm:$0xf] %vm659, %v878
      %v1190 = vld [vmem:[%s1183 + $0x8] sm:$0x1]
      %v1191 = vsel %vm670, %v879, %v1190
      %1192 = vst [vmem:[%s1183 + $0x8] sm:$0x1] %v1191
      %v1193 = vld [vmem:[%s1183 + $0xc] sm:$0xf]
      %v1194 = vsel %vm1185, %v886, %v1193
      %1195 = vst [vmem:[%s1183 + $0xc] sm:$0xf] %v1194
      %1196 = vst.msk [vmem:[%s1183 + $0x10] sm:$0xf] %vm659, %v895
      %v1197 = vld [vmem:[%s1183 + $0x14] sm:$0x1]
      %v1198 = vsel %vm670, %v896, %v1197
      %1199 = vst [vmem:[%s1183 + $0x14] sm:$0x1] %v1198
      %v1200 = vld [vmem:[%s1183 + $0x18] sm:$0xf]
      %v1201 = vsel %vm1185, %v903, %v1200
      %1202 = vst [vmem:[%s1183 + $0x18] sm:$0xf] %v1201
      %1203 = vst.msk [vmem:[%s1183 + $0x1c] sm:$0xf] %vm659, %v912
      %v1204 = vld [vmem:[%s1183 + $0x20] sm:$0x1]
      %v1205 = vsel %vm670, %v913, %v1204
      %1206 = vst [vmem:[%s1183 + $0x20] sm:$0x1] %v1205
      %v1207 = vld [vmem:[%s1183 + $0x24] sm:$0xf]
      %v1208 = vsel %vm1185, %v920, %v1207
      %1209 = vst [vmem:[%s1183 + $0x24] sm:$0xf] %v1208
      %1210 = vst.msk [vmem:[%s1183 + $0x28] sm:$0xf] %vm659, %v929
      %v1211 = vld [vmem:[%s1183 + $0x2c] sm:$0x1]
      %v1212 = vsel %vm670, %v930, %v1211
      %1213 = vst [vmem:[%s1183 + $0x2c] sm:$0x1] %v1212
      %v1214 = vld [vmem:[%s1183 + $0x30] sm:$0xf]
      %v1215 = vsel %vm1185, %v937, %v1214
      %1216 = vst [vmem:[%s1183 + $0x30] sm:$0xf] %v1215
      %1217 = vst.msk [vmem:[%s1183 + $0x34] sm:$0xf] %vm659, %v946
      %v1218 = vld [vmem:[%s1183 + $0x38] sm:$0x1]
      %v1219 = vsel %vm670, %v947, %v1218
      %1220 = vst [vmem:[%s1183 + $0x38] sm:$0x1] %v1219
      %v1221 = vld [vmem:[%s1183 + $0x3c] sm:$0xf]
      %v1222 = vsel %vm1185, %v954, %v1221
      %1223 = vst [vmem:[%s1183 + $0x3c] sm:$0xf] %v1222
      %1224 = vst.msk [vmem:[%s1183 + $0x40] sm:$0xf] %vm659, %v963
      %v1225 = vld [vmem:[%s1183 + $0x44] sm:$0x1]
      %v1226 = vsel %vm670, %v964, %v1225
      %1227 = vst [vmem:[%s1183 + $0x44] sm:$0x1] %v1226
      %v1228 = vld [vmem:[%s1183 + $0x48] sm:$0xf]
      %v1229 = vsel %vm1185, %v971, %v1228
      %1230 = vst [vmem:[%s1183 + $0x48] sm:$0xf] %v1229
      %1231 = vst.msk [vmem:[%s1183 + $0x4c] sm:$0xf] %vm659, %v980
      %v1232 = vld [vmem:[%s1183 + $0x50] sm:$0x1]
      %v1233 = vsel %vm670, %v981, %v1232
      %1234 = vst [vmem:[%s1183 + $0x50] sm:$0x1] %v1233
      %v1235 = vld [vmem:[%s1183 + $0x54] sm:$0xf]
      %v1236 = vsel %vm1185, %v988, %v1235
      %1237 = vst [vmem:[%s1183 + $0x54] sm:$0xf] %v1236
      %1238 = vst.msk [vmem:[%s1183 + $0x58] sm:$0xf] %vm659, %v997
      %v1239 = vld [vmem:[%s1183 + $0x5c] sm:$0x1]
      %v1240 = vsel %vm670, %v998, %v1239
      %1241 = vst [vmem:[%s1183 + $0x5c] sm:$0x1] %v1240
      %v1242 = vld [vmem:[%s1183 + $0x60] sm:$0xf]
      %v1243 = vsel %vm1185, %v1005, %v1242
      %1244 = vst [vmem:[%s1183 + $0x60] sm:$0xf] %v1243
      %1245 = vst.msk [vmem:[%s1183 + $0x64] sm:$0xf] %vm659, %v1014
      %v1246 = vld [vmem:[%s1183 + $0x68] sm:$0x1]
      %v1247 = vsel %vm670, %v1015, %v1246
      %1248 = vst [vmem:[%s1183 + $0x68] sm:$0x1] %v1247
      %v1249 = vld [vmem:[%s1183 + $0x6c] sm:$0xf]
      %v1250 = vsel %vm1185, %v1022, %v1249
      %1251 = vst [vmem:[%s1183 + $0x6c] sm:$0xf] %v1250
      %1252 = vst.msk [vmem:[%s1183 + $0x70] sm:$0xf] %vm659, %v1031
      %v1253 = vld [vmem:[%s1183 + $0x74] sm:$0x1]
      %v1254 = vsel %vm670, %v1032, %v1253
      %1255 = vst [vmem:[%s1183 + $0x74] sm:$0x1] %v1254
      %v1256 = vld [vmem:[%s1183 + $0x78] sm:$0xf]
      %v1257 = vsel %vm1185, %v1039, %v1256
      %1258 = vst [vmem:[%s1183 + $0x78] sm:$0xf] %v1257
      %1259 = vst.msk [vmem:[%s1183 + $0x7c] sm:$0xf] %vm659, %v1048
      %v1260 = vld [vmem:[%s1183 + $0x80] sm:$0x1]
      %v1261 = vsel %vm670, %v1049, %v1260
      %1262 = vst [vmem:[%s1183 + $0x80] sm:$0x1] %v1261
      %v1263 = vld [vmem:[%s1183 + $0x84] sm:$0xf]
      %v1264 = vsel %vm1185, %v1056, %v1263
      %1265 = vst [vmem:[%s1183 + $0x84] sm:$0xf] %v1264
      %1266 = vst.msk [vmem:[%s1183 + $0x88] sm:$0xf] %vm659, %v1065
      %v1267 = vld [vmem:[%s1183 + $0x8c] sm:$0x1]
      %v1268 = vsel %vm670, %v1066, %v1267
      %1269 = vst [vmem:[%s1183 + $0x8c] sm:$0x1] %v1268
      %v1270 = vld [vmem:[%s1183 + $0x90] sm:$0xf]
      %v1271 = vsel %vm1185, %v1073, %v1270
      %1272 = vst [vmem:[%s1183 + $0x90] sm:$0xf] %v1271
      %1273 = vst.msk [vmem:[%s1183 + $0x94] sm:$0xf] %vm659, %v1082
      %v1274 = vld [vmem:[%s1183 + $0x98] sm:$0x1]
      %v1275 = vsel %vm670, %v1083, %v1274
      %1276 = vst [vmem:[%s1183 + $0x98] sm:$0x1] %v1275
      %v1277 = vld [vmem:[%s1183 + $0x9c] sm:$0xf]
      %v1278 = vsel %vm1185, %v1090, %v1277
      %1279 = vst [vmem:[%s1183 + $0x9c] sm:$0xf] %v1278
      %1280 = vst.msk [vmem:[%s1183 + $0xa0] sm:$0xf] %vm659, %v1099
      %v1281 = vld [vmem:[%s1183 + $0xa4] sm:$0x1]
      %v1282 = vsel %vm670, %v1100, %v1281
      %1283 = vst [vmem:[%s1183 + $0xa4] sm:$0x1] %v1282
      %v1284 = vld [vmem:[%s1183 + $0xa8] sm:$0xf]
      %v1285 = vsel %vm1185, %v1107, %v1284
      %1286 = vst [vmem:[%s1183 + $0xa8] sm:$0xf] %v1285
      %1287 = vst.msk [vmem:[%s1183 + $0xac] sm:$0xf] %vm659, %v1116
      %v1288 = vld [vmem:[%s1183 + $0xb0] sm:$0x1]
      %v1289 = vsel %vm670, %v1117, %v1288
      %1290 = vst [vmem:[%s1183 + $0xb0] sm:$0x1] %v1289
      %v1291 = vld [vmem:[%s1183 + $0xb4] sm:$0xf]
      %v1292 = vsel %vm1185, %v1124, %v1291
      %1293 = vst [vmem:[%s1183 + $0xb4] sm:$0xf] %v1292
      %1294 = vst.msk [vmem:[%s1183 + $0xb8] sm:$0xf] %vm659, %v1133
      %v1295 = vld [vmem:[%s1183 + $0xbc] sm:$0x1]
      %v1296 = vsel %vm670, %v1134, %v1295
      %1297 = vst [vmem:[%s1183 + $0xbc] sm:$0x1] %v1296
      %v1298 = vld [vmem:[#allocation2] sm:$0xf]
      %v1299 = vld [vmem:[#allocation2 + $0x4] sm:$0xf]
      %v1300 = vld [vmem:[#allocation2 + $0xc] sm:$0xf]
      %v1301 = vld [vmem:[#allocation2 + $0x10] sm:$0xf]
      %v1302 = vld [vmem:[#allocation2 + $0x18] sm:$0xf]
      %v1303 = vld [vmem:[#allocation2 + $0x1c] sm:$0xf]
      %v1304 = vld [vmem:[#allocation2 + $0x24] sm:$0xf]
      %v1305 = vld [vmem:[#allocation2 + $0x28] sm:$0xf]
      %v1306 = vld [vmem:[#allocation2 + $0x30] sm:$0xf]
      %v1307 = vld [vmem:[#allocation2 + $0x34] sm:$0xf]
      %v1308 = vld [vmem:[#allocation2 + $0x3c] sm:$0xf]
      %v1309 = vld [vmem:[#allocation2 + $0x40] sm:$0xf]
      %v1310 = vld [vmem:[#allocation2 + $0x48] sm:$0xf]
      %v1311 = vld [vmem:[#allocation2 + $0x4c] sm:$0xf]
      %v1312 = vld [vmem:[#allocation2 + $0x54] sm:$0xf]
      %v1313 = vld [vmem:[#allocation2 + $0x58] sm:$0xf]
      %v1314 = vld [vmem:[#allocation2 + $0x60] sm:$0xf]
      %v1315 = vld [vmem:[#allocation2 + $0x64] sm:$0xf]
      %v1316 = vld [vmem:[#allocation2 + $0x6c] sm:$0xf]
      %v1317 = vld [vmem:[#allocation2 + $0x70] sm:$0xf]
      %v1318 = vld [vmem:[#allocation2 + $0x78] sm:$0xf]
      %v1319 = vld [vmem:[#allocation2 + $0x7c] sm:$0xf]
      %v1320 = vld [vmem:[#allocation2 + $0x84] sm:$0xf]
      %v1321 = vld [vmem:[#allocation2 + $0x88] sm:$0xf]
      %v1322 = vld [vmem:[#allocation2 + $0x90] sm:$0xf]
      %v1323 = vld [vmem:[#allocation2 + $0x94] sm:$0xf]
      %v1324 = vld [vmem:[#allocation2 + $0x9c] sm:$0xf]
      %v1325 = vld [vmem:[#allocation2 + $0xa0] sm:$0xf]
      %v1326 = vld [vmem:[#allocation2 + $0xa8] sm:$0xf]
      %v1327 = vld [vmem:[#allocation2 + $0xac] sm:$0xf]
      %v1328 = vld [vmem:[#allocation2 + $0xb4] sm:$0xf]
      %v1329 = vld [vmem:[#allocation2 + $0xb8] sm:$0xf]
      %v1330 = vld [vmem:[#allocation2 + $0x8] sm:$0x1]
      %v1331 = vld [vmem:[#allocation2 + $0x14] sm:$0x1]
      %v1332 = vld [vmem:[#allocation2 + $0x20] sm:$0x1]
      %v1333 = vld [vmem:[#allocation2 + $0x2c] sm:$0x1]
      %v1334 = vld [vmem:[#allocation2 + $0x38] sm:$0x1]
      %v1335 = vld [vmem:[#allocation2 + $0x44] sm:$0x1]
      %v1336 = vld [vmem:[#allocation2 + $0x50] sm:$0x1]
      %v1337 = vld [vmem:[#allocation2 + $0x5c] sm:$0x1]
      %v1338 = vld [vmem:[#allocation2 + $0x68] sm:$0x1]
      %v1339 = vld [vmem:[#allocation2 + $0x74] sm:$0x1]
      %v1340 = vld [vmem:[#allocation2 + $0x80] sm:$0x1]
      %v1341 = vld [vmem:[#allocation2 + $0x8c] sm:$0x1]
      %v1342 = vld [vmem:[#allocation2 + $0x98] sm:$0x1]
      %v1343 = vld [vmem:[#allocation2 + $0xa4] sm:$0x1]
      %v1344 = vld [vmem:[#allocation2 + $0xb0] sm:$0x1]
      %v1345 = vld [vmem:[#allocation2 + $0xbc] sm:$0x1]
      %v1346 = vld [vmem:[#allocation2] sm:$0xe]
      %v1347 = vld [vmem:[#allocation2 + $0xc] sm:$0xe]
      %v1348 = vld [vmem:[#allocation2 + $0x18] sm:$0xe]
      %v1349 = vld [vmem:[#allocation2 + $0x24] sm:$0xe]
      %v1350 = vld [vmem:[#allocation2 + $0x30] sm:$0xe]
      %v1351 = vld [vmem:[#allocation2 + $0x3c] sm:$0xe]
      %v1352 = vld [vmem:[#allocation2 + $0x48] sm:$0xe]
      %v1353 = vld [vmem:[#allocation2 + $0x54] sm:$0xe]
      %v1354 = vld [vmem:[#allocation2 + $0x60] sm:$0xe]
      %v1355 = vld [vmem:[#allocation2 + $0x6c] sm:$0xe]
      %v1356 = vld [vmem:[#allocation2 + $0x78] sm:$0xe]
      %v1357 = vld [vmem:[#allocation2 + $0x84] sm:$0xe]
      %v1358 = vld [vmem:[#allocation2 + $0x90] sm:$0xe]
      %v1359 = vld [vmem:[#allocation2 + $0x9c] sm:$0xe]
      %v1360 = vld [vmem:[#allocation2 + $0xa8] sm:$0xe]
      %v1361 = vld [vmem:[#allocation2 + $0xb4] sm:$0xe]
      %v1362 = vld [vmem:[%s1183] sm:$0xf]
      %v1363 = vld [vmem:[%s1183 + $0x4] sm:$0xf]
      %v1364 = vld [vmem:[%s1183 + $0xc] sm:$0xf]
      %v1365 = vld [vmem:[%s1183 + $0x10] sm:$0xf]
      %v1366 = vld [vmem:[%s1183 + $0x18] sm:$0xf]
      %v1367 = vld [vmem:[%s1183 + $0x1c] sm:$0xf]
      %v1368 = vld [vmem:[%s1183 + $0x24] sm:$0xf]
      %v1369 = vld [vmem:[%s1183 + $0x28] sm:$0xf]
      %v1370 = vld [vmem:[%s1183 + $0x30] sm:$0xf]
      %v1371 = vld [vmem:[%s1183 + $0x34] sm:$0xf]
      %v1372 = vld [vmem:[%s1183 + $0x3c] sm:$0xf]
      %v1373 = vld [vmem:[%s1183 + $0x40] sm:$0xf]
      %v1374 = vld [vmem:[%s1183 + $0x48] sm:$0xf]
      %v1375 = vld [vmem:[%s1183 + $0x4c] sm:$0xf]
      %v1376 = vld [vmem:[%s1183 + $0x54] sm:$0xf]
      %v1377 = vld [vmem:[%s1183 + $0x58] sm:$0xf]
      %v1378 = vld [vmem:[%s1183 + $0x60] sm:$0xf]
      %v1379 = vld [vmem:[%s1183 + $0x64] sm:$0xf]
      %v1380 = vld [vmem:[%s1183 + $0x6c] sm:$0xf]
      %v1381 = vld [vmem:[%s1183 + $0x70] sm:$0xf]
      %v1382 = vld [vmem:[%s1183 + $0x78] sm:$0xf]
      %v1383 = vld [vmem:[%s1183 + $0x7c] sm:$0xf]
      %v1384 = vld [vmem:[%s1183 + $0x84] sm:$0xf]
      %v1385 = vld [vmem:[%s1183 + $0x88] sm:$0xf]
      %v1386 = vld [vmem:[%s1183 + $0x90] sm:$0xf]
      %v1387 = vld [vmem:[%s1183 + $0x94] sm:$0xf]
      %v1388 = vld [vmem:[%s1183 + $0x9c] sm:$0xf]
      %v1389 = vld [vmem:[%s1183 + $0xa0] sm:$0xf]
      %v1390 = vld [vmem:[%s1183 + $0xa8] sm:$0xf]
      %v1391 = vld [vmem:[%s1183 + $0xac] sm:$0xf]
      %v1392 = vld [vmem:[%s1183 + $0xb4] sm:$0xf]
      %v1393 = vld [vmem:[%s1183 + $0xb8] sm:$0xf]
      %v1394 = vld [vmem:[%s1183 + $0x8] sm:$0x1]
      %v1395 = vld [vmem:[%s1183 + $0x14] sm:$0x1]
      %v1396 = vld [vmem:[%s1183 + $0x20] sm:$0x1]
      %v1397 = vld [vmem:[%s1183 + $0x2c] sm:$0x1]
      %v1398 = vld [vmem:[%s1183 + $0x38] sm:$0x1]
      %v1399 = vld [vmem:[%s1183 + $0x44] sm:$0x1]
      %v1400 = vld [vmem:[%s1183 + $0x50] sm:$0x1]
      %v1401 = vld [vmem:[%s1183 + $0x5c] sm:$0x1]
      %v1402 = vld [vmem:[%s1183 + $0x68] sm:$0x1]
      %v1403 = vld [vmem:[%s1183 + $0x74] sm:$0x1]
      %v1404 = vld [vmem:[%s1183 + $0x80] sm:$0x1]
      %v1405 = vld [vmem:[%s1183 + $0x8c] sm:$0x1]
      %v1406 = vld [vmem:[%s1183 + $0x98] sm:$0x1]
      %v1407 = vld [vmem:[%s1183 + $0xa4] sm:$0x1]
      %v1408 = vld [vmem:[%s1183 + $0xb0] sm:$0x1]
      %v1409 = vld [vmem:[%s1183 + $0xbc] sm:$0x1]
      %v1410 = vld [vmem:[%s1183] sm:$0xe]
      %v1411 = vld [vmem:[%s1183 + $0xc] sm:$0xe]
      %v1412 = vld [vmem:[%s1183 + $0x18] sm:$0xe]
      %v1413 = vld [vmem:[%s1183 + $0x24] sm:$0xe]
      %v1414 = vld [vmem:[%s1183 + $0x30] sm:$0xe]
      %v1415 = vld [vmem:[%s1183 + $0x3c] sm:$0xe]
      %v1416 = vld [vmem:[%s1183 + $0x48] sm:$0xe]
      %v1417 = vld [vmem:[%s1183 + $0x54] sm:$0xe]
      %v1418 = vld [vmem:[%s1183 + $0x60] sm:$0xe]
      %v1419 = vld [vmem:[%s1183 + $0x6c] sm:$0xe]
      %v1420 = vld [vmem:[%s1183 + $0x78] sm:$0xe]
      %v1421 = vld [vmem:[%s1183 + $0x84] sm:$0xe]
      %v1422 = vld [vmem:[%s1183 + $0x90] sm:$0xe]
      %v1423 = vld [vmem:[%s1183 + $0x9c] sm:$0xe]
      %v1424 = vld [vmem:[%s1183 + $0xa8] sm:$0xe]
      %v1425 = vld [vmem:[%s1183 + $0xb4] sm:$0xe]
      %s1426 = scalar_lea.vmem [#allocation2], 24
      %v1427 = vld [vmem:[%s1426] sm:$0xf]
      %v1428 = vld [vmem:[%s1426 + $0x4] sm:$0xf]
      %v1429 = vld [vmem:[%s1426 + $0xc] sm:$0xf]
      %v1430 = vld [vmem:[%s1426 + $0x10] sm:$0xf]
      %v1431 = vld [vmem:[%s1426 + $0x18] sm:$0xf]
      %v1432 = vld [vmem:[%s1426 + $0x1c] sm:$0xf]
      %v1433 = vld [vmem:[%s1426 + $0x24] sm:$0xf]
      %v1434 = vld [vmem:[%s1426 + $0x28] sm:$0xf]
      %v1435 = vld [vmem:[%s1426 + $0x30] sm:$0xf]
      %v1436 = vld [vmem:[%s1426 + $0x34] sm:$0xf]
      %v1437 = vld [vmem:[%s1426 + $0x3c] sm:$0xf]
      %v1438 = vld [vmem:[%s1426 + $0x40] sm:$0xf]
      %v1439 = vld [vmem:[%s1426 + $0x48] sm:$0xf]
      %v1440 = vld [vmem:[%s1426 + $0x4c] sm:$0xf]
      %v1441 = vld [vmem:[%s1426 + $0x54] sm:$0xf]
      %v1442 = vld [vmem:[%s1426 + $0x58] sm:$0xf]
      %v1443 = vld [vmem:[%s1426 + $0x60] sm:$0xf]
      %v1444 = vld [vmem:[%s1426 + $0x64] sm:$0xf]
      %v1445 = vld [vmem:[%s1426 + $0x6c] sm:$0xf]
      %v1446 = vld [vmem:[%s1426 + $0x70] sm:$0xf]
      %v1447 = vld [vmem:[%s1426 + $0x78] sm:$0xf]
      %v1448 = vld [vmem:[%s1426 + $0x7c] sm:$0xf]
      %v1449 = vld [vmem:[%s1426 + $0x84] sm:$0xf]
      %v1450 = vld [vmem:[%s1426 + $0x88] sm:$0xf]
      %v1451 = vld [vmem:[%s1426 + $0x90] sm:$0xf]
      %v1452 = vld [vmem:[%s1426 + $0x94] sm:$0xf]
      %v1453 = vld [vmem:[%s1426 + $0x9c] sm:$0xf]
      %v1454 = vld [vmem:[%s1426 + $0xa0] sm:$0xf]
      %v1455 = vld [vmem:[%s1426 + $0xa8] sm:$0xf]
      %v1456 = vld [vmem:[%s1426 + $0xac] sm:$0xf]
      %v1457 = vld [vmem:[%s1426 + $0xb4] sm:$0xf]
      %v1458 = vld [vmem:[%s1426 + $0xb8] sm:$0xf]
      %v1459 = vld [vmem:[%s1426 + $0x8] sm:$0x1]
      %v1460 = vld [vmem:[%s1426 + $0x14] sm:$0x1]
      %v1461 = vld [vmem:[%s1426 + $0x20] sm:$0x1]
      %v1462 = vld [vmem:[%s1426 + $0x2c] sm:$0x1]
      %v1463 = vld [vmem:[%s1426 + $0x38] sm:$0x1]
      %v1464 = vld [vmem:[%s1426 + $0x44] sm:$0x1]
      %v1465 = vld [vmem:[%s1426 + $0x50] sm:$0x1]
      %v1466 = vld [vmem:[%s1426 + $0x5c] sm:$0x1]
      %v1467 = vld [vmem:[%s1426 + $0x68] sm:$0x1]
      %v1468 = vld [vmem:[%s1426 + $0x74] sm:$0x1]
      %v1469 = vld [vmem:[%s1426 + $0x80] sm:$0x1]
      %v1470 = vld [vmem:[%s1426 + $0x8c] sm:$0x1]
      %v1471 = vld [vmem:[%s1426 + $0x98] sm:$0x1]
      %v1472 = vld [vmem:[%s1426 + $0xa4] sm:$0x1]
      %v1473 = vld [vmem:[%s1426 + $0xb0] sm:$0x1]
      %v1474 = vld [vmem:[%s1426 + $0xbc] sm:$0x1]
      %v1475 = vld [vmem:[%s1426] sm:$0xe]
      %v1476 = vld [vmem:[%s1426 + $0xc] sm:$0xe]
      %v1477 = vld [vmem:[%s1426 + $0x18] sm:$0xe]
      %v1478 = vld [vmem:[%s1426 + $0x24] sm:$0xe]
      %v1479 = vld [vmem:[%s1426 + $0x30] sm:$0xe]
      %v1480 = vld [vmem:[%s1426 + $0x3c] sm:$0xe]
      %v1481 = vld [vmem:[%s1426 + $0x48] sm:$0xe]
      %v1482 = vld [vmem:[%s1426 + $0x54] sm:$0xe]
      %v1483 = vld [vmem:[%s1426 + $0x60] sm:$0xe]
      %v1484 = vld [vmem:[%s1426 + $0x6c] sm:$0xe]
      %v1485 = vld [vmem:[%s1426 + $0x78] sm:$0xe]
      %v1486 = vld [vmem:[%s1426 + $0x84] sm:$0xe]
      %v1487 = vld [vmem:[%s1426 + $0x90] sm:$0xe]
      %v1488 = vld [vmem:[%s1426 + $0x9c] sm:$0xe]
      %v1489 = vld [vmem:[%s1426 + $0xa8] sm:$0xe]
      %v1490 = vld [vmem:[%s1426 + $0xb4] sm:$0xe]
      %v1523 = vunpack.c.l.b16 %v1298
      %v1524 = vunpack.c.l.b16 %v1299
      %v1525 = vunpack.c.l.b16 %v1300
      %v1526 = vunpack.c.l.b16 %v1301
      %v1527 = vunpack.c.l.b16 %v1302
      %v1528 = vunpack.c.l.b16 %v1303
      %v1529 = vunpack.c.l.b16 %v1304
      %v1530 = vunpack.c.l.b16 %v1305
      %v1531 = vunpack.c.l.b16 %v1306
      %v1532 = vunpack.c.l.b16 %v1307
      %v1533 = vunpack.c.l.b16 %v1308
      %v1534 = vunpack.c.l.b16 %v1309
      %v1535 = vunpack.c.l.b16 %v1310
      %v1536 = vunpack.c.l.b16 %v1311
      %v1537 = vunpack.c.l.b16 %v1312
      %v1538 = vunpack.c.l.b16 %v1313
      %v1539 = vunpack.c.l.b16 %v1314
      %v1540 = vunpack.c.l.b16 %v1315
      %v1541 = vunpack.c.l.b16 %v1316
      %v1542 = vunpack.c.l.b16 %v1317
      %v1543 = vunpack.c.l.b16 %v1318
      %v1544 = vunpack.c.l.b16 %v1319
      %v1545 = vunpack.c.l.b16 %v1320
      %v1546 = vunpack.c.l.b16 %v1321
      %v1547 = vunpack.c.l.b16 %v1322
      %v1548 = vunpack.c.l.b16 %v1323
      %v1549 = vunpack.c.l.b16 %v1324
      %v1550 = vunpack.c.l.b16 %v1325
      %v1551 = vunpack.c.l.b16 %v1326
      %v1552 = vunpack.c.l.b16 %v1327
      %v1553 = vunpack.c.l.b16 %v1328
      %v1554 = vunpack.c.l.b16 %v1329
      %v1555 = vpack.c.b16 %v1524, %v1523
      %v1556 = vpack.c.b16 %v1526, %v1525
      %v1557 = vpack.c.b16 %v1528, %v1527
      %v1558 = vpack.c.b16 %v1530, %v1529
      %v1559 = vpack.c.b16 %v1532, %v1531
      %v1560 = vpack.c.b16 %v1534, %v1533
      %v1561 = vpack.c.b16 %v1536, %v1535
      %v1562 = vpack.c.b16 %v1538, %v1537
      %v1563 = vpack.c.b16 %v1540, %v1539
      %v1564 = vpack.c.b16 %v1542, %v1541
      %v1565 = vpack.c.b16 %v1544, %v1543
      %v1566 = vpack.c.b16 %v1546, %v1545
      %v1567 = vpack.c.b16 %v1548, %v1547
      %v1568 = vpack.c.b16 %v1550, %v1549
      %v1569 = vpack.c.b16 %v1552, %v1551
      %v1570 = vpack.c.b16 %v1554, %v1553
      %v1587 = vunpack.c.l.b16 %v1330
      %v1588 = vunpack.c.l.b16 %v1331
      %v1589 = vunpack.c.l.b16 %v1332
      %v1590 = vunpack.c.l.b16 %v1333
      %v1591 = vunpack.c.l.b16 %v1334
      %v1592 = vunpack.c.l.b16 %v1335
      %v1593 = vunpack.c.l.b16 %v1336
      %v1594 = vunpack.c.l.b16 %v1337
      %v1595 = vunpack.c.l.b16 %v1338
      %v1596 = vunpack.c.l.b16 %v1339
      %v1597 = vunpack.c.l.b16 %v1340
      %v1598 = vunpack.c.l.b16 %v1341
      %v1599 = vunpack.c.l.b16 %v1342
      %v1600 = vunpack.c.l.b16 %v1343
      %v1601 = vunpack.c.l.b16 %v1344
      %v1602 = vunpack.c.l.b16 %v1345
      %v1603 = vpack.c.b16 %v1587, %v1587
      %v1604 = vpack.c.b16 %v1588, %v1588
      %v1605 = vpack.c.b16 %v1589, %v1589
      %v1606 = vpack.c.b16 %v1590, %v1590
      %v1607 = vpack.c.b16 %v1591, %v1591
      %v1608 = vpack.c.b16 %v1592, %v1592
      %v1609 = vpack.c.b16 %v1593, %v1593
      %v1610 = vpack.c.b16 %v1594, %v1594
      %v1611 = vpack.c.b16 %v1595, %v1595
      %v1612 = vpack.c.b16 %v1596, %v1596
      %v1613 = vpack.c.b16 %v1597, %v1597
      %v1614 = vpack.c.b16 %v1598, %v1598
      %v1615 = vpack.c.b16 %v1599, %v1599
      %v1616 = vpack.c.b16 %v1600, %v1600
      %v1617 = vpack.c.b16 %v1601, %v1601
      %v1618 = vpack.c.b16 %v1602, %v1602
      %vm1619 = vsmask.f32 7424
      %v1621 = vshrl.u32 %v1555, 16
      %v1623 = vshll.u32 %v1555, 16
      %v1625 = vrot.slane %v1623, 1
      %v1626 = vor.u32 %v1621, %v1625
      %v1628 = vshll.u32 %v1603, 16
      %v1630 = vrot.slane %v1628, 1
      %v1631 = vsel %vm1619, %v1626, %v1630
      %v1633 = vshrl.u32 %v1556, 16
      %v1635 = vshll.u32 %v1556, 16
      %v1637 = vrot.slane %v1635, 1
      %v1638 = vor.u32 %v1633, %v1637
      %v1640 = vshll.u32 %v1604, 16
      %v1642 = vrot.slane %v1640, 1
      %v1643 = vsel %vm1619, %v1638, %v1642
      %v1645 = vshrl.u32 %v1557, 16
      %v1647 = vshll.u32 %v1557, 16
      %v1649 = vrot.slane %v1647, 1
      %v1650 = vor.u32 %v1645, %v1649
      %v1652 = vshll.u32 %v1605, 16
      %v1654 = vrot.slane %v1652, 1
      %v1655 = vsel %vm1619, %v1650, %v1654
      %v1657 = vshrl.u32 %v1558, 16
      %v1659 = vshll.u32 %v1558, 16
      %v1661 = vrot.slane %v1659, 1
      %v1662 = vor.u32 %v1657, %v1661
      %v1664 = vshll.u32 %v1606, 16
      %v1666 = vrot.slane %v1664, 1
      %v1667 = vsel %vm1619, %v1662, %v1666
      %v1669 = vshrl.u32 %v1559, 16
      %v1671 = vshll.u32 %v1559, 16
      %v1673 = vrot.slane %v1671, 1
      %v1674 = vor.u32 %v1669, %v1673
      %v1676 = vshll.u32 %v1607, 16
      %v1678 = vrot.slane %v1676, 1
      %v1679 = vsel %vm1619, %v1674, %v1678
      %v1681 = vshrl.u32 %v1560, 16
      %v1683 = vshll.u32 %v1560, 16
      %v1685 = vrot.slane %v1683, 1
      %v1686 = vor.u32 %v1681, %v1685
      %v1688 = vshll.u32 %v1608, 16
      %v1690 = vrot.slane %v1688, 1
      %v1691 = vsel %vm1619, %v1686, %v1690
      %v1693 = vshrl.u32 %v1561, 16
      %v1695 = vshll.u32 %v1561, 16
      %v1697 = vrot.slane %v1695, 1
      %v1698 = vor.u32 %v1693, %v1697
      %v1700 = vshll.u32 %v1609, 16
      %v1702 = vrot.slane %v1700, 1
      %v1703 = vsel %vm1619, %v1698, %v1702
      %v1705 = vshrl.u32 %v1562, 16
      %v1707 = vshll.u32 %v1562, 16
      %v1709 = vrot.slane %v1707, 1
      %v1710 = vor.u32 %v1705, %v1709
      %v1712 = vshll.u32 %v1610, 16
      %v1714 = vrot.slane %v1712, 1
      %v1715 = vsel %vm1619, %v1710, %v1714
      %v1717 = vshrl.u32 %v1563, 16
      %v1719 = vshll.u32 %v1563, 16
      %v1721 = vrot.slane %v1719, 1
      %v1722 = vor.u32 %v1717, %v1721
      %v1724 = vshll.u32 %v1611, 16
      %v1726 = vrot.slane %v1724, 1
      %v1727 = vsel %vm1619, %v1722, %v1726
      %v1729 = vshrl.u32 %v1564, 16
      %v1731 = vshll.u32 %v1564, 16
      %v1733 = vrot.slane %v1731, 1
      %v1734 = vor.u32 %v1729, %v1733
      %v1736 = vshll.u32 %v1612, 16
      %v1738 = vrot.slane %v1736, 1
      %v1739 = vsel %vm1619, %v1734, %v1738
      %v1741 = vshrl.u32 %v1565, 16
      %v1743 = vshll.u32 %v1565, 16
      %v1745 = vrot.slane %v1743, 1
      %v1746 = vor.u32 %v1741, %v1745
      %v1748 = vshll.u32 %v1613, 16
      %v1750 = vrot.slane %v1748, 1
      %v1751 = vsel %vm1619, %v1746, %v1750
      %v1753 = vshrl.u32 %v1566, 16
      %v1755 = vshll.u32 %v1566, 16
      %v1757 = vrot.slane %v1755, 1
      %v1758 = vor.u32 %v1753, %v1757
      %v1760 = vshll.u32 %v1614, 16
      %v1762 = vrot.slane %v1760, 1
      %v1763 = vsel %vm1619, %v1758, %v1762
      %v1765 = vshrl.u32 %v1567, 16
      %v1767 = vshll.u32 %v1567, 16
      %v1769 = vrot.slane %v1767, 1
      %v1770 = vor.u32 %v1765, %v1769
      %v1772 = vshll.u32 %v1615, 16
      %v1774 = vrot.slane %v1772, 1
      %v1775 = vsel %vm1619, %v1770, %v1774
      %v1777 = vshrl.u32 %v1568, 16
      %v1779 = vshll.u32 %v1568, 16
      %v1781 = vrot.slane %v1779, 1
      %v1782 = vor.u32 %v1777, %v1781
      %v1784 = vshll.u32 %v1616, 16
      %v1786 = vrot.slane %v1784, 1
      %v1787 = vsel %vm1619, %v1782, %v1786
      %v1789 = vshrl.u32 %v1569, 16
      %v1791 = vshll.u32 %v1569, 16
      %v1793 = vrot.slane %v1791, 1
      %v1794 = vor.u32 %v1789, %v1793
      %v1796 = vshll.u32 %v1617, 16
      %v1798 = vrot.slane %v1796, 1
      %v1799 = vsel %vm1619, %v1794, %v1798
      %v1801 = vshrl.u32 %v1570, 16
      %v1803 = vshll.u32 %v1570, 16
      %v1805 = vrot.slane %v1803, 1
      %v1806 = vor.u32 %v1801, %v1805
      %v1808 = vshll.u32 %v1618, 16
      %v1810 = vrot.slane %v1808, 1
      %v1811 = vsel %vm1619, %v1806, %v1810
      %1812 = vrot.lane.b32.xlu0 %v1631, 32
      %v1813 = vpop.permute.xlu0 %1812
      %1814 = vrot.lane.b32.xlu0 %v1643, 32
      %v1815 = vpop.permute.xlu0 %1814
      %1816 = vrot.lane.b32.xlu0 %v1655, 32
      %v1817 = vpop.permute.xlu0 %1816
      %1818 = vrot.lane.b32.xlu0 %v1667, 32
      %v1819 = vpop.permute.xlu0 %1818
      %1820 = vrot.lane.b32.xlu0 %v1679, 32
      %v1821 = vpop.permute.xlu0 %1820
      %1822 = vrot.lane.b32.xlu0 %v1691, 32
      %v1823 = vpop.permute.xlu0 %1822
      %1824 = vrot.lane.b32.xlu0 %v1703, 32
      %v1825 = vpop.permute.xlu0 %1824
      %1826 = vrot.lane.b32.xlu0 %v1715, 32
      %v1827 = vpop.permute.xlu0 %1826
      %1828 = vrot.lane.b32.xlu0 %v1727, 32
      %v1829 = vpop.permute.xlu0 %1828
      %1830 = vrot.lane.b32.xlu0 %v1739, 32
      %v1831 = vpop.permute.xlu0 %1830
      %1832 = vrot.lane.b32.xlu0 %v1751, 32
      %v1833 = vpop.permute.xlu0 %1832
      %1834 = vrot.lane.b32.xlu0 %v1763, 32
      %v1835 = vpop.permute.xlu0 %1834
      %1836 = vrot.lane.b32.xlu0 %v1775, 32
      %v1837 = vpop.permute.xlu0 %1836
      %1838 = vrot.lane.b32.xlu0 %v1787, 32
      %v1839 = vpop.permute.xlu0 %1838
      %1840 = vrot.lane.b32.xlu0 %v1799, 32
      %v1841 = vpop.permute.xlu0 %1840
      %1842 = vrot.lane.b32.xlu0 %v1811, 32
      %v1843 = vpop.permute.xlu0 %1842
      %v1860 = vunpack.c.l.b16 %v1346
      %v1861 = vunpack.c.l.b16 %v1347
      %v1862 = vunpack.c.l.b16 %v1348
      %v1863 = vunpack.c.l.b16 %v1349
      %v1864 = vunpack.c.l.b16 %v1350
      %v1865 = vunpack.c.l.b16 %v1351
      %v1866 = vunpack.c.l.b16 %v1352
      %v1867 = vunpack.c.l.b16 %v1353
      %v1868 = vunpack.c.l.b16 %v1354
      %v1869 = vunpack.c.l.b16 %v1355
      %v1870 = vunpack.c.l.b16 %v1356
      %v1871 = vunpack.c.l.b16 %v1357
      %v1872 = vunpack.c.l.b16 %v1358
      %v1873 = vunpack.c.l.b16 %v1359
      %v1874 = vunpack.c.l.b16 %v1360
      %v1875 = vunpack.c.l.b16 %v1361
      %v1876 = vpack.c.b16 %v1524, %v1860
      %v1877 = vpack.c.b16 %v1526, %v1861
      %v1878 = vpack.c.b16 %v1528, %v1862
      %v1879 = vpack.c.b16 %v1530, %v1863
      %v1880 = vpack.c.b16 %v1532, %v1864
      %v1881 = vpack.c.b16 %v1534, %v1865
      %v1882 = vpack.c.b16 %v1536, %v1866
      %v1883 = vpack.c.b16 %v1538, %v1867
      %v1884 = vpack.c.b16 %v1540, %v1868
      %v1885 = vpack.c.b16 %v1542, %v1869
      %v1886 = vpack.c.b16 %v1544, %v1870
      %v1887 = vpack.c.b16 %v1546, %v1871
      %v1888 = vpack.c.b16 %v1548, %v1872
      %v1889 = vpack.c.b16 %v1550, %v1873
      %v1890 = vpack.c.b16 %v1552, %v1874
      %v1891 = vpack.c.b16 %v1554, %v1875
      %vm1892 = vcmask 1046528
      %v1893 = vrot.slane %v1876, 1
      %v1894 = vrot.slane %v1603, 1
      %v1895 = vsel %vm1892, %v1893, %v1894
      %v1896 = vrot.slane %v1877, 1
      %v1897 = vrot.slane %v1604, 1
      %v1898 = vsel %vm1892, %v1896, %v1897
      %v1899 = vrot.slane %v1878, 1
      %v1900 = vrot.slane %v1605, 1
      %v1901 = vsel %vm1892, %v1899, %v1900
      %v1902 = vrot.slane %v1879, 1
      %v1903 = vrot.slane %v1606, 1
      %v1904 = vsel %vm1892, %v1902, %v1903
      %v1905 = vrot.slane %v1880, 1
      %v1906 = vrot.slane %v1607, 1
      %v1907 = vsel %vm1892, %v1905, %v1906
      %v1908 = vrot.slane %v1881, 1
      %v1909 = vrot.slane %v1608, 1
      %v1910 = vsel %vm1892, %v1908, %v1909
      %v1911 = vrot.slane %v1882, 1
      %v1912 = vrot.slane %v1609, 1
      %v1913 = vsel %vm1892, %v1911, %v1912
      %v1914 = vrot.slane %v1883, 1
      %v1915 = vrot.slane %v1610, 1
      %v1916 = vsel %vm1892, %v1914, %v1915
      %v1917 = vrot.slane %v1884, 1
      %v1918 = vrot.slane %v1611, 1
      %v1919 = vsel %vm1892, %v1917, %v1918
      %v1920 = vrot.slane %v1885, 1
      %v1921 = vrot.slane %v1612, 1
      %v1922 = vsel %vm1892, %v1920, %v1921
      %v1923 = vrot.slane %v1886, 1
      %v1924 = vrot.slane %v1613, 1
      %v1925 = vsel %vm1892, %v1923, %v1924
      %v1926 = vrot.slane %v1887, 1
      %v1927 = vrot.slane %v1614, 1
      %v1928 = vsel %vm1892, %v1926, %v1927
      %v1929 = vrot.slane %v1888, 1
      %v1930 = vrot.slane %v1615, 1
      %v1931 = vsel %vm1892, %v1929, %v1930
      %v1932 = vrot.slane %v1889, 1
      %v1933 = vrot.slane %v1616, 1
      %v1934 = vsel %vm1892, %v1932, %v1933
      %v1935 = vrot.slane %v1890, 1
      %v1936 = vrot.slane %v1617, 1
      %v1937 = vsel %vm1892, %v1935, %v1936
      %v1938 = vrot.slane %v1891, 1
      %v1939 = vrot.slane %v1618, 1
      %v1940 = vsel %vm1892, %v1938, %v1939
      %1941 = vrot.lane.b32.xlu0 %v1895, 64
      %v1942 = vpop.permute.xlu0 %1941
      %1943 = vrot.lane.b32.xlu0 %v1898, 64
      %v1944 = vpop.permute.xlu0 %1943
      %1945 = vrot.lane.b32.xlu0 %v1901, 64
      %v1946 = vpop.permute.xlu0 %1945
      %1947 = vrot.lane.b32.xlu0 %v1904, 64
      %v1948 = vpop.permute.xlu0 %1947
      %1949 = vrot.lane.b32.xlu0 %v1907, 64
      %v1950 = vpop.permute.xlu0 %1949
      %1951 = vrot.lane.b32.xlu0 %v1910, 64
      %v1952 = vpop.permute.xlu0 %1951
      %1953 = vrot.lane.b32.xlu0 %v1913, 64
      %v1954 = vpop.permute.xlu0 %1953
      %1955 = vrot.lane.b32.xlu0 %v1916, 64
      %v1956 = vpop.permute.xlu0 %1955
      %1957 = vrot.lane.b32.xlu0 %v1919, 64
      %v1958 = vpop.permute.xlu0 %1957
      %1959 = vrot.lane.b32.xlu0 %v1922, 64
      %v1960 = vpop.permute.xlu0 %1959
      %1961 = vrot.lane.b32.xlu0 %v1925, 64
      %v1962 = vpop.permute.xlu0 %1961
      %1963 = vrot.lane.b32.xlu0 %v1928, 64
      %v1964 = vpop.permute.xlu0 %1963
      %1965 = vrot.lane.b32.xlu0 %v1931, 64
      %v1966 = vpop.permute.xlu0 %1965
      %1967 = vrot.lane.b32.xlu0 %v1934, 64
      %v1968 = vpop.permute.xlu0 %1967
      %1969 = vrot.lane.b32.xlu0 %v1937, 64
      %v1970 = vpop.permute.xlu0 %1969
      %1971 = vrot.lane.b32.xlu0 %v1940, 64
      %v1972 = vpop.permute.xlu0 %1971
      %v2005 = vunpack.c.l.b16 %v1362
      %v2006 = vunpack.c.l.b16 %v1363
      %v2007 = vunpack.c.l.b16 %v1364
      %v2008 = vunpack.c.l.b16 %v1365
      %v2009 = vunpack.c.l.b16 %v1366
      %v2010 = vunpack.c.l.b16 %v1367
      %v2011 = vunpack.c.l.b16 %v1368
      %v2012 = vunpack.c.l.b16 %v1369
      %v2013 = vunpack.c.l.b16 %v1370
      %v2014 = vunpack.c.l.b16 %v1371
      %v2015 = vunpack.c.l.b16 %v1372
      %v2016 = vunpack.c.l.b16 %v1373
      %v2017 = vunpack.c.l.b16 %v1374
      %v2018 = vunpack.c.l.b16 %v1375
      %v2019 = vunpack.c.l.b16 %v1376
      %v2020 = vunpack.c.l.b16 %v1377
      %v2021 = vunpack.c.l.b16 %v1378
      %v2022 = vunpack.c.l.b16 %v1379
      %v2023 = vunpack.c.l.b16 %v1380
      %v2024 = vunpack.c.l.b16 %v1381
      %v2025 = vunpack.c.l.b16 %v1382
      %v2026 = vunpack.c.l.b16 %v1383
      %v2027 = vunpack.c.l.b16 %v1384
      %v2028 = vunpack.c.l.b16 %v1385
      %v2029 = vunpack.c.l.b16 %v1386
      %v2030 = vunpack.c.l.b16 %v1387
      %v2031 = vunpack.c.l.b16 %v1388
      %v2032 = vunpack.c.l.b16 %v1389
      %v2033 = vunpack.c.l.b16 %v1390
      %v2034 = vunpack.c.l.b16 %v1391
      %v2035 = vunpack.c.l.b16 %v1392
      %v2036 = vunpack.c.l.b16 %v1393
      %v2037 = vpack.c.b16 %v2006, %v2005
      %v2038 = vpack.c.b16 %v2008, %v2007
      %v2039 = vpack.c.b16 %v2010, %v2009
      %v2040 = vpack.c.b16 %v2012, %v2011
      %v2041 = vpack.c.b16 %v2014, %v2013
      %v2042 = vpack.c.b16 %v2016, %v2015
      %v2043 = vpack.c.b16 %v2018, %v2017
      %v2044 = vpack.c.b16 %v2020, %v2019
      %v2045 = vpack.c.b16 %v2022, %v2021
      %v2046 = vpack.c.b16 %v2024, %v2023
      %v2047 = vpack.c.b16 %v2026, %v2025
      %v2048 = vpack.c.b16 %v2028, %v2027
      %v2049 = vpack.c.b16 %v2030, %v2029
      %v2050 = vpack.c.b16 %v2032, %v2031
      %v2051 = vpack.c.b16 %v2034, %v2033
      %v2052 = vpack.c.b16 %v2036, %v2035
      %2053 = vrot.lane.b32.xlu0 %v2037, 96
      %v2054 = vpop.permute.xlu0 %2053
      %2055 = vrot.lane.b32.xlu0 %v2038, 96
      %v2056 = vpop.permute.xlu0 %2055
      %2057 = vrot.lane.b32.xlu0 %v2039, 96
      %v2058 = vpop.permute.xlu0 %2057
      %2059 = vrot.lane.b32.xlu0 %v2040, 96
      %v2060 = vpop.permute.xlu0 %2059
      %2061 = vrot.lane.b32.xlu0 %v2041, 96
      %v2062 = vpop.permute.xlu0 %2061
      %2063 = vrot.lane.b32.xlu0 %v2042, 96
      %v2064 = vpop.permute.xlu0 %2063
      %2065 = vrot.lane.b32.xlu0 %v2043, 96
      %v2066 = vpop.permute.xlu0 %2065
      %2067 = vrot.lane.b32.xlu0 %v2044, 96
      %v2068 = vpop.permute.xlu0 %2067
      %2069 = vrot.lane.b32.xlu0 %v2045, 96
      %v2070 = vpop.permute.xlu0 %2069
      %2071 = vrot.lane.b32.xlu0 %v2046, 96
      %v2072 = vpop.permute.xlu0 %2071
      %2073 = vrot.lane.b32.xlu0 %v2047, 96
      %v2074 = vpop.permute.xlu0 %2073
      %2075 = vrot.lane.b32.xlu0 %v2048, 96
      %v2076 = vpop.permute.xlu0 %2075
      %2077 = vrot.lane.b32.xlu0 %v2049, 96
      %v2078 = vpop.permute.xlu0 %2077
      %2079 = vrot.lane.b32.xlu0 %v2050, 96
      %v2080 = vpop.permute.xlu0 %2079
      %2081 = vrot.lane.b32.xlu0 %v2051, 96
      %v2082 = vpop.permute.xlu0 %2081
      %2083 = vrot.lane.b32.xlu0 %v2052, 96
      %v2084 = vpop.permute.xlu0 %2083
      %v2101 = vunpack.c.l.b16 %v1394
      %v2102 = vunpack.c.l.b16 %v1395
      %v2103 = vunpack.c.l.b16 %v1396
      %v2104 = vunpack.c.l.b16 %v1397
      %v2105 = vunpack.c.l.b16 %v1398
      %v2106 = vunpack.c.l.b16 %v1399
      %v2107 = vunpack.c.l.b16 %v1400
      %v2108 = vunpack.c.l.b16 %v1401
      %v2109 = vunpack.c.l.b16 %v1402
      %v2110 = vunpack.c.l.b16 %v1403
      %v2111 = vunpack.c.l.b16 %v1404
      %v2112 = vunpack.c.l.b16 %v1405
      %v2113 = vunpack.c.l.b16 %v1406
      %v2114 = vunpack.c.l.b16 %v1407
      %v2115 = vunpack.c.l.b16 %v1408
      %v2116 = vunpack.c.l.b16 %v1409
      %v2117 = vpack.c.b16 %v2101, %v2101
      %v2118 = vpack.c.b16 %v2102, %v2102
      %v2119 = vpack.c.b16 %v2103, %v2103
      %v2120 = vpack.c.b16 %v2104, %v2104
      %v2121 = vpack.c.b16 %v2105, %v2105
      %v2122 = vpack.c.b16 %v2106, %v2106
      %v2123 = vpack.c.b16 %v2107, %v2107
      %v2124 = vpack.c.b16 %v2108, %v2108
      %v2125 = vpack.c.b16 %v2109, %v2109
      %v2126 = vpack.c.b16 %v2110, %v2110
      %v2127 = vpack.c.b16 %v2111, %v2111
      %v2128 = vpack.c.b16 %v2112, %v2112
      %v2129 = vpack.c.b16 %v2113, %v2113
      %v2130 = vpack.c.b16 %v2114, %v2114
      %v2131 = vpack.c.b16 %v2115, %v2115
      %v2132 = vpack.c.b16 %v2116, %v2116
      %v2134 = vshrl.u32 %v2037, 16
      %v2136 = vshll.u32 %v2037, 16
      %v2138 = vrot.slane %v2136, 1
      %v2139 = vor.u32 %v2134, %v2138
      %v2141 = vshll.u32 %v2117, 16
      %v2143 = vrot.slane %v2141, 1
      %v2144 = vsel %vm1619, %v2139, %v2143
      %v2146 = vshrl.u32 %v2038, 16
      %v2148 = vshll.u32 %v2038, 16
      %v2150 = vrot.slane %v2148, 1
      %v2151 = vor.u32 %v2146, %v2150
      %v2153 = vshll.u32 %v2118, 16
      %v2155 = vrot.slane %v2153, 1
      %v2156 = vsel %vm1619, %v2151, %v2155
      %v2158 = vshrl.u32 %v2039, 16
      %v2160 = vshll.u32 %v2039, 16
      %v2162 = vrot.slane %v2160, 1
      %v2163 = vor.u32 %v2158, %v2162
      %v2165 = vshll.u32 %v2119, 16
      %v2167 = vrot.slane %v2165, 1
      %v2168 = vsel %vm1619, %v2163, %v2167
      %v2170 = vshrl.u32 %v2040, 16
      %v2172 = vshll.u32 %v2040, 16
      %v2174 = vrot.slane %v2172, 1
      %v2175 = vor.u32 %v2170, %v2174
      %v2177 = vshll.u32 %v2120, 16
      %v2179 = vrot.slane %v2177, 1
      %v2180 = vsel %vm1619, %v2175, %v2179
      %v2182 = vshrl.u32 %v2041, 16
      %v2184 = vshll.u32 %v2041, 16
      %v2186 = vrot.slane %v2184, 1
      %v2187 = vor.u32 %v2182, %v2186
      %v2189 = vshll.u32 %v2121, 16
      %v2191 = vrot.slane %v2189, 1
      %v2192 = vsel %vm1619, %v2187, %v2191
      %v2194 = vshrl.u32 %v2042, 16
      %v2196 = vshll.u32 %v2042, 16
      %v2198 = vrot.slane %v2196, 1
      %v2199 = vor.u32 %v2194, %v2198
      %v2201 = vshll.u32 %v2122, 16
      %v2203 = vrot.slane %v2201, 1
      %v2204 = vsel %vm1619, %v2199, %v2203
      %v2206 = vshrl.u32 %v2043, 16
      %v2208 = vshll.u32 %v2043, 16
      %v2210 = vrot.slane %v2208, 1
      %v2211 = vor.u32 %v2206, %v2210
      %v2213 = vshll.u32 %v2123, 16
      %v2215 = vrot.slane %v2213, 1
      %v2216 = vsel %vm1619, %v2211, %v2215
      %v2218 = vshrl.u32 %v2044, 16
      %v2220 = vshll.u32 %v2044, 16
      %v2222 = vrot.slane %v2220, 1
      %v2223 = vor.u32 %v2218, %v2222
      %v2225 = vshll.u32 %v2124, 16
      %v2227 = vrot.slane %v2225, 1
      %v2228 = vsel %vm1619, %v2223, %v2227
      %v2230 = vshrl.u32 %v2045, 16
      %v2232 = vshll.u32 %v2045, 16
      %v2234 = vrot.slane %v2232, 1
      %v2235 = vor.u32 %v2230, %v2234
      %v2237 = vshll.u32 %v2125, 16
      %v2239 = vrot.slane %v2237, 1
      %v2240 = vsel %vm1619, %v2235, %v2239
      %v2242 = vshrl.u32 %v2046, 16
      %v2244 = vshll.u32 %v2046, 16
      %v2246 = vrot.slane %v2244, 1
      %v2247 = vor.u32 %v2242, %v2246
      %v2249 = vshll.u32 %v2126, 16
      %v2251 = vrot.slane %v2249, 1
      %v2252 = vsel %vm1619, %v2247, %v2251
      %v2254 = vshrl.u32 %v2047, 16
      %v2256 = vshll.u32 %v2047, 16
      %v2258 = vrot.slane %v2256, 1
      %v2259 = vor.u32 %v2254, %v2258
      %v2261 = vshll.u32 %v2127, 16
      %v2263 = vrot.slane %v2261, 1
      %v2264 = vsel %vm1619, %v2259, %v2263
      %v2266 = vshrl.u32 %v2048, 16
      %v2268 = vshll.u32 %v2048, 16
      %v2270 = vrot.slane %v2268, 1
      %v2271 = vor.u32 %v2266, %v2270
      %v2273 = vshll.u32 %v2128, 16
      %v2275 = vrot.slane %v2273, 1
      %v2276 = vsel %vm1619, %v2271, %v2275
      %v2278 = vshrl.u32 %v2049, 16
      %v2280 = vshll.u32 %v2049, 16
      %v2282 = vrot.slane %v2280, 1
      %v2283 = vor.u32 %v2278, %v2282
      %v2285 = vshll.u32 %v2129, 16
      %v2287 = vrot.slane %v2285, 1
      %v2288 = vsel %vm1619, %v2283, %v2287
      %v2290 = vshrl.u32 %v2050, 16
      %v2292 = vshll.u32 %v2050, 16
      %v2294 = vrot.slane %v2292, 1
      %v2295 = vor.u32 %v2290, %v2294
      %v2297 = vshll.u32 %v2130, 16
      %v2299 = vrot.slane %v2297, 1
      %v2300 = vsel %vm1619, %v2295, %v2299
      %v2302 = vshrl.u32 %v2051, 16
      %v2304 = vshll.u32 %v2051, 16
      %v2306 = vrot.slane %v2304, 1
      %v2307 = vor.u32 %v2302, %v2306
      %v2309 = vshll.u32 %v2131, 16
      %v2311 = vrot.slane %v2309, 1
      %v2312 = vsel %vm1619, %v2307, %v2311
      %v2314 = vshrl.u32 %v2052, 16
      %v2316 = vshll.u32 %v2052, 16
      %v2318 = vrot.slane %v2316, 1
      %v2319 = vor.u32 %v2314, %v2318
      %v2321 = vshll.u32 %v2132, 16
      %v2323 = vrot.slane %v2321, 1
      %v2324 = vsel %vm1619, %v2319, %v2323
      %v2341 = vunpack.c.l.b16 %v1410
      %v2342 = vunpack.c.l.b16 %v1411
      %v2343 = vunpack.c.l.b16 %v1412
      %v2344 = vunpack.c.l.b16 %v1413
      %v2345 = vunpack.c.l.b16 %v1414
      %v2346 = vunpack.c.l.b16 %v1415
      %v2347 = vunpack.c.l.b16 %v1416
      %v2348 = vunpack.c.l.b16 %v1417
      %v2349 = vunpack.c.l.b16 %v1418
      %v2350 = vunpack.c.l.b16 %v1419
      %v2351 = vunpack.c.l.b16 %v1420
      %v2352 = vunpack.c.l.b16 %v1421
      %v2353 = vunpack.c.l.b16 %v1422
      %v2354 = vunpack.c.l.b16 %v1423
      %v2355 = vunpack.c.l.b16 %v1424
      %v2356 = vunpack.c.l.b16 %v1425
      %v2357 = vpack.c.b16 %v2006, %v2341
      %v2358 = vpack.c.b16 %v2008, %v2342
      %v2359 = vpack.c.b16 %v2010, %v2343
      %v2360 = vpack.c.b16 %v2012, %v2344
      %v2361 = vpack.c.b16 %v2014, %v2345
      %v2362 = vpack.c.b16 %v2016, %v2346
      %v2363 = vpack.c.b16 %v2018, %v2347
      %v2364 = vpack.c.b16 %v2020, %v2348
      %v2365 = vpack.c.b16 %v2022, %v2349
      %v2366 = vpack.c.b16 %v2024, %v2350
      %v2367 = vpack.c.b16 %v2026, %v2351
      %v2368 = vpack.c.b16 %v2028, %v2352
      %v2369 = vpack.c.b16 %v2030, %v2353
      %v2370 = vpack.c.b16 %v2032, %v2354
      %v2371 = vpack.c.b16 %v2034, %v2355
      %v2372 = vpack.c.b16 %v2036, %v2356
      %v2373 = vrot.slane %v2357, 1
      %v2374 = vrot.slane %v2117, 1
      %v2375 = vsel %vm1892, %v2373, %v2374
      %v2376 = vrot.slane %v2358, 1
      %v2377 = vrot.slane %v2118, 1
      %v2378 = vsel %vm1892, %v2376, %v2377
      %v2379 = vrot.slane %v2359, 1
      %v2380 = vrot.slane %v2119, 1
      %v2381 = vsel %vm1892, %v2379, %v2380
      %v2382 = vrot.slane %v2360, 1
      %v2383 = vrot.slane %v2120, 1
      %v2384 = vsel %vm1892, %v2382, %v2383
      %v2385 = vrot.slane %v2361, 1
      %v2386 = vrot.slane %v2121, 1
      %v2387 = vsel %vm1892, %v2385, %v2386
      %v2388 = vrot.slane %v2362, 1
      %v2389 = vrot.slane %v2122, 1
      %v2390 = vsel %vm1892, %v2388, %v2389
      %v2391 = vrot.slane %v2363, 1
      %v2392 = vrot.slane %v2123, 1
      %v2393 = vsel %vm1892, %v2391, %v2392
      %v2394 = vrot.slane %v2364, 1
      %v2395 = vrot.slane %v2124, 1
      %v2396 = vsel %vm1892, %v2394, %v2395
      %v2397 = vrot.slane %v2365, 1
      %v2398 = vrot.slane %v2125, 1
      %v2399 = vsel %vm1892, %v2397, %v2398
      %v2400 = vrot.slane %v2366, 1
      %v2401 = vrot.slane %v2126, 1
      %v2402 = vsel %vm1892, %v2400, %v2401
      %v2403 = vrot.slane %v2367, 1
      %v2404 = vrot.slane %v2127, 1
      %v2405 = vsel %vm1892, %v2403, %v2404
      %v2406 = vrot.slane %v2368, 1
      %v2407 = vrot.slane %v2128, 1
      %v2408 = vsel %vm1892, %v2406, %v2407
      %v2409 = vrot.slane %v2369, 1
      %v2410 = vrot.slane %v2129, 1
      %v2411 = vsel %vm1892, %v2409, %v2410
      %v2412 = vrot.slane %v2370, 1
      %v2413 = vrot.slane %v2130, 1
      %v2414 = vsel %vm1892, %v2412, %v2413
      %v2415 = vrot.slane %v2371, 1
      %v2416 = vrot.slane %v2131, 1
      %v2417 = vsel %vm1892, %v2415, %v2416
      %v2418 = vrot.slane %v2372, 1
      %v2419 = vrot.slane %v2132, 1
      %v2420 = vsel %vm1892, %v2418, %v2419
      %2421 = vrot.lane.b32.xlu0 %v2375, 32
      %v2422 = vpop.permute.xlu0 %2421
      %2423 = vrot.lane.b32.xlu0 %v2378, 32
      %v2424 = vpop.permute.xlu0 %2423
      %2425 = vrot.lane.b32.xlu0 %v2381, 32
      %v2426 = vpop.permute.xlu0 %2425
      %2427 = vrot.lane.b32.xlu0 %v2384, 32
      %v2428 = vpop.permute.xlu0 %2427
      %2429 = vrot.lane.b32.xlu0 %v2387, 32
      %v2430 = vpop.permute.xlu0 %2429
      %2431 = vrot.lane.b32.xlu0 %v2390, 32
      %v2432 = vpop.permute.xlu0 %2431
      %2433 = vrot.lane.b32.xlu0 %v2393, 32
      %v2434 = vpop.permute.xlu0 %2433
      %2435 = vrot.lane.b32.xlu0 %v2396, 32
      %v2436 = vpop.permute.xlu0 %2435
      %2437 = vrot.lane.b32.xlu0 %v2399, 32
      %v2438 = vpop.permute.xlu0 %2437
      %2439 = vrot.lane.b32.xlu0 %v2402, 32
      %v2440 = vpop.permute.xlu0 %2439
      %2441 = vrot.lane.b32.xlu0 %v2405, 32
      %v2442 = vpop.permute.xlu0 %2441
      %2443 = vrot.lane.b32.xlu0 %v2408, 32
      %v2444 = vpop.permute.xlu0 %2443
      %2445 = vrot.lane.b32.xlu0 %v2411, 32
      %v2446 = vpop.permute.xlu0 %2445
      %2447 = vrot.lane.b32.xlu0 %v2414, 32
      %v2448 = vpop.permute.xlu0 %2447
      %2449 = vrot.lane.b32.xlu0 %v2417, 32
      %v2450 = vpop.permute.xlu0 %2449
      %2451 = vrot.lane.b32.xlu0 %v2420, 32
      %v2452 = vpop.permute.xlu0 %2451
      %v2485 = vunpack.c.l.b16 %v1427
      %v2486 = vunpack.c.l.b16 %v1428
      %v2487 = vunpack.c.l.b16 %v1429
      %v2488 = vunpack.c.l.b16 %v1430
      %v2489 = vunpack.c.l.b16 %v1431
      %v2490 = vunpack.c.l.b16 %v1432
      %v2491 = vunpack.c.l.b16 %v1433
      %v2492 = vunpack.c.l.b16 %v1434
      %v2493 = vunpack.c.l.b16 %v1435
      %v2494 = vunpack.c.l.b16 %v1436
      %v2495 = vunpack.c.l.b16 %v1437
      %v2496 = vunpack.c.l.b16 %v1438
      %v2497 = vunpack.c.l.b16 %v1439
      %v2498 = vunpack.c.l.b16 %v1440
      %v2499 = vunpack.c.l.b16 %v1441
      %v2500 = vunpack.c.l.b16 %v1442
      %v2501 = vunpack.c.l.b16 %v1443
      %v2502 = vunpack.c.l.b16 %v1444
      %v2503 = vunpack.c.l.b16 %v1445
      %v2504 = vunpack.c.l.b16 %v1446
      %v2505 = vunpack.c.l.b16 %v1447
      %v2506 = vunpack.c.l.b16 %v1448
      %v2507 = vunpack.c.l.b16 %v1449
      %v2508 = vunpack.c.l.b16 %v1450
      %v2509 = vunpack.c.l.b16 %v1451
      %v2510 = vunpack.c.l.b16 %v1452
      %v2511 = vunpack.c.l.b16 %v1453
      %v2512 = vunpack.c.l.b16 %v1454
      %v2513 = vunpack.c.l.b16 %v1455
      %v2514 = vunpack.c.l.b16 %v1456
      %v2515 = vunpack.c.l.b16 %v1457
      %v2516 = vunpack.c.l.b16 %v1458
      %v2517 = vpack.c.b16 %v2486, %v2485
      %v2518 = vpack.c.b16 %v2488, %v2487
      %v2519 = vpack.c.b16 %v2490, %v2489
      %v2520 = vpack.c.b16 %v2492, %v2491
      %v2521 = vpack.c.b16 %v2494, %v2493
      %v2522 = vpack.c.b16 %v2496, %v2495
      %v2523 = vpack.c.b16 %v2498, %v2497
      %v2524 = vpack.c.b16 %v2500, %v2499
      %v2525 = vpack.c.b16 %v2502, %v2501
      %v2526 = vpack.c.b16 %v2504, %v2503
      %v2527 = vpack.c.b16 %v2506, %v2505
      %v2528 = vpack.c.b16 %v2508, %v2507
      %v2529 = vpack.c.b16 %v2510, %v2509
      %v2530 = vpack.c.b16 %v2512, %v2511
      %v2531 = vpack.c.b16 %v2514, %v2513
      %v2532 = vpack.c.b16 %v2516, %v2515
      %2533 = vrot.lane.b32.xlu0 %v2517, 64
      %v2534 = vpop.permute.xlu0 %2533
      %2535 = vrot.lane.b32.xlu0 %v2518, 64
      %v2536 = vpop.permute.xlu0 %2535
      %2537 = vrot.lane.b32.xlu0 %v2519, 64
      %v2538 = vpop.permute.xlu0 %2537
      %2539 = vrot.lane.b32.xlu0 %v2520, 64
      %v2540 = vpop.permute.xlu0 %2539
      %2541 = vrot.lane.b32.xlu0 %v2521, 64
      %v2542 = vpop.permute.xlu0 %2541
      %2543 = vrot.lane.b32.xlu0 %v2522, 64
      %v2544 = vpop.permute.xlu0 %2543
      %2545 = vrot.lane.b32.xlu0 %v2523, 64
      %v2546 = vpop.permute.xlu0 %2545
      %2547 = vrot.lane.b32.xlu0 %v2524, 64
      %v2548 = vpop.permute.xlu0 %2547
      %2549 = vrot.lane.b32.xlu0 %v2525, 64
      %v2550 = vpop.permute.xlu0 %2549
      %2551 = vrot.lane.b32.xlu0 %v2526, 64
      %v2552 = vpop.permute.xlu0 %2551
      %2553 = vrot.lane.b32.xlu0 %v2527, 64
      %v2554 = vpop.permute.xlu0 %2553
      %2555 = vrot.lane.b32.xlu0 %v2528, 64
      %v2556 = vpop.permute.xlu0 %2555
      %2557 = vrot.lane.b32.xlu0 %v2529, 64
      %v2558 = vpop.permute.xlu0 %2557
      %2559 = vrot.lane.b32.xlu0 %v2530, 64
      %v2560 = vpop.permute.xlu0 %2559
      %2561 = vrot.lane.b32.xlu0 %v2531, 64
      %v2562 = vpop.permute.xlu0 %2561
      %2563 = vrot.lane.b32.xlu0 %v2532, 64
      %v2564 = vpop.permute.xlu0 %2563
      %v2581 = vunpack.c.l.b16 %v1459
      %v2582 = vunpack.c.l.b16 %v1460
      %v2583 = vunpack.c.l.b16 %v1461
      %v2584 = vunpack.c.l.b16 %v1462
      %v2585 = vunpack.c.l.b16 %v1463
      %v2586 = vunpack.c.l.b16 %v1464
      %v2587 = vunpack.c.l.b16 %v1465
      %v2588 = vunpack.c.l.b16 %v1466
      %v2589 = vunpack.c.l.b16 %v1467
      %v2590 = vunpack.c.l.b16 %v1468
      %v2591 = vunpack.c.l.b16 %v1469
      %v2592 = vunpack.c.l.b16 %v1470
      %v2593 = vunpack.c.l.b16 %v1471
      %v2594 = vunpack.c.l.b16 %v1472
      %v2595 = vunpack.c.l.b16 %v1473
      %v2596 = vunpack.c.l.b16 %v1474
      %v2597 = vpack.c.b16 %v2581, %v2581
      %v2598 = vpack.c.b16 %v2582, %v2582
      %v2599 = vpack.c.b16 %v2583, %v2583
      %v2600 = vpack.c.b16 %v2584, %v2584
      %v2601 = vpack.c.b16 %v2585, %v2585
      %v2602 = vpack.c.b16 %v2586, %v2586
      %v2603 = vpack.c.b16 %v2587, %v2587
      %v2604 = vpack.c.b16 %v2588, %v2588
      %v2605 = vpack.c.b16 %v2589, %v2589
      %v2606 = vpack.c.b16 %v2590, %v2590
      %v2607 = vpack.c.b16 %v2591, %v2591
      %v2608 = vpack.c.b16 %v2592, %v2592
      %v2609 = vpack.c.b16 %v2593, %v2593
      %v2610 = vpack.c.b16 %v2594, %v2594
      %v2611 = vpack.c.b16 %v2595, %v2595
      %v2612 = vpack.c.b16 %v2596, %v2596
      %v2614 = vshrl.u32 %v2517, 16
      %v2616 = vshll.u32 %v2517, 16
      %v2618 = vrot.slane %v2616, 1
      %v2619 = vor.u32 %v2614, %v2618
      %v2621 = vshll.u32 %v2597, 16
      %v2623 = vrot.slane %v2621, 1
      %v2624 = vsel %vm1619, %v2619, %v2623
      %v2626 = vshrl.u32 %v2518, 16
      %v2628 = vshll.u32 %v2518, 16
      %v2630 = vrot.slane %v2628, 1
      %v2631 = vor.u32 %v2626, %v2630
      %v2633 = vshll.u32 %v2598, 16
      %v2635 = vrot.slane %v2633, 1
      %v2636 = vsel %vm1619, %v2631, %v2635
      %v2638 = vshrl.u32 %v2519, 16
      %v2640 = vshll.u32 %v2519, 16
      %v2642 = vrot.slane %v2640, 1
      %v2643 = vor.u32 %v2638, %v2642
      %v2645 = vshll.u32 %v2599, 16
      %v2647 = vrot.slane %v2645, 1
      %v2648 = vsel %vm1619, %v2643, %v2647
      %v2650 = vshrl.u32 %v2520, 16
      %v2652 = vshll.u32 %v2520, 16
      %v2654 = vrot.slane %v2652, 1
      %v2655 = vor.u32 %v2650, %v2654
      %v2657 = vshll.u32 %v2600, 16
      %v2659 = vrot.slane %v2657, 1
      %v2660 = vsel %vm1619, %v2655, %v2659
      %v2662 = vshrl.u32 %v2521, 16
      %v2664 = vshll.u32 %v2521, 16
      %v2666 = vrot.slane %v2664, 1
      %v2667 = vor.u32 %v2662, %v2666
      %v2669 = vshll.u32 %v2601, 16
      %v2671 = vrot.slane %v2669, 1
      %v2672 = vsel %vm1619, %v2667, %v2671
      %v2674 = vshrl.u32 %v2522, 16
      %v2676 = vshll.u32 %v2522, 16
      %v2678 = vrot.slane %v2676, 1
      %v2679 = vor.u32 %v2674, %v2678
      %v2681 = vshll.u32 %v2602, 16
      %v2683 = vrot.slane %v2681, 1
      %v2684 = vsel %vm1619, %v2679, %v2683
      %v2686 = vshrl.u32 %v2523, 16
      %v2688 = vshll.u32 %v2523, 16
      %v2690 = vrot.slane %v2688, 1
      %v2691 = vor.u32 %v2686, %v2690
      %v2693 = vshll.u32 %v2603, 16
      %v2695 = vrot.slane %v2693, 1
      %v2696 = vsel %vm1619, %v2691, %v2695
      %v2698 = vshrl.u32 %v2524, 16
      %v2700 = vshll.u32 %v2524, 16
      %v2702 = vrot.slane %v2700, 1
      %v2703 = vor.u32 %v2698, %v2702
      %v2705 = vshll.u32 %v2604, 16
      %v2707 = vrot.slane %v2705, 1
      %v2708 = vsel %vm1619, %v2703, %v2707
      %v2710 = vshrl.u32 %v2525, 16
      %v2712 = vshll.u32 %v2525, 16
      %v2714 = vrot.slane %v2712, 1
      %v2715 = vor.u32 %v2710, %v2714
      %v2717 = vshll.u32 %v2605, 16
      %v2719 = vrot.slane %v2717, 1
      %v2720 = vsel %vm1619, %v2715, %v2719
      %v2722 = vshrl.u32 %v2526, 16
      %v2724 = vshll.u32 %v2526, 16
      %v2726 = vrot.slane %v2724, 1
      %v2727 = vor.u32 %v2722, %v2726
      %v2729 = vshll.u32 %v2606, 16
      %v2731 = vrot.slane %v2729, 1
      %v2732 = vsel %vm1619, %v2727, %v2731
      %v2734 = vshrl.u32 %v2527, 16
      %v2736 = vshll.u32 %v2527, 16
      %v2738 = vrot.slane %v2736, 1
      %v2739 = vor.u32 %v2734, %v2738
      %v2741 = vshll.u32 %v2607, 16
      %v2743 = vrot.slane %v2741, 1
      %v2744 = vsel %vm1619, %v2739, %v2743
      %v2746 = vshrl.u32 %v2528, 16
      %v2748 = vshll.u32 %v2528, 16
      %v2750 = vrot.slane %v2748, 1
      %v2751 = vor.u32 %v2746, %v2750
      %v2753 = vshll.u32 %v2608, 16
      %v2755 = vrot.slane %v2753, 1
      %v2756 = vsel %vm1619, %v2751, %v2755
      %v2758 = vshrl.u32 %v2529, 16
      %v2760 = vshll.u32 %v2529, 16
      %v2762 = vrot.slane %v2760, 1
      %v2763 = vor.u32 %v2758, %v2762
      %v2765 = vshll.u32 %v2609, 16
      %v2767 = vrot.slane %v2765, 1
      %v2768 = vsel %vm1619, %v2763, %v2767
      %v2770 = vshrl.u32 %v2530, 16
      %v2772 = vshll.u32 %v2530, 16
      %v2774 = vrot.slane %v2772, 1
      %v2775 = vor.u32 %v2770, %v2774
      %v2777 = vshll.u32 %v2610, 16
      %v2779 = vrot.slane %v2777, 1
      %v2780 = vsel %vm1619, %v2775, %v2779
      %v2782 = vshrl.u32 %v2531, 16
      %v2784 = vshll.u32 %v2531, 16
      %v2786 = vrot.slane %v2784, 1
      %v2787 = vor.u32 %v2782, %v2786
      %v2789 = vshll.u32 %v2611, 16
      %v2791 = vrot.slane %v2789, 1
      %v2792 = vsel %vm1619, %v2787, %v2791
      %v2794 = vshrl.u32 %v2532, 16
      %v2796 = vshll.u32 %v2532, 16
      %v2798 = vrot.slane %v2796, 1
      %v2799 = vor.u32 %v2794, %v2798
      %v2801 = vshll.u32 %v2612, 16
      %v2803 = vrot.slane %v2801, 1
      %v2804 = vsel %vm1619, %v2799, %v2803
      %2805 = vrot.lane.b32.xlu0 %v2624, 96
      %v2806 = vpop.permute.xlu0 %2805
      %2807 = vrot.lane.b32.xlu0 %v2636, 96
      %v2808 = vpop.permute.xlu0 %2807
      %2809 = vrot.lane.b32.xlu0 %v2648, 96
      %v2810 = vpop.permute.xlu0 %2809
      %2811 = vrot.lane.b32.xlu0 %v2660, 96
      %v2812 = vpop.permute.xlu0 %2811
      %2813 = vrot.lane.b32.xlu0 %v2672, 96
      %v2814 = vpop.permute.xlu0 %2813
      %2815 = vrot.lane.b32.xlu0 %v2684, 96
      %v2816 = vpop.permute.xlu0 %2815
      %2817 = vrot.lane.b32.xlu0 %v2696, 96
      %v2818 = vpop.permute.xlu0 %2817
      %2819 = vrot.lane.b32.xlu0 %v2708, 96
      %v2820 = vpop.permute.xlu0 %2819
      %2821 = vrot.lane.b32.xlu0 %v2720, 96
      %v2822 = vpop.permute.xlu0 %2821
      %2823 = vrot.lane.b32.xlu0 %v2732, 96
      %v2824 = vpop.permute.xlu0 %2823
      %2825 = vrot.lane.b32.xlu0 %v2744, 96
      %v2826 = vpop.permute.xlu0 %2825
      %2827 = vrot.lane.b32.xlu0 %v2756, 96
      %v2828 = vpop.permute.xlu0 %2827
      %2829 = vrot.lane.b32.xlu0 %v2768, 96
      %v2830 = vpop.permute.xlu0 %2829
      %2831 = vrot.lane.b32.xlu0 %v2780, 96
      %v2832 = vpop.permute.xlu0 %2831
      %2833 = vrot.lane.b32.xlu0 %v2792, 96
      %v2834 = vpop.permute.xlu0 %2833
      %2835 = vrot.lane.b32.xlu0 %v2804, 96
      %v2836 = vpop.permute.xlu0 %2835
      %v2853 = vunpack.c.l.b16 %v1475
      %v2854 = vunpack.c.l.b16 %v1476
      %v2855 = vunpack.c.l.b16 %v1477
      %v2856 = vunpack.c.l.b16 %v1478
      %v2857 = vunpack.c.l.b16 %v1479
      %v2858 = vunpack.c.l.b16 %v1480
      %v2859 = vunpack.c.l.b16 %v1481
      %v2860 = vunpack.c.l.b16 %v1482
      %v2861 = vunpack.c.l.b16 %v1483
      %v2862 = vunpack.c.l.b16 %v1484
      %v2863 = vunpack.c.l.b16 %v1485
      %v2864 = vunpack.c.l.b16 %v1486
      %v2865 = vunpack.c.l.b16 %v1487
      %v2866 = vunpack.c.l.b16 %v1488
      %v2867 = vunpack.c.l.b16 %v1489
      %v2868 = vunpack.c.l.b16 %v1490
      %v2869 = vpack.c.b16 %v2486, %v2853
      %v2870 = vpack.c.b16 %v2488, %v2854
      %v2871 = vpack.c.b16 %v2490, %v2855
      %v2872 = vpack.c.b16 %v2492, %v2856
      %v2873 = vpack.c.b16 %v2494, %v2857
      %v2874 = vpack.c.b16 %v2496, %v2858
      %v2875 = vpack.c.b16 %v2498, %v2859
      %v2876 = vpack.c.b16 %v2500, %v2860
      %v2877 = vpack.c.b16 %v2502, %v2861
      %v2878 = vpack.c.b16 %v2504, %v2862
      %v2879 = vpack.c.b16 %v2506, %v2863
      %v2880 = vpack.c.b16 %v2508, %v2864
      %v2881 = vpack.c.b16 %v2510, %v2865
      %v2882 = vpack.c.b16 %v2512, %v2866
      %v2883 = vpack.c.b16 %v2514, %v2867
      %v2884 = vpack.c.b16 %v2516, %v2868
      %v2885 = vrot.slane %v2869, 1
      %v2886 = vrot.slane %v2597, 1
      %v2887 = vsel %vm1892, %v2885, %v2886
      %v2888 = vrot.slane %v2870, 1
      %v2889 = vrot.slane %v2598, 1
      %v2890 = vsel %vm1892, %v2888, %v2889
      %v2891 = vrot.slane %v2871, 1
      %v2892 = vrot.slane %v2599, 1
      %v2893 = vsel %vm1892, %v2891, %v2892
      %v2894 = vrot.slane %v2872, 1
      %v2895 = vrot.slane %v2600, 1
      %v2896 = vsel %vm1892, %v2894, %v2895
      %v2897 = vrot.slane %v2873, 1
      %v2898 = vrot.slane %v2601, 1
      %v2899 = vsel %vm1892, %v2897, %v2898
      %v2900 = vrot.slane %v2874, 1
      %v2901 = vrot.slane %v2602, 1
      %v2902 = vsel %vm1892, %v2900, %v2901
      %v2903 = vrot.slane %v2875, 1
      %v2904 = vrot.slane %v2603, 1
      %v2905 = vsel %vm1892, %v2903, %v2904
      %v2906 = vrot.slane %v2876, 1
      %v2907 = vrot.slane %v2604, 1
      %v2908 = vsel %vm1892, %v2906, %v2907
      %v2909 = vrot.slane %v2877, 1
      %v2910 = vrot.slane %v2605, 1
      %v2911 = vsel %vm1892, %v2909, %v2910
      %v2912 = vrot.slane %v2878, 1
      %v2913 = vrot.slane %v2606, 1
      %v2914 = vsel %vm1892, %v2912, %v2913
      %v2915 = vrot.slane %v2879, 1
      %v2916 = vrot.slane %v2607, 1
      %v2917 = vsel %vm1892, %v2915, %v2916
      %v2918 = vrot.slane %v2880, 1
      %v2919 = vrot.slane %v2608, 1
      %v2920 = vsel %vm1892, %v2918, %v2919
      %v2921 = vrot.slane %v2881, 1
      %v2922 = vrot.slane %v2609, 1
      %v2923 = vsel %vm1892, %v2921, %v2922
      %v2924 = vrot.slane %v2882, 1
      %v2925 = vrot.slane %v2610, 1
      %v2926 = vsel %vm1892, %v2924, %v2925
      %v2927 = vrot.slane %v2883, 1
      %v2928 = vrot.slane %v2611, 1
      %v2929 = vsel %vm1892, %v2927, %v2928
      %v2930 = vrot.slane %v2884, 1
      %v2931 = vrot.slane %v2612, 1
      %v2932 = vsel %vm1892, %v2930, %v2931
      %vm2933 = vcmask 261120
      %v2935 = vsel %vm2933, %v1555, %v1813
      %v2937 = vsel %vm2933, %v1556, %v1815
      %v2939 = vsel %vm2933, %v1557, %v1817
      %v2941 = vsel %vm2933, %v1558, %v1819
      %v2943 = vsel %vm2933, %v1559, %v1821
      %v2945 = vsel %vm2933, %v1560, %v1823
      %v2947 = vsel %vm2933, %v1561, %v1825
      %v2949 = vsel %vm2933, %v1562, %v1827
      %v2951 = vsel %vm2933, %v1563, %v1829
      %v2953 = vsel %vm2933, %v1564, %v1831
      %v2955 = vsel %vm2933, %v1565, %v1833
      %v2957 = vsel %vm2933, %v1566, %v1835
      %v2959 = vsel %vm2933, %v1567, %v1837
      %v2961 = vsel %vm2933, %v1568, %v1839
      %v2963 = vsel %vm2933, %v1569, %v1841
      %v2965 = vsel %vm2933, %v1570, %v1843
      %vm2966 = vcmask 523264
      %v2968 = vsel %vm2966, %v2935, %v1942
      %v2970 = vsel %vm2966, %v2937, %v1944
      %v2972 = vsel %vm2966, %v2939, %v1946
      %v2974 = vsel %vm2966, %v2941, %v1948
      %v2976 = vsel %vm2966, %v2943, %v1950
      %v2978 = vsel %vm2966, %v2945, %v1952
      %v2980 = vsel %vm2966, %v2947, %v1954
      %v2982 = vsel %vm2966, %v2949, %v1956
      %v2984 = vsel %vm2966, %v2951, %v1958
      %v2986 = vsel %vm2966, %v2953, %v1960
      %v2988 = vsel %vm2966, %v2955, %v1962
      %v2990 = vsel %vm2966, %v2957, %v1964
      %v2992 = vsel %vm2966, %v2959, %v1966
      %v2994 = vsel %vm2966, %v2961, %v1968
      %v2996 = vsel %vm2966, %v2963, %v1970
      %v2998 = vsel %vm2966, %v2965, %v1972
      %vm2999 = vcmask 785408
      %v3001 = vsel %vm2999, %v2968, %v2054
      %v3004 = vsel %vm2999, %v2970, %v2056
      %v3007 = vsel %vm2999, %v2972, %v2058
      %v3010 = vsel %vm2999, %v2974, %v2060
      %v3013 = vsel %vm2999, %v2976, %v2062
      %v3016 = vsel %vm2999, %v2978, %v2064
      %v3019 = vsel %vm2999, %v2980, %v2066
      %v3022 = vsel %vm2999, %v2982, %v2068
      %v3025 = vsel %vm2999, %v2984, %v2070
      %v3028 = vsel %vm2999, %v2986, %v2072
      %v3031 = vsel %vm2999, %v2988, %v2074
      %v3034 = vsel %vm2999, %v2990, %v2076
      %v3037 = vsel %vm2999, %v2992, %v2078
      %v3040 = vsel %vm2999, %v2994, %v2080
      %v3043 = vsel %vm2999, %v2996, %v2082
      %v3046 = vsel %vm2999, %v2998, %v2084
      %v3050 = vsel %vm2933, %v2144, %v2422
      %v3053 = vsel %vm2933, %v2156, %v2424
      %v3056 = vsel %vm2933, %v2168, %v2426
      %v3059 = vsel %vm2933, %v2180, %v2428
      %v3062 = vsel %vm2933, %v2192, %v2430
      %v3065 = vsel %vm2933, %v2204, %v2432
      %v3068 = vsel %vm2933, %v2216, %v2434
      %v3071 = vsel %vm2933, %v2228, %v2436
      %v3074 = vsel %vm2933, %v2240, %v2438
      %v3077 = vsel %vm2933, %v2252, %v2440
      %v3080 = vsel %vm2933, %v2264, %v2442
      %v3083 = vsel %vm2933, %v2276, %v2444
      %v3086 = vsel %vm2933, %v2288, %v2446
      %v3089 = vsel %vm2933, %v2300, %v2448
      %v3092 = vsel %vm2933, %v2312, %v2450
      %v3095 = vsel %vm2933, %v2324, %v2452
      %v3097 = vsel %vm2966, %v3050, %v2534
      %v3099 = vsel %vm2966, %v3053, %v2536
      %v3101 = vsel %vm2966, %v3056, %v2538
      %v3103 = vsel %vm2966, %v3059, %v2540
      %v3105 = vsel %vm2966, %v3062, %v2542
      %v3107 = vsel %vm2966, %v3065, %v2544
      %v3109 = vsel %vm2966, %v3068, %v2546
      %v3111 = vsel %vm2966, %v3071, %v2548
      %v3113 = vsel %vm2966, %v3074, %v2550
      %v3115 = vsel %vm2966, %v3077, %v2552
      %v3117 = vsel %vm2966, %v3080, %v2554
      %v3119 = vsel %vm2966, %v3083, %v2556
      %v3121 = vsel %vm2966, %v3086, %v2558
      %v3123 = vsel %vm2966, %v3089, %v2560
      %v3125 = vsel %vm2966, %v3092, %v2562
      %v3127 = vsel %vm2966, %v3095, %v2564
      %v3129 = vsel %vm2999, %v3097, %v2806
      %v3132 = vsel %vm2999, %v3099, %v2808
      %v3135 = vsel %vm2999, %v3101, %v2810
      %v3138 = vsel %vm2999, %v3103, %v2812
      %v3141 = vsel %vm2999, %v3105, %v2814
      %v3144 = vsel %vm2999, %v3107, %v2816
      %v3147 = vsel %vm2999, %v3109, %v2818
      %v3150 = vsel %vm2999, %v3111, %v2820
      %v3153 = vsel %vm2999, %v3113, %v2822
      %v3156 = vsel %vm2999, %v3115, %v2824
      %v3159 = vsel %vm2999, %v3117, %v2826
      %v3162 = vsel %vm2999, %v3119, %v2828
      %v3165 = vsel %vm2999, %v3121, %v2830
      %v3168 = vsel %vm2999, %v3123, %v2832
      %v3171 = vsel %vm2999, %v3125, %v2834
      %v3174 = vsel %vm2999, %v3127, %v2836
      %v3176 = vld [vmem:[%s2] sm:$0xf]
      %v3177 = vld [vmem:[%s2 + $0x4] sm:$0xf]
      %v3178 = vld [vmem:[%s2 + $0x8] sm:$0xf]
      %v3179 = vld [vmem:[%s2 + $0xc] sm:$0xf]
      %v3180 = vld [vmem:[%s2 + $0x10] sm:$0xf]
      %v3181 = vld [vmem:[%s2 + $0x14] sm:$0xf]
      %v3182 = vld [vmem:[%s2 + $0x18] sm:$0xf]
      %v3183 = vld [vmem:[%s2 + $0x1c] sm:$0xf]
      %v3184 = vld [vmem:[%s2 + $0x20] sm:$0xf]
      %v3185 = vld [vmem:[%s2 + $0x24] sm:$0xf]
      %v3186 = vld [vmem:[%s2 + $0x28] sm:$0xf]
      %v3187 = vld [vmem:[%s2 + $0x2c] sm:$0xf]
      %v3188 = vld [vmem:[%s2 + $0x30] sm:$0xf]
      %v3189 = vld [vmem:[%s2 + $0x34] sm:$0xf]
      %v3190 = vld [vmem:[%s2 + $0x38] sm:$0xf]
      %v3191 = vld [vmem:[%s2 + $0x3c] sm:$0xf]
      %v3192 = vld [vmem:[%s2 + $0x40] sm:$0xf]
      %v3193 = vld [vmem:[%s2 + $0x44] sm:$0xf]
      %v3194 = vld [vmem:[%s2 + $0x48] sm:$0xf]
      %v3195 = vld [vmem:[%s2 + $0x4c] sm:$0xf]
      %v3196 = vld [vmem:[%s2 + $0x50] sm:$0xf]
      %v3197 = vld [vmem:[%s2 + $0x54] sm:$0xf]
      %v3198 = vld [vmem:[%s2 + $0x58] sm:$0xf]
      %v3199 = vld [vmem:[%s2 + $0x5c] sm:$0xf]
      %v3200 = vld [vmem:[%s2 + $0x60] sm:$0xf]
      %v3201 = vld [vmem:[%s2 + $0x64] sm:$0xf]
      %v3202 = vld [vmem:[%s2 + $0x68] sm:$0xf]
      %v3203 = vld [vmem:[%s2 + $0x6c] sm:$0xf]
      %v3204 = vld [vmem:[%s2 + $0x70] sm:$0xf]
      %v3205 = vld [vmem:[%s2 + $0x74] sm:$0xf]
      %v3206 = vld [vmem:[%s2 + $0x78] sm:$0xf]
      %v3207 = vld [vmem:[%s2 + $0x7c] sm:$0xf]
      %v3208 = vld [vmem:[%s2 + $0x80] sm:$0xf]
      %v3209 = vld [vmem:[%s2 + $0x84] sm:$0xf]
      %v3210 = vld [vmem:[%s2 + $0x88] sm:$0xf]
      %v3211 = vld [vmem:[%s2 + $0x8c] sm:$0xf]
      %v3212 = vld [vmem:[%s4 + $0x1] sm:$0x1]
      %v3213 = vlaneseq
      %v3214 = vshrl.u32 %v3213, 7
      %v3215 = vsub.s32 0, %v3214
      %v3216 = vrot.slane %v3212, %v3215
      %v3253 = vunpack.c.l.b16 %v3176
      %v3254 = vunpack.c.l.b16 %v3177
      %v3255 = vunpack.c.l.b16 %v3178
      %v3256 = vunpack.c.l.b16 %v3179
      %v3257 = vunpack.c.l.b16 %v3180
      %v3258 = vunpack.c.l.b16 %v3181
      %v3259 = vunpack.c.l.b16 %v3182
      %v3260 = vunpack.c.l.b16 %v3183
      %v3261 = vunpack.c.l.b16 %v3184
      %v3262 = vunpack.c.l.b16 %v3185
      %v3263 = vunpack.c.l.b16 %v3186
      %v3264 = vunpack.c.l.b16 %v3187
      %v3265 = vunpack.c.l.b16 %v3188
      %v3266 = vunpack.c.l.b16 %v3189
      %v3267 = vunpack.c.l.b16 %v3190
      %v3268 = vunpack.c.l.b16 %v3191
      %v3269 = vunpack.c.l.b16 %v3192
      %v3270 = vunpack.c.l.b16 %v3193
      %v3271 = vunpack.c.l.b16 %v3194
      %v3272 = vunpack.c.l.b16 %v3195
      %v3273 = vunpack.c.l.b16 %v3196
      %v3274 = vunpack.c.l.b16 %v3197
      %v3275 = vunpack.c.l.b16 %v3198
      %v3276 = vunpack.c.l.b16 %v3199
      %v3277 = vunpack.c.l.b16 %v3200
      %v3278 = vunpack.c.l.b16 %v3201
      %v3279 = vunpack.c.l.b16 %v3202
      %v3280 = vunpack.c.l.b16 %v3203
      %v3281 = vunpack.c.l.b16 %v3204
      %v3282 = vunpack.c.l.b16 %v3205
      %v3283 = vunpack.c.l.b16 %v3206
      %v3284 = vunpack.c.l.b16 %v3207
      %v3285 = vunpack.c.l.b16 %v3208
      %v3286 = vunpack.c.l.b16 %v3209
      %v3287 = vunpack.c.l.b16 %v3210
      %v3288 = vunpack.c.l.b16 %v3211
      %v3289 = vpack.c.b16 %v3254, %v3253
      %v3290 = vpack.c.b16 %v3256, %v3255
      %v3291 = vpack.c.b16 %v3258, %v3257
      %v3292 = vpack.c.b16 %v3260, %v3259
      %v3293 = vpack.c.b16 %v3262, %v3261
      %v3294 = vpack.c.b16 %v3264, %v3263
      %v3295 = vpack.c.b16 %v3266, %v3265
      %v3296 = vpack.c.b16 %v3268, %v3267
      %v3297 = vpack.c.b16 %v3270, %v3269
      %v3298 = vpack.c.b16 %v3272, %v3271
      %v3299 = vpack.c.b16 %v3274, %v3273
      %v3300 = vpack.c.b16 %v3276, %v3275
      %v3301 = vpack.c.b16 %v3278, %v3277
      %v3302 = vpack.c.b16 %v3280, %v3279
      %v3303 = vpack.c.b16 %v3282, %v3281
      %v3304 = vpack.c.b16 %v3284, %v3283
      %v3305 = vpack.c.b16 %v3286, %v3285
      %v3306 = vpack.c.b16 %v3288, %v3287
      %v3326 = vsel %vm2933, %v2887, 0
      %v3329 = vsel %vm2933, %v2890, 0
      %v3332 = vsel %vm2933, %v2893, 0
      %v3335 = vsel %vm2933, %v2896, 0
      %v3338 = vsel %vm2933, %v2899, 0
      %v3341 = vsel %vm2933, %v2902, 0
      %v3344 = vsel %vm2933, %v2905, 0
      %v3347 = vsel %vm2933, %v2908, 0
      %v3350 = vsel %vm2933, %v2911, 0
      %v3353 = vsel %vm2933, %v2914, 0
      %v3356 = vsel %vm2933, %v2917, 0
      %v3359 = vsel %vm2933, %v2920, 0
      %v3362 = vsel %vm2933, %v2923, 0
      %v3365 = vsel %vm2933, %v2926, 0
      %v3368 = vsel %vm2933, %v2929, 0
      %v3371 = vsel %vm2933, %v2932, 0
      %3373 = vmatprep.subr.bf16.mxu0 0
      %3374 = vmatpush1.bf16.msra.mxu0 %v3289
      %3375 = vmatprep.subr.bf16.mxu0 0
      %3376 = vmatpush1.bf16.msra.mxu0 %v3290
      %3377 = vmatprep.subr.bf16.mxu0 0
      %3378 = vmatpush1.bf16.msra.mxu0 %v3291
      %3379 = vmatprep.subr.bf16.mxu0 0
      %3380 = vmatpush1.bf16.msra.mxu0 %v3292
      %3381 = vmatprep.subr.bf16.mxu0 0
      %3382 = vmatpush1.bf16.msra.mxu0 %v3293
      %3383 = vmatprep.subr.bf16.mxu0 0
      %3384 = vmatpush1.bf16.msra.mxu0 %v3294
      %3385 = vmatprep.subr.bf16.mxu0 0
      %3386 = vmatpush1.bf16.msra.mxu0 %v3295
      %3387 = vmatprep.subr.bf16.mxu0 0
      %3388 = vmatpush1.bf16.msra.mxu0 %v3296
      %3389 = vmatprep.subr.bf16.mxu0 0
      %3390 = vmatpush1.bf16.msra.mxu0 %v3297
      %3391 = vmatprep.subr.bf16.mxu0 0
      %3392 = vmatpush1.bf16.msra.mxu0 %v3298
      %3393 = vmatprep.subr.bf16.mxu0 0
      %3394 = vmatpush1.bf16.msra.mxu0 %v3299
      %3395 = vmatprep.subr.bf16.mxu0 0
      %3396 = vmatpush1.bf16.msra.mxu0 %v3300
      %3397 = vmatprep.subr.bf16.mxu0 0
      %3398 = vmatpush1.bf16.msra.mxu0 %v3301
      %3399 = vmatprep.subr.bf16.mxu0 0
      %3400 = vmatpush1.bf16.msra.mxu0 %v3302
      %3401 = vmatprep.subr.bf16.mxu0 0
      %3402 = vmatpush1.bf16.msra.mxu0 %v3303
      %3403 = vmatprep.subr.bf16.mxu0 0
      %3404 = vmatpush1.bf16.msra.mxu0 %v3304
      %3405 = vmatprep.mubr.bf16.mxu0 %v3129
      %3406 = vmatmul.mubr.bf16.gmra.mrb[0].mxu0 %v3001
      %v3407 = vpop.f32.mrb[0].mxu0
      %v3408 = vadd.f32 %v3216, %v3407
      %v3409 = vpop.f32.mrb[0].mxu0
      %v3410 = vpop.f32.mrb[0].mxu0
      %v3411 = vadd.f32 %v3216, %v3410
      %v3412 = vpop.f32.mrb[0].mxu0
      %3413 = vmatprep.mubr.bf16.mxu0 %v3132
      %3414 = vmatmul.mubr.bf16.gmra.mrb[0].mxu0 %v3004
      %v3415 = vpop.f32.mrb[0].mxu0
      %v3416 = vadd.f32 %v3216, %v3415
      %v3417 = vpop.f32.mrb[0].mxu0
      %v3418 = vpop.f32.mrb[0].mxu0
      %v3419 = vadd.f32 %v3216, %v3418
      %v3420 = vpop.f32.mrb[0].mxu0
      %3421 = vmatprep.mubr.bf16.mxu0 %v3135
      %3422 = vmatmul.mubr.bf16.gmra.mrb[0].mxu0 %v3007
      %v3423 = vpop.f32.mrb[0].mxu0
      %v3424 = vadd.f32 %v3216, %v3423
      %v3425 = vpop.f32.mrb[0].mxu0
      %v3426 = vpop.f32.mrb[0].mxu0
      %v3427 = vadd.f32 %v3216, %v3426
      %v3428 = vpop.f32.mrb[0].mxu0
      %3429 = vmatprep.mubr.bf16.mxu0 %v3138
      %3430 = vmatmul.mubr.bf16.gmra.mrb[0].mxu0 %v3010
      %v3431 = vpop.f32.mrb[0].mxu0
      %v3432 = vadd.f32 %v3216, %v3431
      %v3433 = vpop.f32.mrb[0].mxu0
      %v3434 = vpop.f32.mrb[0].mxu0
      %v3435 = vadd.f32 %v3216, %v3434
      %v3436 = vpop.f32.mrb[0].mxu0
      %3437 = vmatprep.mubr.bf16.mxu0 %v3141
      %3438 = vmatmul.mubr.bf16.gmra.mrb[0].mxu0 %v3013
      %v3439 = vpop.f32.mrb[0].mxu0
      %v3440 = vadd.f32 %v3216, %v3439
      %v3441 = vpop.f32.mrb[0].mxu0
      %v3442 = vpop.f32.mrb[0].mxu0
      %v3443 = vadd.f32 %v3216, %v3442
      %v3444 = vpop.f32.mrb[0].mxu0
      %3445 = vmatprep.mubr.bf16.mxu0 %v3144
      %3446 = vmatmul.mubr.bf16.gmra.mrb[0].mxu0 %v3016
      %v3447 = vpop.f32.mrb[0].mxu0
      %v3448 = vadd.f32 %v3216, %v3447
      %v3449 = vpop.f32.mrb[0].mxu0
      %v3450 = vpop.f32.mrb[0].mxu0
      %v3451 = vadd.f32 %v3216, %v3450
      %v3452 = vpop.f32.mrb[0].mxu0
      %3453 = vmatprep.mubr.bf16.mxu0 %v3147
      %3454 = vmatmul.mubr.bf16.gmra.mrb[0].mxu0 %v3019
      %v3455 = vpop.f32.mrb[0].mxu0
      %v3456 = vadd.f32 %v3216, %v3455
      %v3457 = vpop.f32.mrb[0].mxu0
      %v3458 = vpop.f32.mrb[0].mxu0
      %v3459 = vadd.f32 %v3216, %v3458
      %v3460 = vpop.f32.mrb[0].mxu0
      %3461 = vmatprep.mubr.bf16.mxu0 %v3150
      %3462 = vmatmul.mubr.bf16.gmra.mrb[0].mxu0 %v3022
      %v3463 = vpop.f32.mrb[0].mxu0
      %v3464 = vadd.f32 %v3216, %v3463
      %v3465 = vpop.f32.mrb[0].mxu0
      %v3466 = vpop.f32.mrb[0].mxu0
      %v3467 = vadd.f32 %v3216, %v3466
      %v3468 = vpop.f32.mrb[0].mxu0
      %3469 = vmatprep.mubr.bf16.mxu0 %v3153
      %3470 = vmatmul.mubr.bf16.gmra.mrb[0].mxu0 %v3025
      %v3471 = vpop.f32.mrb[0].mxu0
      %v3472 = vadd.f32 %v3216, %v3471
      %v3473 = vpop.f32.mrb[0].mxu0
      %v3474 = vpop.f32.mrb[0].mxu0
      %v3475 = vadd.f32 %v3216, %v3474
      %v3476 = vpop.f32.mrb[0].mxu0
      %3477 = vmatprep.mubr.bf16.mxu0 %v3156
      %3478 = vmatmul.mubr.bf16.gmra.mrb[0].mxu0 %v3028
      %v3479 = vpop.f32.mrb[0].mxu0
      %v3480 = vadd.f32 %v3216, %v3479
      %v3481 = vpop.f32.mrb[0].mxu0
      %v3482 = vpop.f32.mrb[0].mxu0
      %v3483 = vadd.f32 %v3216, %v3482
      %v3484 = vpop.f32.mrb[0].mxu0
      %3485 = vmatprep.mubr.bf16.mxu0 %v3159
      %3486 = vmatmul.mubr.bf16.gmra.mrb[0].mxu0 %v3031
      %v3487 = vpop.f32.mrb[0].mxu0
      %v3488 = vadd.f32 %v3216, %v3487
      %v3489 = vpop.f32.mrb[0].mxu0
      %v3490 = vpop.f32.mrb[0].mxu0
      %v3491 = vadd.f32 %v3216, %v3490
      %v3492 = vpop.f32.mrb[0].mxu0
      %3493 = vmatprep.mubr.bf16.mxu0 %v3162
      %3494 = vmatmul.mubr.bf16.gmra.mrb[0].mxu0 %v3034
      %v3495 = vpop.f32.mrb[0].mxu0
      %v3496 = vadd.f32 %v3216, %v3495
      %v3497 = vpop.f32.mrb[0].mxu0
      %v3498 = vpop.f32.mrb[0].mxu0
      %v3499 = vadd.f32 %v3216, %v3498
      %v3500 = vpop.f32.mrb[0].mxu0
      %3501 = vmatprep.mubr.bf16.mxu0 %v3165
      %3502 = vmatmul.mubr.bf16.gmra.mrb[0].mxu0 %v3037
      %v3503 = vpop.f32.mrb[0].mxu0
      %v3504 = vadd.f32 %v3216, %v3503
      %v3505 = vpop.f32.mrb[0].mxu0
      %v3506 = vpop.f32.mrb[0].mxu0
      %v3507 = vadd.f32 %v3216, %v3506
      %v3508 = vpop.f32.mrb[0].mxu0
      %3509 = vmatprep.mubr.bf16.mxu0 %v3168
      %3510 = vmatmul.mubr.bf16.gmra.mrb[0].mxu0 %v3040
      %v3511 = vpop.f32.mrb[0].mxu0
      %v3512 = vadd.f32 %v3216, %v3511
      %v3513 = vpop.f32.mrb[0].mxu0
      %v3514 = vpop.f32.mrb[0].mxu0
      %v3515 = vadd.f32 %v3216, %v3514
      %v3516 = vpop.f32.mrb[0].mxu0
      %3517 = vmatprep.mubr.bf16.mxu0 %v3171
      %3518 = vmatmul.mubr.bf16.gmra.mrb[0].mxu0 %v3043
      %v3519 = vpop.f32.mrb[0].mxu0
      %v3520 = vadd.f32 %v3216, %v3519
      %v3521 = vpop.f32.mrb[0].mxu0
      %v3522 = vpop.f32.mrb[0].mxu0
      %v3523 = vadd.f32 %v3216, %v3522
      %v3524 = vpop.f32.mrb[0].mxu0
      %3525 = vmatprep.mubr.bf16.mxu0 %v3174
      %3526 = vmatmul.mubr.bf16.gmra.mrb[0].mxu0 %v3046
      %v3527 = vpop.f32.mrb[0].mxu0
      %v3528 = vadd.f32 %v3216, %v3527
      %v3529 = vpop.f32.mrb[0].mxu0
      %v3530 = vpop.f32.mrb[0].mxu0
      %v3531 = vadd.f32 %v3216, %v3530
      %v3532 = vpop.f32.mrb[0].mxu0
      %3533 = vdwg.mxu0
      %3534 = vmatprep.subr.bf16.mxu0 0
      %3535 = vmatpush1.bf16.msra.mxu0 %v3305
      %3536 = vmatprep.subr.bf16.mxu0 0
      %3537 = vmatpush1.bf16.msra.mxu0 %v3306
      %3538 = vmatprep.subr.bf16.mxu0 0
      %3539 = vmatpush1.bf16.msra.mxu0 0
      %3540 = vmatprep.subr.bf16.mxu0 0
      %3541 = vmatpush1.bf16.msra.mxu0 0
      %3542 = vmatprep.subr.bf16.mxu0 0
      %3543 = vmatpush1.bf16.msra.mxu0 0
      %3544 = vmatprep.subr.bf16.mxu0 0
      %3545 = vmatpush1.bf16.msra.mxu0 0
      %3546 = vmatprep.subr.bf16.mxu0 0
      %3547 = vmatpush1.bf16.msra.mxu0 0
      %3548 = vmatprep.subr.bf16.mxu0 0
      %3549 = vmatpush1.bf16.msra.mxu0 0
      %3550 = vmatprep.subr.bf16.mxu0 0
      %3551 = vmatpush1.bf16.msra.mxu0 0
      %3552 = vmatprep.subr.bf16.mxu0 0
      %3553 = vmatpush1.bf16.msra.mxu0 0
      %3554 = vmatprep.subr.bf16.mxu0 0
      %3555 = vmatpush1.bf16.msra.mxu0 0
      %3556 = vmatprep.subr.bf16.mxu0 0
      %3557 = vmatpush1.bf16.msra.mxu0 0
      %3558 = vmatprep.subr.bf16.mxu0 0
      %3559 = vmatpush1.bf16.msra.mxu0 0
      %3560 = vmatprep.subr.bf16.mxu0 0
      %3561 = vmatpush1.bf16.msra.mxu0 0
      %3562 = vmatprep.subr.bf16.mxu0 0
      %3563 = vmatpush1.bf16.msra.mxu0 0
      %3564 = vmatprep.subr.bf16.mxu0 0
      %3565 = vmatpush1.bf16.msra.mxu0 0
      %3566 = vmatprep.mubr.bf16.mxu0 0
      %3567 = vmatmul.mubr.bf16.gmra.mrb[0].mxu0 %v3326
      %v3568 = vpop.f32.mrb[0].mxu0
      %v3569 = vadd.f32 %v3408, %v3568
      %v3570 = vpop.f32.mrb[0].mxu0
      %v3571 = vpop.f32.mrb[0].mxu0
      %v3572 = vadd.f32 %v3411, %v3571
      %v3573 = vpop.f32.mrb[0].mxu0
      %3574 = vmatprep.mubr.bf16.mxu0 0
      %3575 = vmatmul.mubr.bf16.gmra.mrb[0].mxu0 %v3329
      %v3576 = vpop.f32.mrb[0].mxu0
      %v3577 = vadd.f32 %v3416, %v3576
      %v3578 = vpop.f32.mrb[0].mxu0
      %v3579 = vpop.f32.mrb[0].mxu0
      %v3580 = vadd.f32 %v3419, %v3579
      %v3581 = vpop.f32.mrb[0].mxu0
      %3582 = vmatprep.mubr.bf16.mxu0 0
      %3583 = vmatmul.mubr.bf16.gmra.mrb[0].mxu0 %v3332
      %v3584 = vpop.f32.mrb[0].mxu0
      %v3585 = vadd.f32 %v3424, %v3584
      %v3586 = vpop.f32.mrb[0].mxu0
      %v3587 = vpop.f32.mrb[0].mxu0
      %v3588 = vadd.f32 %v3427, %v3587
      %v3589 = vpop.f32.mrb[0].mxu0
      %3590 = vmatprep.mubr.bf16.mxu0 0
      %3591 = vmatmul.mubr.bf16.gmra.mrb[0].mxu0 %v3335
      %v3592 = vpop.f32.mrb[0].mxu0
      %v3593 = vadd.f32 %v3432, %v3592
      %v3594 = vpop.f32.mrb[0].mxu0
      %v3595 = vpop.f32.mrb[0].mxu0
      %v3596 = vadd.f32 %v3435, %v3595
      %v3597 = vpop.f32.mrb[0].mxu0
      %3598 = vmatprep.mubr.bf16.mxu0 0
      %3599 = vmatmul.mubr.bf16.gmra.mrb[0].mxu0 %v3338
      %v3600 = vpop.f32.mrb[0].mxu0
      %v3601 = vadd.f32 %v3440, %v3600
      %v3602 = vpop.f32.mrb[0].mxu0
      %v3603 = vpop.f32.mrb[0].mxu0
      %v3604 = vadd.f32 %v3443, %v3603
      %v3605 = vpop.f32.mrb[0].mxu0
      %3606 = vmatprep.mubr.bf16.mxu0 0
      %3607 = vmatmul.mubr.bf16.gmra.mrb[0].mxu0 %v3341
      %v3608 = vpop.f32.mrb[0].mxu0
      %v3609 = vadd.f32 %v3448, %v3608
      %v3610 = vpop.f32.mrb[0].mxu0
      %v3611 = vpop.f32.mrb[0].mxu0
      %v3612 = vadd.f32 %v3451, %v3611
      %v3613 = vpop.f32.mrb[0].mxu0
      %3614 = vmatprep.mubr.bf16.mxu0 0
      %3615 = vmatmul.mubr.bf16.gmra.mrb[0].mxu0 %v3344
      %v3616 = vpop.f32.mrb[0].mxu0
      %v3617 = vadd.f32 %v3456, %v3616
      %v3618 = vpop.f32.mrb[0].mxu0
      %v3619 = vpop.f32.mrb[0].mxu0
      %v3620 = vadd.f32 %v3459, %v3619
      %v3621 = vpop.f32.mrb[0].mxu0
      %3622 = vmatprep.mubr.bf16.mxu0 0
      %3623 = vmatmul.mubr.bf16.gmra.mrb[0].mxu0 %v3347
      %v3624 = vpop.f32.mrb[0].mxu0
      %v3625 = vadd.f32 %v3464, %v3624
      %v3626 = vpop.f32.mrb[0].mxu0
      %v3627 = vpop.f32.mrb[0].mxu0
      %v3628 = vadd.f32 %v3467, %v3627
      %v3629 = vpop.f32.mrb[0].mxu0
      %3630 = vmatprep.mubr.bf16.mxu0 0
      %3631 = vmatmul.mubr.bf16.gmra.mrb[0].mxu0 %v3350
      %v3632 = vpop.f32.mrb[0].mxu0
      %v3633 = vadd.f32 %v3472, %v3632
      %v3634 = vpop.f32.mrb[0].mxu0
      %v3635 = vpop.f32.mrb[0].mxu0
      %v3636 = vadd.f32 %v3475, %v3635
      %v3637 = vpop.f32.mrb[0].mxu0
      %3638 = vmatprep.mubr.bf16.mxu0 0
      %3639 = vmatmul.mubr.bf16.gmra.mrb[0].mxu0 %v3353
      %v3640 = vpop.f32.mrb[0].mxu0
      %v3641 = vadd.f32 %v3480, %v3640
      %v3642 = vpop.f32.mrb[0].mxu0
      %v3643 = vpop.f32.mrb[0].mxu0
      %v3644 = vadd.f32 %v3483, %v3643
      %v3645 = vpop.f32.mrb[0].mxu0
      %3646 = vmatprep.mubr.bf16.mxu0 0
      %3647 = vmatmul.mubr.bf16.gmra.mrb[0].mxu0 %v3356
      %v3648 = vpop.f32.mrb[0].mxu0
      %v3649 = vadd.f32 %v3488, %v3648
      %v3650 = vpop.f32.mrb[0].mxu0
      %v3651 = vpop.f32.mrb[0].mxu0
      %v3652 = vadd.f32 %v3491, %v3651
      %v3653 = vpop.f32.mrb[0].mxu0
      %3654 = vmatprep.mubr.bf16.mxu0 0
      %3655 = vmatmul.mubr.bf16.gmra.mrb[0].mxu0 %v3359
      %v3656 = vpop.f32.mrb[0].mxu0
      %v3657 = vadd.f32 %v3496, %v3656
      %v3658 = vpop.f32.mrb[0].mxu0
      %v3659 = vpop.f32.mrb[0].mxu0
      %v3660 = vadd.f32 %v3499, %v3659
      %v3661 = vpop.f32.mrb[0].mxu0
      %3662 = vmatprep.mubr.bf16.mxu0 0
      %3663 = vmatmul.mubr.bf16.gmra.mrb[0].mxu0 %v3362
      %v3664 = vpop.f32.mrb[0].mxu0
      %v3665 = vadd.f32 %v3504, %v3664
      %v3666 = vpop.f32.mrb[0].mxu0
      %v3667 = vpop.f32.mrb[0].mxu0
      %v3668 = vadd.f32 %v3507, %v3667
      %v3669 = vpop.f32.mrb[0].mxu0
      %3670 = vmatprep.mubr.bf16.mxu0 0
      %3671 = vmatmul.mubr.bf16.gmra.mrb[0].mxu0 %v3365
      %v3672 = vpop.f32.mrb[0].mxu0
      %v3673 = vadd.f32 %v3512, %v3672
      %v3674 = vpop.f32.mrb[0].mxu0
      %v3675 = vpop.f32.mrb[0].mxu0
      %v3676 = vadd.f32 %v3515, %v3675
      %v3677 = vpop.f32.mrb[0].mxu0
      %3678 = vmatprep.mubr.bf16.mxu0 0
      %3679 = vmatmul.mubr.bf16.gmra.mrb[0].mxu0 %v3368
      %v3680 = vpop.f32.mrb[0].mxu0
      %v3681 = vadd.f32 %v3520, %v3680
      %v3682 = vpop.f32.mrb[0].mxu0
      %v3683 = vpop.f32.mrb[0].mxu0
      %v3684 = vadd.f32 %v3523, %v3683
      %v3685 = vpop.f32.mrb[0].mxu0
      %3686 = vmatprep.mubr.bf16.mxu0 0
      %3687 = vmatmul.mubr.bf16.gmra.mrb[0].mxu0 %v3371
      %v3688 = vpop.f32.mrb[0].mxu0
      %v3689 = vadd.f32 %v3528, %v3688
      %v3690 = vpop.f32.mrb[0].mxu0
      %v3691 = vpop.f32.mrb[0].mxu0
      %v3692 = vadd.f32 %v3531, %v3691
      %v3693 = vpop.f32.mrb[0].mxu0
      %3694 = vdwg.mxu0
      %v3695 = vmax.f32 %v3569, 0.0
      %v3696 = vmax.f32 %v3572, 0.0
      %v3697 = vmax.f32 %v3577, 0.0
      %v3698 = vmax.f32 %v3580, 0.0
      %v3699 = vmax.f32 %v3585, 0.0
      %v3700 = vmax.f32 %v3588, 0.0
      %v3701 = vmax.f32 %v3593, 0.0
      %v3702 = vmax.f32 %v3596, 0.0
      %v3703 = vmax.f32 %v3601, 0.0
      %v3704 = vmax.f32 %v3604, 0.0
      %v3705 = vmax.f32 %v3609, 0.0
      %v3706 = vmax.f32 %v3612, 0.0
      %v3707 = vmax.f32 %v3617, 0.0
      %v3708 = vmax.f32 %v3620, 0.0
      %v3709 = vmax.f32 %v3625, 0.0
      %v3710 = vmax.f32 %v3628, 0.0
      %v3711 = vmax.f32 %v3633, 0.0
      %v3712 = vmax.f32 %v3636, 0.0
      %v3713 = vmax.f32 %v3641, 0.0
      %v3714 = vmax.f32 %v3644, 0.0
      %v3715 = vmax.f32 %v3649, 0.0
      %v3716 = vmax.f32 %v3652, 0.0
      %v3717 = vmax.f32 %v3657, 0.0
      %v3718 = vmax.f32 %v3660, 0.0
      %v3719 = vmax.f32 %v3665, 0.0
      %v3720 = vmax.f32 %v3668, 0.0
      %v3721 = vmax.f32 %v3673, 0.0
      %v3722 = vmax.f32 %v3676, 0.0
      %v3723 = vmax.f32 %v3681, 0.0
      %v3724 = vmax.f32 %v3684, 0.0
      %v3725 = vmax.f32 %v3689, 0.0
      %v3726 = vmax.f32 %v3692, 0.0
      %v3727 = vpack.c.bf16 %v3696, %v3695
      %v3728 = vpack.c.bf16 %v3698, %v3697
      %v3729 = vpack.c.bf16 %v3700, %v3699
      %v3730 = vpack.c.bf16 %v3702, %v3701
      %v3731 = vpack.c.bf16 %v3704, %v3703
      %v3732 = vpack.c.bf16 %v3706, %v3705
      %v3733 = vpack.c.bf16 %v3708, %v3707
      %v3734 = vpack.c.bf16 %v3710, %v3709
      %v3735 = vpack.c.bf16 %v3712, %v3711
      %v3736 = vpack.c.bf16 %v3714, %v3713
      %v3737 = vpack.c.bf16 %v3716, %v3715
      %v3738 = vpack.c.bf16 %v3718, %v3717
      %v3739 = vpack.c.bf16 %v3720, %v3719
      %v3740 = vpack.c.bf16 %v3722, %v3721
      %v3741 = vpack.c.bf16 %v3724, %v3723
      %v3742 = vpack.c.bf16 %v3726, %v3725
      %v3743 = vld [vmem:[%s3] sm:$0xf]
      %v3744 = vld [vmem:[%s3 + $0x4] sm:$0xf]
      %v3745 = vld [vmem:[%s3 + $0x8] sm:$0xf]
      %v3746 = vld [vmem:[%s3 + $0xc] sm:$0xf]
      %v3747 = vld [vmem:[%s5] sm:$0x1]
      %v3749 = vlaneseq
      %v3750 = vshrl.u32 %v3749, 7
      %v3751 = vsub.s32 0, %v3750
      %v3752 = vrot.slane %v3747, %v3751
      %v3758 = vunpack.c.l.b16 %v3743
      %v3759 = vunpack.c.l.b16 %v3744
      %v3760 = vunpack.c.l.b16 %v3745
      %v3761 = vunpack.c.l.b16 %v3746
      %v3762 = vpack.c.b16 %v3759, %v3758
      %v3763 = vpack.c.b16 %v3761, %v3760
      %v3767 = vsel %vm2933, %v3727, 0
      %v3770 = vsel %vm2933, %v3728, 0
      %v3773 = vsel %vm2933, %v3729, 0
      %v3776 = vsel %vm2933, %v3730, 0
      %v3779 = vsel %vm2933, %v3731, 0
      %v3782 = vsel %vm2933, %v3732, 0
      %v3785 = vsel %vm2933, %v3733, 0
      %v3788 = vsel %vm2933, %v3734, 0
      %v3791 = vsel %vm2933, %v3735, 0
      %v3794 = vsel %vm2933, %v3736, 0
      %v3797 = vsel %vm2933, %v3737, 0
      %v3800 = vsel %vm2933, %v3738, 0
      %v3803 = vsel %vm2933, %v3739, 0
      %v3806 = vsel %vm2933, %v3740, 0
      %v3809 = vsel %vm2933, %v3741, 0
      %v3812 = vsel %vm2933, %v3742, 0
      %3814 = vmatprep.subr.bf16.mxu0 0
      %3815 = vmatpush1.bf16.msra.mxu0 %v3762
      %3816 = vmatprep.subr.bf16.mxu0 0
      %3817 = vmatpush1.bf16.msra.mxu0 %v3763
      %3818 = vmatprep.subr.bf16.mxu0 0
      %3819 = vmatpush1.bf16.msra.mxu0 0
      %3820 = vmatprep.subr.bf16.mxu0 0
      %3821 = vmatpush1.bf16.msra.mxu0 0
      %3822 = vmatprep.subr.bf16.mxu0 0
      %3823 = vmatpush1.bf16.msra.mxu0 0
      %3824 = vmatprep.subr.bf16.mxu0 0
      %3825 = vmatpush1.bf16.msra.mxu0 0
      %3826 = vmatprep.subr.bf16.mxu0 0
      %3827 = vmatpush1.bf16.msra.mxu0 0
      %3828 = vmatprep.subr.bf16.mxu0 0
      %3829 = vmatpush1.bf16.msra.mxu0 0
      %3830 = vmatprep.subr.bf16.mxu0 0
      %3831 = vmatpush1.bf16.msra.mxu0 0
      %3832 = vmatprep.subr.bf16.mxu0 0
      %3833 = vmatpush1.bf16.msra.mxu0 0
      %3834 = vmatprep.subr.bf16.mxu0 0
      %3835 = vmatpush1.bf16.msra.mxu0 0
      %3836 = vmatprep.subr.bf16.mxu0 0
      %3837 = vmatpush1.bf16.msra.mxu0 0
      %3838 = vmatprep.subr.bf16.mxu0 0
      %3839 = vmatpush1.bf16.msra.mxu0 0
      %3840 = vmatprep.subr.bf16.mxu0 0
      %3841 = vmatpush1.bf16.msra.mxu0 0
      %3842 = vmatprep.subr.bf16.mxu0 0
      %3843 = vmatpush1.bf16.msra.mxu0 0
      %3844 = vmatprep.subr.bf16.mxu0 0
      %3845 = vmatpush1.bf16.msra.mxu0 0
      %3846 = vmatprep.mubr.bf16.mxu0 0
      %3847 = vmatmul.mubr.bf16.gmra.mrb[0].mxu0 %v3767
      %v3848 = vpop.f32.mrb[0].mxu0
      %v3849 = vadd.f32 %v3752, %v3848
      %v3850 = vpop.f32.mrb[0].mxu0
      %v3851 = vpop.f32.mrb[0].mxu0
      %v3852 = vadd.f32 %v3752, %v3851
      %v3853 = vpop.f32.mrb[0].mxu0
      %3854 = vmatprep.mubr.bf16.mxu0 0
      %3855 = vmatmul.mubr.bf16.gmra.mrb[0].mxu0 %v3770
      %v3856 = vpop.f32.mrb[0].mxu0
      %v3857 = vadd.f32 %v3752, %v3856
      %v3858 = vpop.f32.mrb[0].mxu0
      %v3859 = vpop.f32.mrb[0].mxu0
      %v3860 = vadd.f32 %v3752, %v3859
      %v3861 = vpop.f32.mrb[0].mxu0
      %3862 = vmatprep.mubr.bf16.mxu0 0
      %3863 = vmatmul.mubr.bf16.gmra.mrb[0].mxu0 %v3773
      %v3864 = vpop.f32.mrb[0].mxu0
      %v3865 = vadd.f32 %v3752, %v3864
      %v3866 = vpop.f32.mrb[0].mxu0
      %v3867 = vpop.f32.mrb[0].mxu0
      %v3868 = vadd.f32 %v3752, %v3867
      %v3869 = vpop.f32.mrb[0].mxu0
      %3870 = vmatprep.mubr.bf16.mxu0 0
      %3871 = vmatmul.mubr.bf16.gmra.mrb[0].mxu0 %v3776
      %v3872 = vpop.f32.mrb[0].mxu0
      %v3873 = vadd.f32 %v3752, %v3872
      %v3874 = vpop.f32.mrb[0].mxu0
      %v3875 = vpop.f32.mrb[0].mxu0
      %v3876 = vadd.f32 %v3752, %v3875
      %v3877 = vpop.f32.mrb[0].mxu0
      %3878 = vmatprep.mubr.bf16.mxu0 0
      %3879 = vmatmul.mubr.bf16.gmra.mrb[0].mxu0 %v3779
      %v3880 = vpop.f32.mrb[0].mxu0
      %v3881 = vadd.f32 %v3752, %v3880
      %v3882 = vpop.f32.mrb[0].mxu0
      %v3883 = vpop.f32.mrb[0].mxu0
      %v3884 = vadd.f32 %v3752, %v3883
      %v3885 = vpop.f32.mrb[0].mxu0
      %3886 = vmatprep.mubr.bf16.mxu0 0
      %3887 = vmatmul.mubr.bf16.gmra.mrb[0].mxu0 %v3782
      %v3888 = vpop.f32.mrb[0].mxu0
      %v3889 = vadd.f32 %v3752, %v3888
      %v3890 = vpop.f32.mrb[0].mxu0
      %v3891 = vpop.f32.mrb[0].mxu0
      %v3892 = vadd.f32 %v3752, %v3891
      %v3893 = vpop.f32.mrb[0].mxu0
      %3894 = vmatprep.mubr.bf16.mxu0 0
      %3895 = vmatmul.mubr.bf16.gmra.mrb[0].mxu0 %v3785
      %v3896 = vpop.f32.mrb[0].mxu0
      %v3897 = vadd.f32 %v3752, %v3896
      %v3898 = vpop.f32.mrb[0].mxu0
      %v3899 = vpop.f32.mrb[0].mxu0
      %v3900 = vadd.f32 %v3752, %v3899
      %v3901 = vpop.f32.mrb[0].mxu0
      %3902 = vmatprep.mubr.bf16.mxu0 0
      %3903 = vmatmul.mubr.bf16.gmra.mrb[0].mxu0 %v3788
      %v3904 = vpop.f32.mrb[0].mxu0
      %v3905 = vadd.f32 %v3752, %v3904
      %v3906 = vpop.f32.mrb[0].mxu0
      %v3907 = vpop.f32.mrb[0].mxu0
      %v3908 = vadd.f32 %v3752, %v3907
      %v3909 = vpop.f32.mrb[0].mxu0
      %3910 = vmatprep.mubr.bf16.mxu0 0
      %3911 = vmatmul.mubr.bf16.gmra.mrb[0].mxu0 %v3791
      %v3912 = vpop.f32.mrb[0].mxu0
      %v3913 = vadd.f32 %v3752, %v3912
      %v3914 = vpop.f32.mrb[0].mxu0
      %v3915 = vpop.f32.mrb[0].mxu0
      %v3916 = vadd.f32 %v3752, %v3915
      %v3917 = vpop.f32.mrb[0].mxu0
      %3918 = vmatprep.mubr.bf16.mxu0 0
      %3919 = vmatmul.mubr.bf16.gmra.mrb[0].mxu0 %v3794
      %v3920 = vpop.f32.mrb[0].mxu0
      %v3921 = vadd.f32 %v3752, %v3920
      %v3922 = vpop.f32.mrb[0].mxu0
      %v3923 = vpop.f32.mrb[0].mxu0
      %v3924 = vadd.f32 %v3752, %v3923
      %v3925 = vpop.f32.mrb[0].mxu0
      %3926 = vmatprep.mubr.bf16.mxu0 0
      %3927 = vmatmul.mubr.bf16.gmra.mrb[0].mxu0 %v3797
      %v3928 = vpop.f32.mrb[0].mxu0
      %v3929 = vadd.f32 %v3752, %v3928
      %v3930 = vpop.f32.mrb[0].mxu0
      %v3931 = vpop.f32.mrb[0].mxu0
      %v3932 = vadd.f32 %v3752, %v3931
      %v3933 = vpop.f32.mrb[0].mxu0
      %3934 = vmatprep.mubr.bf16.mxu0 0
      %3935 = vmatmul.mubr.bf16.gmra.mrb[0].mxu0 %v3800
      %v3936 = vpop.f32.mrb[0].mxu0
      %v3937 = vadd.f32 %v3752, %v3936
      %v3938 = vpop.f32.mrb[0].mxu0
      %v3939 = vpop.f32.mrb[0].mxu0
      %v3940 = vadd.f32 %v3752, %v3939
      %v3941 = vpop.f32.mrb[0].mxu0
      %3942 = vmatprep.mubr.bf16.mxu0 0
      %3943 = vmatmul.mubr.bf16.gmra.mrb[0].mxu0 %v3803
      %v3944 = vpop.f32.mrb[0].mxu0
      %v3945 = vadd.f32 %v3752, %v3944
      %v3946 = vpop.f32.mrb[0].mxu0
      %v3947 = vpop.f32.mrb[0].mxu0
      %v3948 = vadd.f32 %v3752, %v3947
      %v3949 = vpop.f32.mrb[0].mxu0
      %3950 = vmatprep.mubr.bf16.mxu0 0
      %3951 = vmatmul.mubr.bf16.gmra.mrb[0].mxu0 %v3806
      %v3952 = vpop.f32.mrb[0].mxu0
      %v3953 = vadd.f32 %v3752, %v3952
      %v3954 = vpop.f32.mrb[0].mxu0
      %v3955 = vpop.f32.mrb[0].mxu0
      %v3956 = vadd.f32 %v3752, %v3955
      %v3957 = vpop.f32.mrb[0].mxu0
      %3958 = vmatprep.mubr.bf16.mxu0 0
      %3959 = vmatmul.mubr.bf16.gmra.mrb[0].mxu0 %v3809
      %v3960 = vpop.f32.mrb[0].mxu0
      %v3961 = vadd.f32 %v3752, %v3960
      %v3962 = vpop.f32.mrb[0].mxu0
      %v3963 = vpop.f32.mrb[0].mxu0
      %v3964 = vadd.f32 %v3752, %v3963
      %v3965 = vpop.f32.mrb[0].mxu0
      %3966 = vmatprep.mubr.bf16.mxu0 0
      %3967 = vmatmul.mubr.bf16.gmra.mrb[0].mxu0 %v3812
      %v3968 = vpop.f32.mrb[0].mxu0
      %v3969 = vadd.f32 %v3752, %v3968
      %v3970 = vpop.f32.mrb[0].mxu0
      %v3971 = vpop.f32.mrb[0].mxu0
      %v3972 = vadd.f32 %v3752, %v3971
      %v3973 = vpop.f32.mrb[0].mxu0
      %3974 = vdwg.mxu0
      %v3975 = vunpack.c.l.bf16 %v253
      %v3976 = vunpack.c.l.bf16 %v254
      %v3977 = vunpack.c.l.bf16 %v255
      %v3978 = vunpack.c.l.bf16 %v256
      %v3979 = vunpack.c.l.bf16 %v257
      %v3980 = vunpack.c.l.bf16 %v258
      %v3981 = vunpack.c.l.bf16 %v259
      %v3982 = vunpack.c.l.bf16 %v260
      %v3983 = vunpack.c.l.bf16 %v261
      %v3984 = vunpack.c.l.bf16 %v262
      %v3985 = vunpack.c.l.bf16 %v263
      %v3986 = vunpack.c.l.bf16 %v264
      %v3987 = vunpack.c.l.bf16 %v265
      %v3988 = vunpack.c.l.bf16 %v266
      %v3989 = vunpack.c.l.bf16 %v267
      %v3990 = vunpack.c.l.bf16 %v268
      %v3991 = vunpack.c.l.bf16 %v269
      %v3992 = vunpack.c.l.bf16 %v270
      %v3993 = vunpack.c.l.bf16 %v271
      %v3994 = vunpack.c.l.bf16 %v272
      %v3995 = vunpack.c.l.bf16 %v273
      %v3996 = vunpack.c.l.bf16 %v274
      %v3997 = vunpack.c.l.bf16 %v275
      %v3998 = vunpack.c.l.bf16 %v276
      %v3999 = vunpack.c.l.bf16 %v277
      %v4000 = vunpack.c.l.bf16 %v278
      %v4001 = vunpack.c.l.bf16 %v279
      %v4002 = vunpack.c.l.bf16 %v280
      %v4003 = vunpack.c.l.bf16 %v281
      %v4004 = vunpack.c.l.bf16 %v282
      %v4005 = vunpack.c.l.bf16 %v283
      %v4006 = vunpack.c.l.bf16 %v284
      %v4007 = vadd.f32 %v3849, %v3975
      %v4008 = vadd.f32 %v3852, %v3976
      %v4009 = vadd.f32 %v3857, %v3977
      %v4010 = vadd.f32 %v3860, %v3978
      %v4011 = vadd.f32 %v3865, %v3979
      %v4012 = vadd.f32 %v3868, %v3980
      %v4013 = vadd.f32 %v3873, %v3981
      %v4014 = vadd.f32 %v3876, %v3982
      %v4015 = vadd.f32 %v3881, %v3983
      %v4016 = vadd.f32 %v3884, %v3984
      %v4017 = vadd.f32 %v3889, %v3985
      %v4018 = vadd.f32 %v3892, %v3986
      %v4019 = vadd.f32 %v3897, %v3987
      %v4020 = vadd.f32 %v3900, %v3988
      %v4021 = vadd.f32 %v3905, %v3989
      %v4022 = vadd.f32 %v3908, %v3990
      %v4023 = vadd.f32 %v3913, %v3991
      %v4024 = vadd.f32 %v3916, %v3992
      %v4025 = vadd.f32 %v3921, %v3993
      %v4026 = vadd.f32 %v3924, %v3994
      %v4027 = vadd.f32 %v3929, %v3995
      %v4028 = vadd.f32 %v3932, %v3996
      %v4029 = vadd.f32 %v3937, %v3997
      %v4030 = vadd.f32 %v3940, %v3998
      %v4031 = vadd.f32 %v3945, %v3999
      %v4032 = vadd.f32 %v3948, %v4000
      %v4033 = vadd.f32 %v3953, %v4001
      %v4034 = vadd.f32 %v3956, %v4002
      %v4035 = vadd.f32 %v3961, %v4003
      %v4036 = vadd.f32 %v3964, %v4004
      %v4037 = vadd.f32 %v3969, %v4005
      %v4038 = vadd.f32 %v3972, %v4006
      %v4039 = vmax.f32 %v4007, 0.0
      %v4040 = vmax.f32 %v4008, 0.0
      %v4041 = vmax.f32 %v4009, 0.0
      %v4042 = vmax.f32 %v4010, 0.0
      %v4043 = vmax.f32 %v4011, 0.0
      %v4044 = vmax.f32 %v4012, 0.0
      %v4045 = vmax.f32 %v4013, 0.0
      %v4046 = vmax.f32 %v4014, 0.0
      %v4047 = vmax.f32 %v4015, 0.0
      %v4048 = vmax.f32 %v4016, 0.0
      %v4049 = vmax.f32 %v4017, 0.0
      %v4050 = vmax.f32 %v4018, 0.0
      %v4051 = vmax.f32 %v4019, 0.0
      %v4052 = vmax.f32 %v4020, 0.0
      %v4053 = vmax.f32 %v4021, 0.0
      %v4054 = vmax.f32 %v4022, 0.0
      %v4055 = vmax.f32 %v4023, 0.0
      %v4056 = vmax.f32 %v4024, 0.0
      %v4057 = vmax.f32 %v4025, 0.0
      %v4058 = vmax.f32 %v4026, 0.0
      %v4059 = vmax.f32 %v4027, 0.0
      %v4060 = vmax.f32 %v4028, 0.0
      %v4061 = vmax.f32 %v4029, 0.0
      %v4062 = vmax.f32 %v4030, 0.0
      %v4063 = vmax.f32 %v4031, 0.0
      %v4064 = vmax.f32 %v4032, 0.0
      %v4065 = vmax.f32 %v4033, 0.0
      %v4066 = vmax.f32 %v4034, 0.0
      %v4067 = vmax.f32 %v4035, 0.0
      %v4068 = vmax.f32 %v4036, 0.0
      %v4069 = vmax.f32 %v4037, 0.0
      %v4070 = vmax.f32 %v4038, 0.0
      %v4071 = vpack.c.bf16 %v4040, %v4039
      %v4072 = vpack.c.bf16 %v4042, %v4041
      %v4073 = vpack.c.bf16 %v4044, %v4043
      %v4074 = vpack.c.bf16 %v4046, %v4045
      %v4075 = vpack.c.bf16 %v4048, %v4047
      %v4076 = vpack.c.bf16 %v4050, %v4049
      %v4077 = vpack.c.bf16 %v4052, %v4051
      %v4078 = vpack.c.bf16 %v4054, %v4053
      %v4079 = vpack.c.bf16 %v4056, %v4055
      %v4080 = vpack.c.bf16 %v4058, %v4057
      %v4081 = vpack.c.bf16 %v4060, %v4059
      %v4082 = vpack.c.bf16 %v4062, %v4061
      %v4083 = vpack.c.bf16 %v4064, %v4063
      %v4084 = vpack.c.bf16 %v4066, %v4065
      %v4085 = vpack.c.bf16 %v4068, %v4067
      %v4086 = vpack.c.bf16 %v4070, %v4069
      %v4103 = vunpack.c.l.b16 %v4071
      %v4104 = vunpack.c.h.b16 %v4071
      %v4105 = vunpack.c.l.b16 %v4072
      %v4106 = vunpack.c.h.b16 %v4072
      %v4107 = vunpack.c.l.b16 %v4073
      %v4108 = vunpack.c.h.b16 %v4073
      %v4109 = vunpack.c.l.b16 %v4074
      %v4110 = vunpack.c.h.b16 %v4074
      %v4111 = vunpack.c.l.b16 %v4075
      %v4112 = vunpack.c.h.b16 %v4075
      %v4113 = vunpack.c.l.b16 %v4076
      %v4114 = vunpack.c.h.b16 %v4076
      %v4115 = vunpack.c.l.b16 %v4077
      %v4116 = vunpack.c.h.b16 %v4077
      %v4117 = vunpack.c.l.b16 %v4078
      %v4118 = vunpack.c.h.b16 %v4078
      %v4119 = vunpack.c.l.b16 %v4079
      %v4120 = vunpack.c.h.b16 %v4079
      %v4121 = vunpack.c.l.b16 %v4080
      %v4122 = vunpack.c.h.b16 %v4080
      %v4123 = vunpack.c.l.b16 %v4081
      %v4124 = vunpack.c.h.b16 %v4081
      %v4125 = vunpack.c.l.b16 %v4082
      %v4126 = vunpack.c.h.b16 %v4082
      %v4127 = vunpack.c.l.b16 %v4083
      %v4128 = vunpack.c.h.b16 %v4083
      %v4129 = vunpack.c.l.b16 %v4084
      %v4130 = vunpack.c.h.b16 %v4084
      %v4131 = vunpack.c.l.b16 %v4085
      %v4132 = vunpack.c.h.b16 %v4085
      %v4133 = vunpack.c.l.b16 %v4086
      %v4134 = vunpack.c.h.b16 %v4086
      %v4135 = vpack.c.b16 %v4103, %v4103
      %v4136 = vpack.c.b16 %v4104, %v4104
      %v4137 = vpack.c.b16 %v4105, %v4105
      %v4138 = vpack.c.b16 %v4106, %v4106
      %v4139 = vpack.c.b16 %v4107, %v4107
      %v4140 = vpack.c.b16 %v4108, %v4108
      %v4141 = vpack.c.b16 %v4109, %v4109
      %v4142 = vpack.c.b16 %v4110, %v4110
      %v4143 = vpack.c.b16 %v4111, %v4111
      %v4144 = vpack.c.b16 %v4112, %v4112
      %v4145 = vpack.c.b16 %v4113, %v4113
      %v4146 = vpack.c.b16 %v4114, %v4114
      %v4147 = vpack.c.b16 %v4115, %v4115
      %v4148 = vpack.c.b16 %v4116, %v4116
      %v4149 = vpack.c.b16 %v4117, %v4117
      %v4150 = vpack.c.b16 %v4118, %v4118
      %v4151 = vpack.c.b16 %v4119, %v4119
      %v4152 = vpack.c.b16 %v4120, %v4120
      %v4153 = vpack.c.b16 %v4121, %v4121
      %v4154 = vpack.c.b16 %v4122, %v4122
      %v4155 = vpack.c.b16 %v4123, %v4123
      %v4156 = vpack.c.b16 %v4124, %v4124
      %v4157 = vpack.c.b16 %v4125, %v4125
      %v4158 = vpack.c.b16 %v4126, %v4126
      %v4159 = vpack.c.b16 %v4127, %v4127
      %v4160 = vpack.c.b16 %v4128, %v4128
      %v4161 = vpack.c.b16 %v4129, %v4129
      %v4162 = vpack.c.b16 %v4130, %v4130
      %v4163 = vpack.c.b16 %v4131, %v4131
      %v4164 = vpack.c.b16 %v4132, %v4132
      %v4165 = vpack.c.b16 %v4133, %v4133
      %v4166 = vpack.c.b16 %v4134, %v4134
      %4199 = vst [vmem:[%s251] sm:$0xf] %v4135
      %4200 = vst [vmem:[%s251 + $0x4] sm:$0xf] %v4136
      %4201 = vst [vmem:[%s251 + $0x8] sm:$0xf] %v4137
      %4202 = vst [vmem:[%s251 + $0xc] sm:$0xf] %v4138
      %4203 = vst [vmem:[%s251 + $0x10] sm:$0xf] %v4139
      %4204 = vst [vmem:[%s251 + $0x14] sm:$0xf] %v4140
      %4205 = vst [vmem:[%s251 + $0x18] sm:$0xf] %v4141
      %4206 = vst [vmem:[%s251 + $0x1c] sm:$0xf] %v4142
      %4207 = vst [vmem:[%s251 + $0x20] sm:$0xf] %v4143
      %4208 = vst [vmem:[%s251 + $0x24] sm:$0xf] %v4144
      %4209 = vst [vmem:[%s251 + $0x28] sm:$0xf] %v4145
      %4210 = vst [vmem:[%s251 + $0x2c] sm:$0xf] %v4146
      %4211 = vst [vmem:[%s251 + $0x30] sm:$0xf] %v4147
      %4212 = vst [vmem:[%s251 + $0x34] sm:$0xf] %v4148
      %4213 = vst [vmem:[%s251 + $0x38] sm:$0xf] %v4149
      %4214 = vst [vmem:[%s251 + $0x3c] sm:$0xf] %v4150
      %4215 = vst [vmem:[%s251 + $0x40] sm:$0xf] %v4151
      %4216 = vst [vmem:[%s251 + $0x44] sm:$0xf] %v4152
      %4217 = vst [vmem:[%s251 + $0x48] sm:$0xf] %v4153
      %4218 = vst [vmem:[%s251 + $0x4c] sm:$0xf] %v4154
      %4219 = vst [vmem:[%s251 + $0x50] sm:$0xf] %v4155
      %4220 = vst [vmem:[%s251 + $0x54] sm:$0xf] %v4156
      %4221 = vst [vmem:[%s251 + $0x58] sm:$0xf] %v4157
      %4222 = vst [vmem:[%s251 + $0x5c] sm:$0xf] %v4158
      %4223 = vst [vmem:[%s251 + $0x60] sm:$0xf] %v4159
      %4224 = vst [vmem:[%s251 + $0x64] sm:$0xf] %v4160
      %4225 = vst [vmem:[%s251 + $0x68] sm:$0xf] %v4161
      %4226 = vst [vmem:[%s251 + $0x6c] sm:$0xf] %v4162
      %4227 = vst [vmem:[%s251 + $0x70] sm:$0xf] %v4163
      %4228 = vst [vmem:[%s251 + $0x74] sm:$0xf] %v4164
      %4229 = vst [vmem:[%s251 + $0x78] sm:$0xf] %v4165
      %4230 = vst [vmem:[%s251 + $0x7c] sm:$0xf] %v4166
      %p4231 = scmp.lt.s32.totalorder %s17, 1
      %s4232 = scalar_select %p4231, %s17, 1
      %s4233 = smul.addr %s4232, 32
      %s4234 = smul.addr %s4233, 4
      %s4235 = scalar_lea.vmem %s6, %s4234
      // Predicated region
      $region45: #{bottleneck_forward.1} parent=43 // pred_check
        %p4236 = pneg %p166
      $region46: #{bottleneck_forward.1} parent=43 // pred_check_branch
        %4238 = sbr.rel (%p4236) target = $region48
      $region47: #{bottleneck_forward.1} parent=43 // pred_region
        _
      $region48: #{bottleneck_forward.1} parent=43 // pred_fallthru
        _
    $region44: #{bottleneck_forward.1} parent=5 // pred_fallthru
      _
    %p4239 = scmp.le.s32.totalorder 2, %s12
    // Predicated region
    $region49: #{bottleneck_forward.1} parent=5 // pred_check
      %p4240 = pneg %p4239
    $region50: #{bottleneck_forward.1} parent=5 // pred_check_branch
      %4242 = sbr.rel (%p4240) target = $region52
    $region51: #{bottleneck_forward.1} parent=5 // pred_region
      %s4243 = ssub.s32 %s12, 2
      // Predicated region
      $region53: #{bottleneck_forward.1} parent=51 // pred_check
        %p4244 = pneg %p172
      $region54: #{bottleneck_forward.1} parent=51 // pred_check_branch
        %4246 = sbr.rel (%p4244) target = $region56
      $region55: #{bottleneck_forward.1} parent=51 // pred_region
        %p4247 = scmp.lt.s32.totalorder %s18, 1
        %s4248 = scalar_select %p4247, %s18, 1
        %s4249 = smul.addr %s4248, 32
        %s4250 = smul.addr %s4249, 4
        %s4251 = scalar_lea.vmem %s6, %s4250
      $region56: #{bottleneck_forward.1} parent=51 // pred_fallthru
        _
    $region52: #{bottleneck_forward.1} parent=5 // pred_fallthru
      _
  $region6: #{bottleneck_forward.1} parent=0 // loop_footer
    %s16 = sadd.s32 1, %s12
  $region7: #{bottleneck_forward.1} parent=0 // loop_footer_branch
    %11 = sbr.rel target = $region3
  $region8: #{bottleneck_forward.1} parent=0 // loop_exit
    _

</llo_original>
